<compile_context>
chip_gen: v6e
topology: v6e:2x2x1
jax: 0.10.0
libtpu: 0.0.40
codegen_flags: <defaults>
</compile_context>

<pallas_src>
import functools

import jax
import jax.numpy as jnp
import numpy as np
from jax.experimental import pallas as pl
from jax.experimental.pallas import tpu as pltpu


def painn_mixing_kernel(q_ref, mu_ref,
                        wmix_v_ref, wmix_w_ref,
                        w1q_ref, w1v_ref, b1_ref,
                        w2_dq_ref, w2_dmu_ref, w2_dqmu_ref,
                        b2_dq_ref, b2_dmu_ref, b2_dqmu_ref,
                        q_out_ref, mu_out_ref,
                        *, epsilon, matmul_dtype):
    q = q_ref[...]                                   # (TN, F) f32

    wmix_v = wmix_v_ref[...].astype(matmul_dtype)    # (F, F)
    wmix_w = wmix_w_ref[...].astype(matmul_dtype)    # (F, F)

    # mu_channel_mix: Dense(F -> 2F, no bias), unrolled over the 3 vector
    # components; V / W halves come from host-side-split weights so every
    # temporary stays (TN, F).
    mu_V, mu_W = [], []
    for c in range(3):
        mu_c = mu_ref[c].astype(matmul_dtype)        # (TN, F)
        mu_V.append(jnp.dot(mu_c, wmix_v, preferred_element_type=jnp.float32))
        mu_W.append(jnp.dot(mu_c, wmix_w, preferred_element_type=jnp.float32))

    # ||mu_V|| over the vector-component axis (explicit unrolled VPU adds).
    mu_Vn = jnp.sqrt(mu_V[0] * mu_V[0] + mu_V[1] * mu_V[1]
                     + mu_V[2] * mu_V[2] + epsilon)  # (TN, F)

    # intraatomic_context_net: Dense(2F -> F, silu) -> Dense(F -> 3F).
    # concat([q, ||mu_V||]) @ W1 == q @ W1[:F] + ||mu_V|| @ W1[F:].
    h = (jnp.dot(q.astype(matmul_dtype), w1q_ref[...].astype(matmul_dtype),
                 preferred_element_type=jnp.float32)
         + jnp.dot(mu_Vn.astype(matmul_dtype), w1v_ref[...].astype(matmul_dtype),
                   preferred_element_type=jnp.float32)
         + b1_ref[...])
    h = jax.nn.silu(h).astype(matmul_dtype)          # (TN, F)

    # Dense(F -> 3F) with the three output heads split host-side.
    dq_intra = (jnp.dot(h, w2_dq_ref[...].astype(matmul_dtype),
                        preferred_element_type=jnp.float32) + b2_dq_ref[...])
    dmu_intra = (jnp.dot(h, w2_dmu_ref[...].astype(matmul_dtype),
                         preferred_element_type=jnp.float32) + b2_dmu_ref[...])
    dqmu_intra = (jnp.dot(h, w2_dqmu_ref[...].astype(matmul_dtype),
                          preferred_element_type=jnp.float32) + b2_dqmu_ref[...])

    # sum(mu_V * mu_W) over the vector components (PyTorch dim=1).
    vw = mu_V[0] * mu_W[0] + mu_V[1] * mu_W[1] + mu_V[2] * mu_W[2]

    q_out_ref[...] = q + dq_intra + dqmu_intra * vw
    for c in range(3):
        mu_out_ref[c] = mu_ref[c] + dmu_intra * mu_W[c]


def _choose_tile_n(n_atoms, max_tile=256):
    """Largest atom tile (multiple of 8, divides N, <= max_tile); prefer a
    tile that leaves >= 2 grid steps (v7x has 2 TensorCores) while keeping
    the MXU M-dimension full (tile >= 128)."""
    divisors = [t for t in range(min(n_atoms, max_tile), 7, -8)
                if n_atoms % t == 0]
    for t in divisors:
        if t >= 128 and n_atoms // t >= 2:
            return t
    return divisors[0]


def painn_mixing(q, mu, params, *, n_atom_basis, epsilon=1e-8,
                 tile_n=None, matmul_dtype=jnp.float32):
    """q: [N, F], mu: [3, N, F]. Returns (q_new [N, F], mu_new [3, N, F])."""
    N, F = q.shape
    assert F == n_atom_basis
    assert mu.shape == (3, N, F)
    # Lane / sublane alignment assumptions (avoid relayouts / (8,128) failures).
    assert F % 128 == 0, "n_atom_basis must be a multiple of 128"
    assert N % 8 == 0, "number of atoms must be a multiple of 8"

    if tile_n is None:
        tile_n = _choose_tile_n(N)
    assert N % tile_n == 0 and tile_n % 8 == 0

    wmix, w1, b1, w2, b2 = (params["w_mix"], params["w1"], params["b1"],
                            params["w2"], params["b2"])
    # Host-side weight splits (layout plumbing, not compute hoisting).
    wmix_v, wmix_w = wmix[:, :F], wmix[:, F:]          # (F, F) each
    w1q, w1v = w1[:F], w1[F:]                          # (F, F) each
    w2_dq, w2_dmu, w2_dqmu = w2[:, :F], w2[:, F:2 * F], w2[:, 2 * F:]
    b1 = b1.reshape(1, F)
    b2_dq = b2[:F].reshape(1, F)
    b2_dmu = b2[F:2 * F].reshape(1, F)
    b2_dqmu = b2[2 * F:].reshape(1, F)

    kernel = functools.partial(painn_mixing_kernel,
                               epsilon=epsilon, matmul_dtype=matmul_dtype)

    grid = (N // tile_n,)
    weight_elems = 2 * F * F + 2 * F * F + F + 3 * F * F + 3 * F
    cost = pl.CostEstimate(
        flops=22 * N * F * F,                  # 12NF^2 + 4NF^2 + 6NF^2
        transcendentals=2 * N * F,             # silu sigmoid + sqrt
        bytes_accessed=4 * (8 * N * F + weight_elems))

    weight_spec = lambda shape: pl.BlockSpec(shape, lambda i: (0, 0))

    q_out, mu_out = pl.pallas_call(
        kernel,
        out_shape=(jax.ShapeDtypeStruct((N, F), q.dtype),
                   jax.ShapeDtypeStruct((3, N, F), mu.dtype)),
        grid_spec=pltpu.PrefetchScalarGridSpec(
            num_scalar_prefetch=0,
            grid=grid,
            in_specs=[
                pl.BlockSpec((tile_n, F), lambda i: (i, 0)),          # q
                pl.BlockSpec((3, tile_n, F), lambda i: (0, i, 0)),    # mu
                weight_spec((F, F)),                                  # W_mix_V
                weight_spec((F, F)),                                  # W_mix_W
                weight_spec((F, F)),                                  # W1_q
                weight_spec((F, F)),                                  # W1_v
                weight_spec((1, F)),                                  # b1
                weight_spec((F, F)),                                  # W2_dq
                weight_spec((F, F)),                                  # W2_dmu
                weight_spec((F, F)),                                  # W2_dqmu
                weight_spec((1, F)),                                  # b2_dq
                weight_spec((1, F)),                                  # b2_dmu
                weight_spec((1, F)),                                  # b2_dqmu
            ],
            out_specs=(
                pl.BlockSpec((tile_n, F), lambda i: (i, 0)),          # q_out
                pl.BlockSpec((3, tile_n, F), lambda i: (0, i, 0)),    # mu_out
            ),
        ),
        compiler_params=pltpu.CompilerParams(
            dimension_semantics=("parallel",),
            vmem_limit_bytes=32 * 1024 * 1024),
        cost_estimate=cost,
    )(q, mu, wmix_v, wmix_w, w1q, w1v, b1,
      w2_dq, w2_dmu, w2_dqmu, b2_dq, b2_dmu, b2_dqmu)
    return q_out, mu_out


def init_params(key, n_atom_basis):
    """Deterministic xavier-uniform-like init (Dense weights), zero biases."""
    F = n_atom_basis
    k1, k2, k3 = jax.random.split(key, 3)

    def xavier(k, fan_in, fan_out):
        limit = np.sqrt(6.0 / (fan_in + fan_out))
        return jax.random.uniform(k, (fan_in, fan_out), jnp.float32, -limit, limit)

    return {
        "w_mix": xavier(k1, F, 2 * F),     # mu_channel_mix (no bias)
        "w1": xavier(k2, 2 * F, F),        # Dense(2F -> F, silu)
        "b1": jnp.zeros((F,), jnp.float32),
        "w2": xavier(k3, F, 3 * F),        # Dense(F -> 3F)
        "b2": jnp.zeros((3 * F,), jnp.float32),
    }


def painn_mixing_ref(q, mu, params, *, n_atom_basis, epsilon=1e-8):
    """Pure-JAX reference mirroring the PyTorch semantics (same layouts)."""
    F = n_atom_basis
    mu_mix = jnp.einsum("cnf,fg->cng", mu, params["w_mix"])
    mu_V, mu_W = mu_mix[..., :F], mu_mix[..., F:]
    mu_Vn = jnp.sqrt(jnp.sum(mu_V ** 2, axis=0) + epsilon)          # (N, F)
    ctx = jnp.concatenate([q, mu_Vn], axis=-1)
    h = jax.nn.silu(ctx @ params["w1"] + params["b1"])
    x = h @ params["w2"] + params["b2"]
    dq, dmu, dqmu = x[:, :F], x[:, F:2 * F], x[:, 2 * F:]
    dmu = dmu[None] * mu_W
    dqmu = dqmu * jnp.sum(mu_V * mu_W, axis=0)
    return q + dq + dqmu, mu + dmu


if __name__ == "__main__":
    n_atom_basis = 128   # feature dim (lane-aligned)
    n_atoms = 256        # -> tile_n=128, 2 grid steps (both TCs busy on v7x)
    epsilon = 1e-8

    key = jax.random.PRNGKey(0)
    kq, kmu, kp = jax.random.split(key, 3)

    q = jax.random.normal(kq, (n_atoms, n_atom_basis), jnp.float32)
    mu = jax.random.normal(kmu, (3, n_atoms, n_atom_basis), jnp.float32)
    params = init_params(kp, n_atom_basis)

    q_expect, mu_expect = painn_mixing_ref(q, mu, params,
                                           n_atom_basis=n_atom_basis,
                                           epsilon=epsilon)

    # f32 MXU path (exact check).
    q_out, mu_out = painn_mixing(q, mu, params,
                                 n_atom_basis=n_atom_basis, epsilon=epsilon)
    jax.block_until_ready((q_out, mu_out))
    np.testing.assert_allclose(np.asarray(q_out), np.asarray(q_expect),
                               rtol=1e-5, atol=1e-5)
    np.testing.assert_allclose(np.asarray(mu_out), np.asarray(mu_expect),
                               rtol=1e-5, atol=1e-5)

    # bf16 MXU operands (f32 accumulation) — native throughput on v6e/v7x.
    q_bf, mu_bf = painn_mixing(q, mu, params,
                               n_atom_basis=n_atom_basis, epsilon=epsilon,
                               matmul_dtype=jnp.bfloat16)
    jax.block_until_ready((q_bf, mu_bf))
    np.testing.assert_allclose(np.asarray(q_bf), np.asarray(q_expect),
                               rtol=1e-1, atol=1e-1)
    np.testing.assert_allclose(np.asarray(mu_bf), np.asarray(mu_expect),
                               rtol=1e-1, atol=1e-1)

    print("KERNEL_OK")
</pallas_src>

<mosaic_0001>
module attributes {stable_mosaic.version = 11 : i64} {
  func.func @painn_mixing_kernel(%arg0: i32, %arg1: memref<128x128xf32, #tpu.memory_space<vmem>>, %arg2: memref<3x128x128xf32, #tpu.memory_space<vmem>>, %arg3: memref<128x128xf32, #tpu.memory_space<vmem>>, %arg4: memref<128x128xf32, #tpu.memory_space<vmem>>, %arg5: memref<128x128xf32, #tpu.memory_space<vmem>>, %arg6: memref<128x128xf32, #tpu.memory_space<vmem>>, %arg7: memref<1x128xf32, #tpu.memory_space<vmem>>, %arg8: memref<128x128xf32, #tpu.memory_space<vmem>>, %arg9: memref<128x128xf32, #tpu.memory_space<vmem>>, %arg10: memref<128x128xf32, #tpu.memory_space<vmem>>, %arg11: memref<1x128xf32, #tpu.memory_space<vmem>>, %arg12: memref<1x128xf32, #tpu.memory_space<vmem>>, %arg13: memref<1x128xf32, #tpu.memory_space<vmem>>, %arg14: memref<128x128xf32, #tpu.memory_space<vmem>>, %arg15: memref<3x128x128xf32, #tpu.memory_space<vmem>>) attributes {dimension_semantics = [#tpu.dimension_semantics<parallel>], iteration_bounds = array<i64: 2>, scalar_prefetch = 0 : i64, scratch_operands = 0 : i64, tpu.core_type = #tpu.core_type<tc>, window_params = [{transform_indices = @transform_0, window_bounds = array<i64: 128, 128>}, {transform_indices = @transform_1, window_bounds = array<i64: 3, 128, 128>}, {pipeline_mode = #tpu.pipeline_mode<synchronous>, transform_indices = @transform_2, window_bounds = array<i64: 128, 128>}, {pipeline_mode = #tpu.pipeline_mode<synchronous>, transform_indices = @transform_3, window_bounds = array<i64: 128, 128>}, {pipeline_mode = #tpu.pipeline_mode<synchronous>, transform_indices = @transform_4, window_bounds = array<i64: 128, 128>}, {pipeline_mode = #tpu.pipeline_mode<synchronous>, transform_indices = @transform_5, window_bounds = array<i64: 128, 128>}, {pipeline_mode = #tpu.pipeline_mode<synchronous>, transform_indices = @transform_6, window_bounds = array<i64: 1, 128>}, {pipeline_mode = #tpu.pipeline_mode<synchronous>, transform_indices = @transform_7, window_bounds = array<i64: 128, 128>}, {pipeline_mode = #tpu.pipeline_mode<synchronous>, transform_indices = @transform_8, window_bounds = array<i64: 128, 128>}, {pipeline_mode = #tpu.pipeline_mode<synchronous>, transform_indices = @transform_9, window_bounds = array<i64: 128, 128>}, {pipeline_mode = #tpu.pipeline_mode<synchronous>, transform_indices = @transform_10, window_bounds = array<i64: 1, 128>}, {pipeline_mode = #tpu.pipeline_mode<synchronous>, transform_indices = @transform_11, window_bounds = array<i64: 1, 128>}, {pipeline_mode = #tpu.pipeline_mode<synchronous>, transform_indices = @transform_12, window_bounds = array<i64: 1, 128>}, {transform_indices = @transform_13, window_bounds = array<i64: 128, 128>}, {transform_indices = @transform_14, window_bounds = array<i64: 3, 128, 128>}]} {
    %c0 = arith.constant 0 : index
    %c0_0 = arith.constant 0 : index
    %0 = vector.load %arg1[%c0, %c0_0] : memref<128x128xf32, #tpu.memory_space<vmem>>, vector<128x128xf32>
    %c0_1 = arith.constant 0 : index
    %c0_2 = arith.constant 0 : index
    %1 = vector.load %arg3[%c0_1, %c0_2] : memref<128x128xf32, #tpu.memory_space<vmem>>, vector<128x128xf32>
    %c0_3 = arith.constant 0 : index
    %c0_4 = arith.constant 0 : index
    %2 = vector.load %arg4[%c0_3, %c0_4] : memref<128x128xf32, #tpu.memory_space<vmem>>, vector<128x128xf32>
    %c0_5 = arith.constant 0 : index
    %c0_6 = arith.constant 0 : index
    %c0_7 = arith.constant 0 : index
    %3 = vector.load %arg2[%c0_5, %c0_6, %c0_7] : memref<3x128x128xf32, #tpu.memory_space<vmem>>, vector<1x128x128xf32>
    %4 = vector.shape_cast %3 : vector<1x128x128xf32> to vector<128x128xf32>
    %cst = arith.constant dense<0.000000e+00> : vector<128x128xf32>
    %5 = tpu.matmul %4, %1, %cst {dimension_numbers = #tpu.dot_dimension_numbers<[1], [0], [0], [1], [0, 0, 1, 1], [], []>} : vector<128x128xf32>, vector<128x128xf32>, vector<128x128xf32> -> vector<128x128xf32>
    %cst_8 = arith.constant dense<0.000000e+00> : vector<128x128xf32>
    %6 = tpu.matmul %4, %2, %cst_8 {dimension_numbers = #tpu.dot_dimension_numbers<[1], [0], [0], [1], [0, 0, 1, 1], [], []>} : vector<128x128xf32>, vector<128x128xf32>, vector<128x128xf32> -> vector<128x128xf32>
    %c1 = arith.constant 1 : index
    %c0_9 = arith.constant 0 : index
    %c0_10 = arith.constant 0 : index
    %7 = vector.load %arg2[%c1, %c0_9, %c0_10] : memref<3x128x128xf32, #tpu.memory_space<vmem>>, vector<1x128x128xf32>
    %8 = vector.shape_cast %7 : vector<1x128x128xf32> to vector<128x128xf32>
    %cst_11 = arith.constant dense<0.000000e+00> : vector<128x128xf32>
    %9 = tpu.matmul %8, %1, %cst_11 {dimension_numbers = #tpu.dot_dimension_numbers<[1], [0], [0], [1], [0, 0, 1, 1], [], []>} : vector<128x128xf32>, vector<128x128xf32>, vector<128x128xf32> -> vector<128x128xf32>
    %cst_12 = arith.constant dense<0.000000e+00> : vector<128x128xf32>
    %10 = tpu.matmul %8, %2, %cst_12 {dimension_numbers = #tpu.dot_dimension_numbers<[1], [0], [0], [1], [0, 0, 1, 1], [], []>} : vector<128x128xf32>, vector<128x128xf32>, vector<128x128xf32> -> vector<128x128xf32>
    %c2 = arith.constant 2 : index
    %c0_13 = arith.constant 0 : index
    %c0_14 = arith.constant 0 : index
    %11 = vector.load %arg2[%c2, %c0_13, %c0_14] : memref<3x128x128xf32, #tpu.memory_space<vmem>>, vector<1x128x128xf32>
    %12 = vector.shape_cast %11 : vector<1x128x128xf32> to vector<128x128xf32>
    %cst_15 = arith.constant dense<0.000000e+00> : vector<128x128xf32>
    %13 = tpu.matmul %12, %1, %cst_15 {dimension_numbers = #tpu.dot_dimension_numbers<[1], [0], [0], [1], [0, 0, 1, 1], [], []>} : vector<128x128xf32>, vector<128x128xf32>, vector<128x128xf32> -> vector<128x128xf32>
    %cst_16 = arith.constant dense<0.000000e+00> : vector<128x128xf32>
    %14 = tpu.matmul %12, %2, %cst_16 {dimension_numbers = #tpu.dot_dimension_numbers<[1], [0], [0], [1], [0, 0, 1, 1], [], []>} : vector<128x128xf32>, vector<128x128xf32>, vector<128x128xf32> -> vector<128x128xf32>
    %15 = arith.mulf %5, %5 : vector<128x128xf32>
    %16 = arith.mulf %9, %9 : vector<128x128xf32>
    %17 = arith.addf %15, %16 : vector<128x128xf32>
    %18 = arith.mulf %13, %13 : vector<128x128xf32>
    %19 = arith.addf %17, %18 : vector<128x128xf32>
    %cst_17 = arith.constant 9.99999993E-9 : f32
    %20 = vector.broadcast %cst_17 : f32 to vector<128x128xf32>
    %21 = arith.addf %19, %20 : vector<128x128xf32>
    %22 = math.sqrt %21 : vector<128x128xf32>
    %c0_18 = arith.constant 0 : index
    %c0_19 = arith.constant 0 : index
    %23 = vector.load %arg5[%c0_18, %c0_19] : memref<128x128xf32, #tpu.memory_space<vmem>>, vector<128x128xf32>
    %cst_20 = arith.constant dense<0.000000e+00> : vector<128x128xf32>
    %24 = tpu.matmul %0, %23, %cst_20 {dimension_numbers = #tpu.dot_dimension_numbers<[1], [0], [0], [1], [0, 0, 1, 1], [], []>} : vector<128x128xf32>, vector<128x128xf32>, vector<128x128xf32> -> vector<128x128xf32>
    %c0_21 = arith.constant 0 : index
    %c0_22 = arith.constant 0 : index
    %25 = vector.load %arg6[%c0_21, %c0_22] : memref<128x128xf32, #tpu.memory_space<vmem>>, vector<128x128xf32>
    %cst_23 = arith.constant dense<0.000000e+00> : vector<128x128xf32>
    %26 = tpu.matmul %22, %25, %cst_23 {dimension_numbers = #tpu.dot_dimension_numbers<[1], [0], [0], [1], [0, 0, 1, 1], [], []>} : vector<128x128xf32>, vector<128x128xf32>, vector<128x128xf32> -> vector<128x128xf32>
    %27 = arith.addf %24, %26 : vector<128x128xf32>
    %c0_24 = arith.constant 0 : index
    %c0_25 = arith.constant 0 : index
    %28 = vector.load %arg7[%c0_24, %c0_25] : memref<1x128xf32, #tpu.memory_space<vmem>>, vector<1x128xf32>
    %29 = vector.broadcast %28 : vector<1x128xf32> to vector<128x128xf32>
    %30 = arith.addf %27, %29 : vector<128x128xf32>
    %31 = arith.negf %30 : vector<128x128xf32>
    %32 = math.exp %31 : vector<128x128xf32>
    %cst_26 = arith.constant 1.000000e+00 : f32
    %33 = vector.broadcast %cst_26 : f32 to vector<128x128xf32>
    %34 = arith.addf %33, %32 : vector<128x128xf32>
    %35 = arith.divf %33, %34 : vector<128x128xf32>
    %36 = arith.mulf %30, %35 : vector<128x128xf32>
    %c0_27 = arith.constant 0 : index
    %c0_28 = arith.constant 0 : index
    %37 = vector.load %arg8[%c0_27, %c0_28] : memref<128x128xf32, #tpu.memory_space<vmem>>, vector<128x128xf32>
    %cst_29 = arith.constant dense<0.000000e+00> : vector<128x128xf32>
    %38 = tpu.matmul %36, %37, %cst_29 {dimension_numbers = #tpu.dot_dimension_numbers<[1], [0], [0], [1], [0, 0, 1, 1], [], []>} : vector<128x128xf32>, vector<128x128xf32>, vector<128x128xf32> -> vector<128x128xf32>
    %c0_30 = arith.constant 0 : index
    %c0_31 = arith.constant 0 : index
    %39 = vector.load %arg11[%c0_30, %c0_31] : memref<1x128xf32, #tpu.memory_space<vmem>>, vector<1x128xf32>
    %40 = vector.broadcast %39 : vector<1x128xf32> to vector<128x128xf32>
    %41 = arith.addf %38, %40 : vector<128x128xf32>
    %c0_32 = arith.constant 0 : index
    %c0_33 = arith.constant 0 : index
    %42 = vector.load %arg9[%c0_32, %c0_33] : memref<128x128xf32, #tpu.memory_space<vmem>>, vector<128x128xf32>
    %cst_34 = arith.constant dense<0.000000e+00> : vector<128x128xf32>
    %43 = tpu.matmul %36, %42, %cst_34 {dimension_numbers = #tpu.dot_dimension_numbers<[1], [0], [0], [1], [0, 0, 1, 1], [], []>} : vector<128x128xf32>, vector<128x128xf32>, vector<128x128xf32> -> vector<128x128xf32>
    %c0_35 = arith.constant 0 : index
    %c0_36 = arith.constant 0 : index
    %44 = vector.load %arg12[%c0_35, %c0_36] : memref<1x128xf32, #tpu.memory_space<vmem>>, vector<1x128xf32>
    %45 = vector.broadcast %44 : vector<1x128xf32> to vector<128x128xf32>
    %46 = arith.addf %43, %45 : vector<128x128xf32>
    %c0_37 = arith.constant 0 : index
    %c0_38 = arith.constant 0 : index
    %47 = vector.load %arg10[%c0_37, %c0_38] : memref<128x128xf32, #tpu.memory_space<vmem>>, vector<128x128xf32>
    %cst_39 = arith.constant dense<0.000000e+00> : vector<128x128xf32>
    %48 = tpu.matmul %36, %47, %cst_39 {dimension_numbers = #tpu.dot_dimension_numbers<[1], [0], [0], [1], [0, 0, 1, 1], [], []>} : vector<128x128xf32>, vector<128x128xf32>, vector<128x128xf32> -> vector<128x128xf32>
    %c0_40 = arith.constant 0 : index
    %c0_41 = arith.constant 0 : index
    %49 = vector.load %arg13[%c0_40, %c0_41] : memref<1x128xf32, #tpu.memory_space<vmem>>, vector<1x128xf32>
    %50 = vector.broadcast %49 : vector<1x128xf32> to vector<128x128xf32>
    %51 = arith.addf %48, %50 : vector<128x128xf32>
    %52 = arith.mulf %5, %6 : vector<128x128xf32>
    %53 = arith.mulf %9, %10 : vector<128x128xf32>
    %54 = arith.addf %52, %53 : vector<128x128xf32>
    %55 = arith.mulf %13, %14 : vector<128x128xf32>
    %56 = arith.addf %54, %55 : vector<128x128xf32>
    %57 = arith.addf %0, %41 : vector<128x128xf32>
    %58 = arith.mulf %51, %56 : vector<128x128xf32>
    %59 = arith.addf %57, %58 : vector<128x128xf32>
    %c0_42 = arith.constant 0 : index
    %c0_43 = arith.constant 0 : index
    %60 = vector.load %arg14[%c0_42, %c0_43] : memref<128x128xf32, #tpu.memory_space<vmem>>, vector<128x128xf32>
    tpu.vector_store %arg14[%c0_42, %c0_43], %59 {strides = array<i32>} : memref<128x128xf32, #tpu.memory_space<vmem>>, vector<128x128xf32>,
    %c0_44 = arith.constant 0 : index
    %c0_45 = arith.constant 0 : index
    %c0_46 = arith.constant 0 : index
    %61 = vector.load %arg2[%c0_44, %c0_45, %c0_46] : memref<3x128x128xf32, #tpu.memory_space<vmem>>, vector<1x128x128xf32>
    %62 = vector.shape_cast %61 : vector<1x128x128xf32> to vector<128x128xf32>
    %63 = arith.mulf %46, %6 : vector<128x128xf32>
    %64 = arith.addf %62, %63 : vector<128x128xf32>
    %c0_47 = arith.constant 0 : index
    %c0_48 = arith.constant 0 : index
    %c0_49 = arith.constant 0 : index
    %65 = vector.load %arg15[%c0_47, %c0_48, %c0_49] : memref<3x128x128xf32, #tpu.memory_space<vmem>>, vector<1x128x128xf32>
    %66 = vector.shape_cast %65 : vector<1x128x128xf32> to vector<128x128xf32>
    %67 = vector.shape_cast %64 : vector<128x128xf32> to vector<1x128x128xf32>
    tpu.vector_store %arg15[%c0_47, %c0_48, %c0_49], %67 {strides = array<i32>} : memref<3x128x128xf32, #tpu.memory_space<vmem>>, vector<1x128x128xf32>,
    %c1_50 = arith.constant 1 : index
    %c0_51 = arith.constant 0 : index
    %c0_52 = arith.constant 0 : index
    %68 = vector.load %arg2[%c1_50, %c0_51, %c0_52] : memref<3x128x128xf32, #tpu.memory_space<vmem>>, vector<1x128x128xf32>
    %69 = vector.shape_cast %68 : vector<1x128x128xf32> to vector<128x128xf32>
    %70 = arith.mulf %46, %10 : vector<128x128xf32>
    %71 = arith.addf %69, %70 : vector<128x128xf32>
    %c1_53 = arith.constant 1 : index
    %c0_54 = arith.constant 0 : index
    %c0_55 = arith.constant 0 : index
    %72 = vector.load %arg15[%c1_53, %c0_54, %c0_55] : memref<3x128x128xf32, #tpu.memory_space<vmem>>, vector<1x128x128xf32>
    %73 = vector.shape_cast %72 : vector<1x128x128xf32> to vector<128x128xf32>
    %74 = vector.shape_cast %71 : vector<128x128xf32> to vector<1x128x128xf32>
    tpu.vector_store %arg15[%c1_53, %c0_54, %c0_55], %74 {strides = array<i32>} : memref<3x128x128xf32, #tpu.memory_space<vmem>>, vector<1x128x128xf32>,
    %c2_56 = arith.constant 2 : index
    %c0_57 = arith.constant 0 : index
    %c0_58 = arith.constant 0 : index
    %75 = vector.load %arg2[%c2_56, %c0_57, %c0_58] : memref<3x128x128xf32, #tpu.memory_space<vmem>>, vector<1x128x128xf32>
    %76 = vector.shape_cast %75 : vector<1x128x128xf32> to vector<128x128xf32>
    %77 = arith.mulf %46, %14 : vector<128x128xf32>
    %78 = arith.addf %76, %77 : vector<128x128xf32>
    %c2_59 = arith.constant 2 : index
    %c0_60 = arith.constant 0 : index
    %c0_61 = arith.constant 0 : index
    %79 = vector.load %arg15[%c2_59, %c0_60, %c0_61] : memref<3x128x128xf32, #tpu.memory_space<vmem>>, vector<1x128x128xf32>
    %80 = vector.shape_cast %79 : vector<1x128x128xf32> to vector<128x128xf32>
    %81 = vector.shape_cast %78 : vector<128x128xf32> to vector<1x128x128xf32>
    tpu.vector_store %arg15[%c2_59, %c0_60, %c0_61], %81 {strides = array<i32>} : memref<3x128x128xf32, #tpu.memory_space<vmem>>, vector<1x128x128xf32>,
    return
  }
  func.func @transform_0(%arg0: i32) -> (i32, i32) {
    %c0_i32 = arith.constant 0 : i32
    %c0_i32_0 = arith.constant 0 : i32
    return %arg0, %c0_i32 : i32, i32
  }
  func.func @transform_1(%arg0: i32) -> (i32, i32, i32) {
    %c0_i32 = arith.constant 0 : i32
    %c0_i32_0 = arith.constant 0 : i32
    %c0_i32_1 = arith.constant 0 : i32
    return %c0_i32, %arg0, %c0_i32_0 : i32, i32, i32
  }
  func.func @transform_2(%arg0: i32) -> (i32, i32) {
    %c0_i32 = arith.constant 0 : i32
    %c0_i32_0 = arith.constant 0 : i32
    %c0_i32_1 = arith.constant 0 : i32
    return %c0_i32, %c0_i32_0 : i32, i32
  }
  func.func @transform_3(%arg0: i32) -> (i32, i32) {
    %c0_i32 = arith.constant 0 : i32
    %c0_i32_0 = arith.constant 0 : i32
    %c0_i32_1 = arith.constant 0 : i32
    return %c0_i32, %c0_i32_0 : i32, i32
  }
  func.func @transform_4(%arg0: i32) -> (i32, i32) {
    %c0_i32 = arith.constant 0 : i32
    %c0_i32_0 = arith.constant 0 : i32
    %c0_i32_1 = arith.constant 0 : i32
    return %c0_i32, %c0_i32_0 : i32, i32
  }
  func.func @transform_5(%arg0: i32) -> (i32, i32) {
    %c0_i32 = arith.constant 0 : i32
    %c0_i32_0 = arith.constant 0 : i32
    %c0_i32_1 = arith.constant 0 : i32
    return %c0_i32, %c0_i32_0 : i32, i32
  }
  func.func @transform_6(%arg0: i32) -> (i32, i32) {
    %c0_i32 = arith.constant 0 : i32
    %c0_i32_0 = arith.constant 0 : i32
    %c0_i32_1 = arith.constant 0 : i32
    return %c0_i32, %c0_i32_0 : i32, i32
  }
  func.func @transform_7(%arg0: i32) -> (i32, i32) {
    %c0_i32 = arith.constant 0 : i32
    %c0_i32_0 = arith.constant 0 : i32
    %c0_i32_1 = arith.constant 0 : i32
    return %c0_i32, %c0_i32_0 : i32, i32
  }
  func.func @transform_8(%arg0: i32) -> (i32, i32) {
    %c0_i32 = arith.constant 0 : i32
    %c0_i32_0 = arith.constant 0 : i32
    %c0_i32_1 = arith.constant 0 : i32
    return %c0_i32, %c0_i32_0 : i32, i32
  }
  func.func @transform_9(%arg0: i32) -> (i32, i32) {
    %c0_i32 = arith.constant 0 : i32
    %c0_i32_0 = arith.constant 0 : i32
    %c0_i32_1 = arith.constant 0 : i32
    return %c0_i32, %c0_i32_0 : i32, i32
  }
  func.func @transform_10(%arg0: i32) -> (i32, i32) {
    %c0_i32 = arith.constant 0 : i32
    %c0_i32_0 = arith.constant 0 : i32
    %c0_i32_1 = arith.constant 0 : i32
    return %c0_i32, %c0_i32_0 : i32, i32
  }
  func.func @transform_11(%arg0: i32) -> (i32, i32) {
    %c0_i32 = arith.constant 0 : i32
    %c0_i32_0 = arith.constant 0 : i32
    %c0_i32_1 = arith.constant 0 : i32
    return %c0_i32, %c0_i32_0 : i32, i32
  }
  func.func @transform_12(%arg0: i32) -> (i32, i32) {
    %c0_i32 = arith.constant 0 : i32
    %c0_i32_0 = arith.constant 0 : i32
    %c0_i32_1 = arith.constant 0 : i32
    return %c0_i32, %c0_i32_0 : i32, i32
  }
  func.func @transform_13(%arg0: i32) -> (i32, i32) {
    %c0_i32 = arith.constant 0 : i32
    %c0_i32_0 = arith.constant 0 : i32
    return %arg0, %c0_i32 : i32, i32
  }
  func.func @transform_14(%arg0: i32) -> (i32, i32, i32) {
    %c0_i32 = arith.constant 0 : i32
    %c0_i32_0 = arith.constant 0 : i32
    %c0_i32_1 = arith.constant 0 : i32
    return %c0_i32, %arg0, %c0_i32_0 : i32, i32, i32
  }
}

</mosaic_0001>

<llo_original>
// kernel: tpu_custom_call.1
$region0: #{tpu_custom_call.1}
  #allocation0 [shape = 'u32[]', space=smem, size = 0x4, offset = 0x4, fixed_abs, tag = 'smem constant byte address 0x4 - core index']
  #allocation1 [shape = 'u32[144,128]{1,0:T(1,128)}', space=vmem, size = 0x12000, scoped, tag = 'internal scratch']
  #allocation20 [shape = 's32[]', space=sflag, size = 0x4, offset = 0, fixed_abs, tag = 'sflag constant byte address 0x0 - dummy sync flag']
  #allocation22 [shape = 's32[]', space=sflag, size = 0x4, offset = 0, fixed_abs, tag = 'sflag constant byte address 0x0 - dummy sync flag']
  %s0 = inlined_call_operand.hbm [shape: f32[256,128], index: 0, kind: input, shape index: {}]
  %s1 = inlined_call_operand.hbm [shape: f32[3,256,128], index: 1, kind: input, shape index: {}]
  %s2 = inlined_call_operand.hbm [shape: f32[128,128], index: 2, kind: input, shape index: {}]
  %s3 = inlined_call_operand.hbm [shape: f32[128,128], index: 3, kind: input, shape index: {}]
  %s4 = inlined_call_operand.hbm [shape: f32[128,128], index: 4, kind: input, shape index: {}]
  %s5 = inlined_call_operand.hbm [shape: f32[128,128], index: 5, kind: input, shape index: {}]
  %s6 = inlined_call_operand.vmem [shape: f32[1,128], index: 6, kind: input, shape index: {}]
  %s7 = inlined_call_operand.hbm [shape: f32[128,128], index: 7, kind: input, shape index: {}]
  %s8 = inlined_call_operand.hbm [shape: f32[128,128], index: 8, kind: input, shape index: {}]
  %s9 = inlined_call_operand.hbm [shape: f32[128,128], index: 9, kind: input, shape index: {}]
  %s10 = inlined_call_operand.vmem [shape: f32[1,128], index: 10, kind: input, shape index: {}]
  %s11 = inlined_call_operand.vmem [shape: f32[1,128], index: 11, kind: input, shape index: {}]
  %s12 = inlined_call_operand.vmem [shape: f32[1,128], index: 12, kind: input, shape index: {}]
  %s13 = inlined_call_operand.hbm [shape: f32[256,128], index: 13, kind: output, shape index: {0}]
  %s14 = inlined_call_operand.hbm [shape: f32[3,256,128], index: 14, kind: output, shape index: {1}]
  %15 = xla_tuple %s13, %s14
  %s16 = sld [smem:[#allocation0]]
  $region129: #{tpu_custom_call.1} parent=0
    _
  %s18 = ssub.s32 1, %s16
  %s19 = scalar_select 0, %s18, %s16
  $region1: #{tpu_custom_call.1} parent=0
    #allocation2 [shape = 'u8[131072]{0}', space=vmem, size = 0x20000, scoped, tag = 'input window, operand 0']
    #allocation3 [shape = 's32[2]{0}', space=sflag, size = 0x8, scoped, tag = 'scoped memory for tpu_custom_call.1']
    #allocation4 [shape = 's32[2]{0}', space=sflag, size = 0x8, scoped, tag = 'scoped memory for tpu_custom_call.1']
    #allocation5 [shape = 'u8[393216]{0}', space=vmem, size = 0x60000, scoped, tag = 'input window, operand 1']
    #allocation6 [shape = 's32[2]{0}', space=sflag, size = 0x8, scoped, tag = 'scoped memory for tpu_custom_call.1']
    #allocation7 [shape = 'u8[65536]{0}', space=vmem, size = 0x10000, scoped, tag = 'input window, operand 2, single buffered']
    #allocation8 [shape = 'u8[65536]{0}', space=vmem, size = 0x10000, scoped, tag = 'input window, operand 3, single buffered']
    #allocation9 [shape = 's32[1]{0}', space=sflag, size = 0x4, scoped, tag = 'scoped memory for tpu_custom_call.1']
    #allocation10 [shape = 'u8[65536]{0}', space=vmem, size = 0x10000, scoped, tag = 'input window, operand 4, single buffered']
    #allocation11 [shape = 'u8[65536]{0}', space=vmem, size = 0x10000, scoped, tag = 'input window, operand 5, single buffered']
    #allocation12 [shape = 's32[1]{0}', space=sflag, size = 0x4, scoped, tag = 'scoped memory for tpu_custom_call.1']
    #allocation13 [shape = 'u8[65536]{0}', space=vmem, size = 0x10000, scoped, tag = 'input window, operand 7, single buffered']
    #allocation14 [shape = 'u8[65536]{0}', space=vmem, size = 0x10000, scoped, tag = 'input window, operand 8, single buffered']
    #allocation15 [shape = 's32[1]{0}', space=sflag, size = 0x4, scoped, tag = 'scoped memory for tpu_custom_call.1']
    #allocation16 [shape = 'u8[65536]{0}', space=vmem, size = 0x10000, scoped, tag = 'input window, operand 9, single buffered']
    #allocation17 [shape = 'u8[131072]{0}', space=vmem, size = 0x20000, scoped, tag = 'output window, operand 0']
    #allocation18 [shape = 'u8[393216]{0}', space=vmem, size = 0x60000, scoped, tag = 'output window, operand 1']
    #allocation19 [shape = 's32[2]{0}', space=sflag, size = 0x8, scoped, tag = 'scoped memory for tpu_custom_call.1']
    %20 = vsyncpa [#allocation3], 0
    %s21 = scalar_lea.sflag [#allocation3], 1
    %22 = vsyncpa %s21, 0
    %23 = vsyncpa [#allocation6], 0
    %s24 = scalar_lea.sflag [#allocation6], 1
    %25 = vsyncpa %s24, 0
    %26 = vsyncpa [#allocation9], 0
    %27 = vsyncpa [#allocation12], 0
    %28 = vsyncpa [#allocation15], 0
    %29 = vsyncpa [#allocation4], 0
    %s30 = scalar_lea.sflag [#allocation4], 1
    %31 = vsyncpa %s30, 0
    %32 = vsyncpa [#allocation19], 0
    %s33 = scalar_lea.sflag [#allocation19], 1
    %34 = vsyncpa %s33, 0
    loop: start=0, step=1, limit=4
    $region2: #{tpu_custom_call.1} parent=1 // loop_pre_header
      _
    $region3: #{tpu_custom_call.1} parent=1 // loop_header
      %s36 = sphi 0, %s40
      %p37 = scmp.ge.s32.totalorder %s36, 4
      %s46 = sphi 0, %s48
      %s49 = sphi 0, %s46
      %s50 = sphi 0, %s49
      %s66 = sphi 0, %s50
      %s72 = sphi 0, %s74
      %s75 = sphi 0, %s72
      %s76 = sphi 0, %s75
      %s92 = sphi 0, %s76
      %s96 = sphi 0, %s96
      %s98 = sphi 0, %s96
      %s99 = sphi 0, %s98
      %s113 = sphi 0, %s99
      %s117 = sphi 0, %s117
      %s119 = sphi 0, %s117
      %s120 = sphi 0, %s119
      %s134 = sphi 0, %s120
      %s138 = sphi 0, %s138
      %s140 = sphi 0, %s138
      %s141 = sphi 0, %s140
      %s155 = sphi 0, %s141
      %s159 = sphi 0, %s159
      %s161 = sphi 0, %s159
      %s162 = sphi 0, %s161
      %s176 = sphi 0, %s162
      %s180 = sphi 0, %s180
      %s182 = sphi 0, %s180
      %s183 = sphi 0, %s182
      %s197 = sphi 0, %s183
      %s201 = sphi 0, %s201
      %s203 = sphi 0, %s201
      %s204 = sphi 0, %s203
      %s218 = sphi 0, %s204
      %s222 = sphi 0, %s222
      %s224 = sphi 0, %s222
      %s225 = sphi 0, %s224
      %s239 = sphi 0, %s225
      %s243 = sphi 0, %s243
      %s245 = sphi 0, %s243
      %s246 = sphi 0, %s245
      %s260 = sphi 0, %s246
      %s264 = sphi 0, %s264
      %s266 = sphi 0, %s264
      %s267 = sphi 0, %s266
      %s281 = sphi 0, %s267
      %s285 = sphi 0, %s285
      %s287 = sphi 0, %s285
      %s288 = sphi 0, %s287
      %s302 = sphi 0, %s288
      %s306 = sphi 0, %s306
      %s308 = sphi 0, %s306
      %s309 = sphi 0, %s308
      %s323 = sphi 0, %s309
      %s329 = sphi 0, %s331
      %s332 = sphi 0, %s329
      %s333 = sphi 0, %s332
      %s349 = sphi 0, %s333
      %s355 = sphi 0, %s357
      %s358 = sphi 0, %s355
      %s359 = sphi 0, %s358
      %s375 = sphi 0, %s359
    $region4: #{tpu_custom_call.1} parent=1 // loop_header_branch
      %39 = sbr.rel (%p37) target = $region8
    $region5: #{tpu_custom_call.1} parent=1 // loop_body
      %s41 = ssub.s32 %s36, 1
      %s42 = ssub.s32 %s36, 2
      %s43 = sadd.s32 %s36, 1
      %s44 = ssub.s32 %s36, %s43
      %p45 = scmp.eq.s32.totalorder %s44, 0
      %s47 = sadd.s32 %s46, 1
      %s48 = scalar_select %p45, %s46, %s47
      %p51 = pneg %p45
      %p52 = scmp.eq.s32.totalorder %s36, 1
      %p53 = por %p51, %p52
      %p54 = scmp.ne.s32.totalorder %s46, %s49
      %p55 = scmp.eq.s32.totalorder %s36, 0
      %p56 = por %p54, %p55
      %p57 = scmp.ne.s32.totalorder %s46, %s49
      %p58 = scmp.eq.s32.totalorder %s41, 1
      %p59 = por %p57, %p58
      %p60 = scmp.ne.s32.totalorder %s49, %s50
      %p61 = scmp.eq.s32.totalorder %s41, 0
      %p62 = por %p60, %p61
      %p63 = scmp.ne.s32.totalorder %s49, %s50
      %p64 = scmp.eq.s32.totalorder %s42, 1
      %p65 = por %p63, %p64
      %p67 = scmp.ne.s32.totalorder %s50, %s66
      %p68 = scmp.eq.s32.totalorder %s42, 0
      %p69 = por %p67, %p68
      %s70 = ssub.s32 %s36, %s43
      %p71 = scmp.eq.s32.totalorder %s70, 0
      %s73 = sadd.s32 %s72, 1
      %s74 = scalar_select %p71, %s72, %s73
      %p77 = pneg %p71
      %p78 = scmp.eq.s32.totalorder %s36, 1
      %p79 = por %p77, %p78
      %p80 = scmp.ne.s32.totalorder %s72, %s75
      %p81 = scmp.eq.s32.totalorder %s36, 0
      %p82 = por %p80, %p81
      %p83 = scmp.ne.s32.totalorder %s72, %s75
      %p84 = scmp.eq.s32.totalorder %s41, 1
      %p85 = por %p83, %p84
      %p86 = scmp.ne.s32.totalorder %s75, %s76
      %p87 = scmp.eq.s32.totalorder %s41, 0
      %p88 = por %p86, %p87
      %p89 = scmp.ne.s32.totalorder %s75, %s76
      %p90 = scmp.eq.s32.totalorder %s42, 1
      %p91 = por %p89, %p90
      %p93 = scmp.ne.s32.totalorder %s76, %s92
      %p94 = scmp.eq.s32.totalorder %s42, 0
      %p95 = por %p93, %p94
      %s97 = sadd.s32 %s96, 1
      %p100 = scmp.eq.s32.totalorder %s36, 1
      %p101 = scmp.ne.s32.totalorder %s96, %s98
      %p102 = scmp.eq.s32.totalorder %s36, 0
      %p103 = por %p101, %p102
      %p104 = scmp.ne.s32.totalorder %s96, %s98
      %p105 = scmp.eq.s32.totalorder %s41, 1
      %p106 = por %p104, %p105
      %p107 = scmp.ne.s32.totalorder %s98, %s99
      %p108 = scmp.eq.s32.totalorder %s41, 0
      %p109 = por %p107, %p108
      %p110 = scmp.ne.s32.totalorder %s98, %s99
      %p111 = scmp.eq.s32.totalorder %s42, 1
      %p112 = por %p110, %p111
      %p114 = scmp.ne.s32.totalorder %s99, %s113
      %p115 = scmp.eq.s32.totalorder %s42, 0
      %p116 = por %p114, %p115
      %s118 = sadd.s32 %s117, 1
      %p121 = scmp.eq.s32.totalorder %s36, 1
      %p122 = scmp.ne.s32.totalorder %s117, %s119
      %p123 = scmp.eq.s32.totalorder %s36, 0
      %p124 = por %p122, %p123
      %p125 = scmp.ne.s32.totalorder %s117, %s119
      %p126 = scmp.eq.s32.totalorder %s41, 1
      %p127 = por %p125, %p126
      %p128 = scmp.ne.s32.totalorder %s119, %s120
      %p129 = scmp.eq.s32.totalorder %s41, 0
      %p130 = por %p128, %p129
      %p131 = scmp.ne.s32.totalorder %s119, %s120
      %p132 = scmp.eq.s32.totalorder %s42, 1
      %p133 = por %p131, %p132
      %p135 = scmp.ne.s32.totalorder %s120, %s134
      %p136 = scmp.eq.s32.totalorder %s42, 0
      %p137 = por %p135, %p136
      %s139 = sadd.s32 %s138, 1
      %p142 = scmp.eq.s32.totalorder %s36, 1
      %p143 = scmp.ne.s32.totalorder %s138, %s140
      %p144 = scmp.eq.s32.totalorder %s36, 0
      %p145 = por %p143, %p144
      %p146 = scmp.ne.s32.totalorder %s138, %s140
      %p147 = scmp.eq.s32.totalorder %s41, 1
      %p148 = por %p146, %p147
      %p149 = scmp.ne.s32.totalorder %s140, %s141
      %p150 = scmp.eq.s32.totalorder %s41, 0
      %p151 = por %p149, %p150
      %p152 = scmp.ne.s32.totalorder %s140, %s141
      %p153 = scmp.eq.s32.totalorder %s42, 1
      %p154 = por %p152, %p153
      %p156 = scmp.ne.s32.totalorder %s141, %s155
      %p157 = scmp.eq.s32.totalorder %s42, 0
      %p158 = por %p156, %p157
      %s160 = sadd.s32 %s159, 1
      %p163 = scmp.eq.s32.totalorder %s36, 1
      %p164 = scmp.ne.s32.totalorder %s159, %s161
      %p165 = scmp.eq.s32.totalorder %s36, 0
      %p166 = por %p164, %p165
      %p167 = scmp.ne.s32.totalorder %s159, %s161
      %p168 = scmp.eq.s32.totalorder %s41, 1
      %p169 = por %p167, %p168
      %p170 = scmp.ne.s32.totalorder %s161, %s162
      %p171 = scmp.eq.s32.totalorder %s41, 0
      %p172 = por %p170, %p171
      %p173 = scmp.ne.s32.totalorder %s161, %s162
      %p174 = scmp.eq.s32.totalorder %s42, 1
      %p175 = por %p173, %p174
      %p177 = scmp.ne.s32.totalorder %s162, %s176
      %p178 = scmp.eq.s32.totalorder %s42, 0
      %p179 = por %p177, %p178
      %s181 = sadd.s32 %s180, 1
      %p184 = scmp.eq.s32.totalorder %s36, 1
      %p185 = scmp.ne.s32.totalorder %s180, %s182
      %p186 = scmp.eq.s32.totalorder %s36, 0
      %p187 = por %p185, %p186
      %p188 = scmp.ne.s32.totalorder %s180, %s182
      %p189 = scmp.eq.s32.totalorder %s41, 1
      %p190 = por %p188, %p189
      %p191 = scmp.ne.s32.totalorder %s182, %s183
      %p192 = scmp.eq.s32.totalorder %s41, 0
      %p193 = por %p191, %p192
      %p194 = scmp.ne.s32.totalorder %s182, %s183
      %p195 = scmp.eq.s32.totalorder %s42, 1
      %p196 = por %p194, %p195
      %p198 = scmp.ne.s32.totalorder %s183, %s197
      %p199 = scmp.eq.s32.totalorder %s42, 0
      %p200 = por %p198, %p199
      %s202 = sadd.s32 %s201, 1
      %p205 = scmp.eq.s32.totalorder %s36, 1
      %p206 = scmp.ne.s32.totalorder %s201, %s203
      %p207 = scmp.eq.s32.totalorder %s36, 0
      %p208 = por %p206, %p207
      %p209 = scmp.ne.s32.totalorder %s201, %s203
      %p210 = scmp.eq.s32.totalorder %s41, 1
      %p211 = por %p209, %p210
      %p212 = scmp.ne.s32.totalorder %s203, %s204
      %p213 = scmp.eq.s32.totalorder %s41, 0
      %p214 = por %p212, %p213
      %p215 = scmp.ne.s32.totalorder %s203, %s204
      %p216 = scmp.eq.s32.totalorder %s42, 1
      %p217 = por %p215, %p216
      %p219 = scmp.ne.s32.totalorder %s204, %s218
      %p220 = scmp.eq.s32.totalorder %s42, 0
      %p221 = por %p219, %p220
      %s223 = sadd.s32 %s222, 1
      %p226 = scmp.eq.s32.totalorder %s36, 1
      %p227 = scmp.ne.s32.totalorder %s222, %s224
      %p228 = scmp.eq.s32.totalorder %s36, 0
      %p229 = por %p227, %p228
      %p230 = scmp.ne.s32.totalorder %s222, %s224
      %p231 = scmp.eq.s32.totalorder %s41, 1
      %p232 = por %p230, %p231
      %p233 = scmp.ne.s32.totalorder %s224, %s225
      %p234 = scmp.eq.s32.totalorder %s41, 0
      %p235 = por %p233, %p234
      %p236 = scmp.ne.s32.totalorder %s224, %s225
      %p237 = scmp.eq.s32.totalorder %s42, 1
      %p238 = por %p236, %p237
      %p240 = scmp.ne.s32.totalorder %s225, %s239
      %p241 = scmp.eq.s32.totalorder %s42, 0
      %p242 = por %p240, %p241
      %s244 = sadd.s32 %s243, 1
      %p247 = scmp.eq.s32.totalorder %s36, 1
      %p248 = scmp.ne.s32.totalorder %s243, %s245
      %p249 = scmp.eq.s32.totalorder %s36, 0
      %p250 = por %p248, %p249
      %p251 = scmp.ne.s32.totalorder %s243, %s245
      %p252 = scmp.eq.s32.totalorder %s41, 1
      %p253 = por %p251, %p252
      %p254 = scmp.ne.s32.totalorder %s245, %s246
      %p255 = scmp.eq.s32.totalorder %s41, 0
      %p256 = por %p254, %p255
      %p257 = scmp.ne.s32.totalorder %s245, %s246
      %p258 = scmp.eq.s32.totalorder %s42, 1
      %p259 = por %p257, %p258
      %p261 = scmp.ne.s32.totalorder %s246, %s260
      %p262 = scmp.eq.s32.totalorder %s42, 0
      %p263 = por %p261, %p262
      %s265 = sadd.s32 %s264, 1
      %p268 = scmp.eq.s32.totalorder %s36, 1
      %p269 = scmp.ne.s32.totalorder %s264, %s266
      %p270 = scmp.eq.s32.totalorder %s36, 0
      %p271 = por %p269, %p270
      %p272 = scmp.ne.s32.totalorder %s264, %s266
      %p273 = scmp.eq.s32.totalorder %s41, 1
      %p274 = por %p272, %p273
      %p275 = scmp.ne.s32.totalorder %s266, %s267
      %p276 = scmp.eq.s32.totalorder %s41, 0
      %p277 = por %p275, %p276
      %p278 = scmp.ne.s32.totalorder %s266, %s267
      %p279 = scmp.eq.s32.totalorder %s42, 1
      %p280 = por %p278, %p279
      %p282 = scmp.ne.s32.totalorder %s267, %s281
      %p283 = scmp.eq.s32.totalorder %s42, 0
      %p284 = por %p282, %p283
      %s286 = sadd.s32 %s285, 1
      %p289 = scmp.eq.s32.totalorder %s36, 1
      %p290 = scmp.ne.s32.totalorder %s285, %s287
      %p291 = scmp.eq.s32.totalorder %s36, 0
      %p292 = por %p290, %p291
      %p293 = scmp.ne.s32.totalorder %s285, %s287
      %p294 = scmp.eq.s32.totalorder %s41, 1
      %p295 = por %p293, %p294
      %p296 = scmp.ne.s32.totalorder %s287, %s288
      %p297 = scmp.eq.s32.totalorder %s41, 0
      %p298 = por %p296, %p297
      %p299 = scmp.ne.s32.totalorder %s287, %s288
      %p300 = scmp.eq.s32.totalorder %s42, 1
      %p301 = por %p299, %p300
      %p303 = scmp.ne.s32.totalorder %s288, %s302
      %p304 = scmp.eq.s32.totalorder %s42, 0
      %p305 = por %p303, %p304
      %s307 = sadd.s32 %s306, 1
      %p310 = scmp.eq.s32.totalorder %s36, 1
      %p311 = scmp.ne.s32.totalorder %s306, %s308
      %p312 = scmp.eq.s32.totalorder %s36, 0
      %p313 = por %p311, %p312
      %p314 = scmp.ne.s32.totalorder %s306, %s308
      %p315 = scmp.eq.s32.totalorder %s41, 1
      %p316 = por %p314, %p315
      %p317 = scmp.ne.s32.totalorder %s308, %s309
      %p318 = scmp.eq.s32.totalorder %s41, 0
      %p319 = por %p317, %p318
      %p320 = scmp.ne.s32.totalorder %s308, %s309
      %p321 = scmp.eq.s32.totalorder %s42, 1
      %p322 = por %p320, %p321
      %p324 = scmp.ne.s32.totalorder %s309, %s323
      %p325 = scmp.eq.s32.totalorder %s42, 0
      %p326 = por %p324, %p325
      %s327 = ssub.s32 %s36, %s43
      %p328 = scmp.eq.s32.totalorder %s327, 0
      %s330 = sadd.s32 %s329, 1
      %s331 = scalar_select %p328, %s329, %s330
      %p334 = pneg %p328
      %p335 = scmp.eq.s32.totalorder %s36, 1
      %p336 = por %p334, %p335
      %p337 = scmp.ne.s32.totalorder %s329, %s332
      %p338 = scmp.eq.s32.totalorder %s36, 0
      %p339 = por %p337, %p338
      %p340 = scmp.ne.s32.totalorder %s329, %s332
      %p341 = scmp.eq.s32.totalorder %s41, 1
      %p342 = por %p340, %p341
      %p343 = scmp.ne.s32.totalorder %s332, %s333
      %p344 = scmp.eq.s32.totalorder %s41, 0
      %p345 = por %p343, %p344
      %p346 = scmp.ne.s32.totalorder %s332, %s333
      %p347 = scmp.eq.s32.totalorder %s42, 1
      %p348 = por %p346, %p347
      %p350 = scmp.ne.s32.totalorder %s333, %s349
      %p351 = scmp.eq.s32.totalorder %s42, 0
      %p352 = por %p350, %p351
      %s353 = ssub.s32 %s36, %s43
      %p354 = scmp.eq.s32.totalorder %s353, 0
      %s356 = sadd.s32 %s355, 1
      %s357 = scalar_select %p354, %s355, %s356
      %p360 = pneg %p354
      %p361 = scmp.eq.s32.totalorder %s36, 1
      %p362 = por %p360, %p361
      %p363 = scmp.ne.s32.totalorder %s355, %s358
      %p364 = scmp.eq.s32.totalorder %s36, 0
      %p365 = por %p363, %p364
      %p366 = scmp.ne.s32.totalorder %s355, %s358
      %p367 = scmp.eq.s32.totalorder %s41, 1
      %p368 = por %p366, %p367
      %p369 = scmp.ne.s32.totalorder %s358, %s359
      %p370 = scmp.eq.s32.totalorder %s41, 0
      %p371 = por %p369, %p370
      %p372 = scmp.ne.s32.totalorder %s358, %s359
      %p373 = scmp.eq.s32.totalorder %s42, 1
      %p374 = por %p372, %p373
      %p376 = scmp.ne.s32.totalorder %s359, %s375
      %p377 = scmp.eq.s32.totalorder %s42, 0
      %p378 = por %p376, %p377
      %p379 = scmp.le.s32.totalorder 1, %s36
      %p380 = scmp.lt.s32.totalorder %s36, 3
      %p381 = pnand %p379, %p380
      %p382 = pneg %p381
      // Predicated region
      $region9: #{tpu_custom_call.1} parent=5 // pred_check
        _
      $region10: #{tpu_custom_call.1} parent=5 // pred_check_branch
        %384 = sbr.rel (%p381) target = $region12
      $region11: #{tpu_custom_call.1} parent=5 // pred_region
        %s385 = ssub.s32 %s36, 1
        // Predicated region
        $region13: #{tpu_custom_call.1} parent=11 // pred_check
          %p386 = pneg %p109
        $region14: #{tpu_custom_call.1} parent=11 // pred_check_branch
          %388 = sbr.rel (%p386) target = $region16
        $region15: #{tpu_custom_call.1} parent=11 // pred_region
          %s390 = ssub.s32 2048, 2048
          %391 = vsyncadd [#allocation6], %s390
          %s392 = sshll.u32 [#allocation7], 4
          %s393 = int_to_ptr.vmem [resolvable:$true] %s392
          %398 = dma.hbm_to_vmem [thread:$0]  %s2, 2048, %s393, [#allocation6], 128, 128, 8
        $region16: #{tpu_custom_call.1} parent=11 // pred_fallthru
          _
        // Predicated region
        $region17: #{tpu_custom_call.1} parent=11 // pred_check
          %p399 = pneg %p130
        $region18: #{tpu_custom_call.1} parent=11 // pred_check_branch
          %401 = sbr.rel (%p399) target = $region20
        $region19: #{tpu_custom_call.1} parent=11 // pred_region
          %s403 = ssub.s32 2048, 2048
          %404 = vsyncadd [#allocation9], %s403
          %s405 = sshll.u32 [#allocation8], 4
          %s406 = int_to_ptr.vmem [resolvable:$true] %s405
          %411 = dma.hbm_to_vmem [thread:$0]  %s3, 2048, %s406, [#allocation9], 128, 128, 8
        $region20: #{tpu_custom_call.1} parent=11 // pred_fallthru
          _
        // Predicated region
        $region21: #{tpu_custom_call.1} parent=11 // pred_check
          %p412 = pneg %p151
        $region22: #{tpu_custom_call.1} parent=11 // pred_check_branch
          %414 = sbr.rel (%p412) target = $region24
        $region23: #{tpu_custom_call.1} parent=11 // pred_region
          %s416 = ssub.s32 2048, 2048
          %417 = vsyncadd [#allocation9], %s416
          %s418 = sshll.u32 [#allocation10], 4
          %s419 = int_to_ptr.vmem [resolvable:$true] %s418
          %424 = dma.hbm_to_vmem [thread:$0]  %s4, 2048, %s419, [#allocation9], 128, 128, 8
        $region24: #{tpu_custom_call.1} parent=11 // pred_fallthru
          _
        // Predicated region
        $region25: #{tpu_custom_call.1} parent=11 // pred_check
          %p425 = pneg %p172
        $region26: #{tpu_custom_call.1} parent=11 // pred_check_branch
          %427 = sbr.rel (%p425) target = $region28
        $region27: #{tpu_custom_call.1} parent=11 // pred_region
          %s429 = ssub.s32 2048, 2048
          %430 = vsyncadd [#allocation12], %s429
          %s431 = sshll.u32 [#allocation11], 4
          %s432 = int_to_ptr.vmem [resolvable:$true] %s431
          %437 = dma.hbm_to_vmem [thread:$0]  %s5, 2048, %s432, [#allocation12], 128, 128, 8
        $region28: #{tpu_custom_call.1} parent=11 // pred_fallthru
          _
        // Predicated region
        $region29: #{tpu_custom_call.1} parent=11 // pred_check
          %p438 = pneg %p193
        $region30: #{tpu_custom_call.1} parent=11 // pred_check_branch
          %440 = sbr.rel (%p438) target = $region32
        $region31: #{tpu_custom_call.1} parent=11 // pred_region
          _
        $region32: #{tpu_custom_call.1} parent=11 // pred_fallthru
          _
        // Predicated region
        $region33: #{tpu_custom_call.1} parent=11 // pred_check
          %p441 = pneg %p214
        $region34: #{tpu_custom_call.1} parent=11 // pred_check_branch
          %443 = sbr.rel (%p441) target = $region36
        $region35: #{tpu_custom_call.1} parent=11 // pred_region
          %s445 = ssub.s32 2048, 2048
          %446 = vsyncadd [#allocation12], %s445
          %s447 = sshll.u32 [#allocation13], 4
          %s448 = int_to_ptr.vmem [resolvable:$true] %s447
          %453 = dma.hbm_to_vmem [thread:$0]  %s7, 2048, %s448, [#allocation12], 128, 128, 8
        $region36: #{tpu_custom_call.1} parent=11 // pred_fallthru
          _
        // Predicated region
        $region37: #{tpu_custom_call.1} parent=11 // pred_check
          %p454 = pneg %p235
        $region38: #{tpu_custom_call.1} parent=11 // pred_check_branch
          %456 = sbr.rel (%p454) target = $region40
        $region39: #{tpu_custom_call.1} parent=11 // pred_region
          %s458 = ssub.s32 2048, 2048
          %459 = vsyncadd [#allocation15], %s458
          %s460 = sshll.u32 [#allocation14], 4
          %s461 = int_to_ptr.vmem [resolvable:$true] %s460
          %466 = dma.hbm_to_vmem [thread:$0]  %s8, 2048, %s461, [#allocation15], 128, 128, 8
        $region40: #{tpu_custom_call.1} parent=11 // pred_fallthru
          _
        // Predicated region
        $region41: #{tpu_custom_call.1} parent=11 // pred_check
          %p467 = pneg %p256
        $region42: #{tpu_custom_call.1} parent=11 // pred_check_branch
          %469 = sbr.rel (%p467) target = $region44
        $region43: #{tpu_custom_call.1} parent=11 // pred_region
          %s471 = ssub.s32 2048, 2048
          %472 = vsyncadd [#allocation15], %s471
          %s473 = sshll.u32 [#allocation16], 4
          %s474 = int_to_ptr.vmem [resolvable:$true] %s473
          %479 = dma.hbm_to_vmem [thread:$0]  %s9, 2048, %s474, [#allocation15], 128, 128, 8
        $region44: #{tpu_custom_call.1} parent=11 // pred_fallthru
          _
        // Predicated region
        $region45: #{tpu_custom_call.1} parent=11 // pred_check
          %p480 = pneg %p277
        $region46: #{tpu_custom_call.1} parent=11 // pred_check_branch
          %482 = sbr.rel (%p480) target = $region48
        $region47: #{tpu_custom_call.1} parent=11 // pred_region
          _
        $region48: #{tpu_custom_call.1} parent=11 // pred_fallthru
          _
        // Predicated region
        $region49: #{tpu_custom_call.1} parent=11 // pred_check
          %p483 = pneg %p298
        $region50: #{tpu_custom_call.1} parent=11 // pred_check_branch
          %485 = sbr.rel (%p483) target = $region52
        $region51: #{tpu_custom_call.1} parent=11 // pred_region
          _
        $region52: #{tpu_custom_call.1} parent=11 // pred_fallthru
          _
        // Predicated region
        $region53: #{tpu_custom_call.1} parent=11 // pred_check
          %p486 = pneg %p319
        $region54: #{tpu_custom_call.1} parent=11 // pred_check_branch
          %488 = sbr.rel (%p486) target = $region56
        $region55: #{tpu_custom_call.1} parent=11 // pred_region
          _
        $region56: #{tpu_custom_call.1} parent=11 // pred_fallthru
          _
      $region12: #{tpu_custom_call.1} parent=5 // pred_fallthru
        _
      %p489 = scmp.lt.s32.totalorder %s36, 2
      // Predicated region
      $region57: #{tpu_custom_call.1} parent=5 // pred_check
        %p490 = pneg %p489
      $region58: #{tpu_custom_call.1} parent=5 // pred_check_branch
        %492 = sbr.rel (%p490) target = $region60
      $region59: #{tpu_custom_call.1} parent=5 // pred_region
        // Predicated region
        $region61: #{tpu_custom_call.1} parent=59 // pred_check
          %p493 = pneg %p56
        $region62: #{tpu_custom_call.1} parent=59 // pred_check_branch
          %495 = sbr.rel (%p493) target = $region64
        $region63: #{tpu_custom_call.1} parent=59 // pred_region
          %s496 = sand.u32 %s46, 1
          %s497 = scalar_lea.sflag [#allocation3], %s496
          %s498 = sand.u32 %s46, 1
          %s499 = smul.addr %s498, 128
          %s500 = scalar_lea.vmem [#allocation2], %s499
          %s501 = smul.u32 16, %s36
          %s503 = ssub.s32 2048, 2048
          %504 = vsyncadd %s497, %s503
          %s505 = smul.addr %s501, 128
          %s506 = scalar_lea.hbm %s0, %s505
          %s507 = sshll.u32 %s500, 4
          %s508 = int_to_ptr.vmem [resolvable:$true] %s507
          %513 = dma.hbm_to_vmem [thread:$0]  %s506, 2048, %s508, %s497, 128, 128, 8
        $region64: #{tpu_custom_call.1} parent=59 // pred_fallthru
          _
        // Predicated region
        $region65: #{tpu_custom_call.1} parent=59 // pred_check
          %p514 = pneg %p82
        $region66: #{tpu_custom_call.1} parent=59 // pred_check_branch
          %516 = sbr.rel (%p514) target = $region68
        $region67: #{tpu_custom_call.1} parent=59 // pred_region
          #allocation21 [shape = 'u32[6]{0}', space=smem, size = 0x18, scoped, tag = 'DMA stride descriptor']
          %s517 = sand.u32 %s36, 1
          %s518 = scalar_lea.sflag [#allocation6], %s517
          %s519 = sand.u32 %s72, 1
          %s520 = smul.addr %s519, 384
          %s521 = scalar_lea.vmem [#allocation5], %s520
          %s522 = smul.u32 16, %s36
          %s524 = ssub.s32 6144, 6144
          %525 = vsyncadd %s518, %s524
          %s526 = smul.addr %s522, 128
          %s527 = scalar_lea.hbm %s1, %s526
          %s529 = sshll.u32 1, 14
          %s530 = sxor.u32 4294967295, %s529
          %s532 = sld [smem:[#allocation0]]
          %s533 = sadd.s32 2, %s532
          %s535 = sshll.u32 7, 26
          %s536 = sxor.u32 4294967295, %s535
          %s537 = sand.u32 0, %s536
          %s538 = sshll.u32 %s533, 26
          %s539 = sor.u32 %s537, %s538
          %s540 = sshll.u32 %s521, 4
          %s541 = int_to_ptr.vmem [resolvable:$true] %s540
          %547 = sst [smem:[#allocation21]] 4096
          %s548 = scalar_lea.smem [#allocation21], 1
          %549 = sst [smem:[%s548]] 2048
          %s550 = scalar_lea.smem [#allocation21], 2
          %551 = sst [smem:[%s550]] 16
          %s552 = scalar_lea.smem [#allocation21], 3
          %553 = sst [smem:[%s552]] 128
          %s554 = scalar_lea.smem [#allocation21], 4
          %555 = sst [smem:[%s554]] 128
          %s556 = scalar_lea.smem [#allocation21], 5
          %557 = sst [smem:[%s556]] 8
          %559 = dma.general %s527, 6144, %s541, %s518, 131072, [#allocation21], %s539, 0
        $region68: #{tpu_custom_call.1} parent=59 // pred_fallthru
          _
      $region60: #{tpu_custom_call.1} parent=5 // pred_fallthru
        _
      %p560 = scmp.le.s32.totalorder 1, %s36
      %p561 = scmp.lt.s32.totalorder %s36, 3
      %p562 = pnand %p560, %p561
      %p563 = pneg %p562
      // Predicated region
      $region69: #{tpu_custom_call.1} parent=5 // pred_check
        _
      $region70: #{tpu_custom_call.1} parent=5 // pred_check_branch
        %565 = sbr.rel (%p562) target = $region72
      $region71: #{tpu_custom_call.1} parent=5 // pred_region
        %s566 = ssub.s32 %s36, 1
        %s567 = sand.u32 %s49, 1
        %s568 = scalar_lea.sflag [#allocation3], %s567
        %s569 = sand.u32 %s49, 1
        %s570 = smul.addr %s569, 128
        %s571 = scalar_lea.vmem [#allocation2], %s570
        // Predicated region
        $region73: #{tpu_custom_call.1} parent=71 // pred_check
          %p572 = pneg %p62
        $region74: #{tpu_custom_call.1} parent=71 // pred_check_branch
          %574 = sbr.rel (%p572) target = $region76
        $region75: #{tpu_custom_call.1} parent=71 // pred_region
          %575 = dma.done %s568, 2048
        $region76: #{tpu_custom_call.1} parent=71 // pred_fallthru
          _
        %s576 = sand.u32 %s41, 1
        %s577 = scalar_lea.sflag [#allocation6], %s576
        %s578 = sand.u32 %s75, 1
        %s579 = smul.addr %s578, 384
        %s580 = scalar_lea.vmem [#allocation5], %s579
        // Predicated region
        $region77: #{tpu_custom_call.1} parent=71 // pred_check
          %p581 = pneg %p88
        $region78: #{tpu_custom_call.1} parent=71 // pred_check_branch
          %583 = sbr.rel (%p581) target = $region80
        $region79: #{tpu_custom_call.1} parent=71 // pred_region
          %584 = dma.done %s577, 6144
        $region80: #{tpu_custom_call.1} parent=71 // pred_fallthru
          _
        // Predicated region
        $region81: #{tpu_custom_call.1} parent=71 // pred_check
          %p585 = pneg %p109
        $region82: #{tpu_custom_call.1} parent=71 // pred_check_branch
          %587 = sbr.rel (%p585) target = $region84
        $region83: #{tpu_custom_call.1} parent=71 // pred_region
          %588 = dma.done [#allocation6], 2048
        $region84: #{tpu_custom_call.1} parent=71 // pred_fallthru
          _
        // Predicated region
        $region85: #{tpu_custom_call.1} parent=71 // pred_check
          %p589 = pneg %p130
        $region86: #{tpu_custom_call.1} parent=71 // pred_check_branch
          %591 = sbr.rel (%p589) target = $region88
        $region87: #{tpu_custom_call.1} parent=71 // pred_region
          %592 = dma.done [#allocation9], 2048
        $region88: #{tpu_custom_call.1} parent=71 // pred_fallthru
          _
        // Predicated region
        $region89: #{tpu_custom_call.1} parent=71 // pred_check
          %p593 = pneg %p151
        $region90: #{tpu_custom_call.1} parent=71 // pred_check_branch
          %595 = sbr.rel (%p593) target = $region92
        $region91: #{tpu_custom_call.1} parent=71 // pred_region
          %596 = dma.done [#allocation9], 2048
        $region92: #{tpu_custom_call.1} parent=71 // pred_fallthru
          _
        // Predicated region
        $region93: #{tpu_custom_call.1} parent=71 // pred_check
          %p597 = pneg %p172
        $region94: #{tpu_custom_call.1} parent=71 // pred_check_branch
          %599 = sbr.rel (%p597) target = $region96
        $region95: #{tpu_custom_call.1} parent=71 // pred_region
          %600 = dma.done [#allocation12], 2048
        $region96: #{tpu_custom_call.1} parent=71 // pred_fallthru
          _
        // Predicated region
        $region97: #{tpu_custom_call.1} parent=71 // pred_check
          %p601 = pneg %p214
        $region98: #{tpu_custom_call.1} parent=71 // pred_check_branch
          %603 = sbr.rel (%p601) target = $region100
        $region99: #{tpu_custom_call.1} parent=71 // pred_region
          %604 = dma.done [#allocation12], 2048
        $region100: #{tpu_custom_call.1} parent=71 // pred_fallthru
          _
        // Predicated region
        $region101: #{tpu_custom_call.1} parent=71 // pred_check
          %p605 = pneg %p235
        $region102: #{tpu_custom_call.1} parent=71 // pred_check_branch
          %607 = sbr.rel (%p605) target = $region104
        $region103: #{tpu_custom_call.1} parent=71 // pred_region
          %608 = dma.done [#allocation15], 2048
        $region104: #{tpu_custom_call.1} parent=71 // pred_fallthru
          _
        // Predicated region
        $region105: #{tpu_custom_call.1} parent=71 // pred_check
          %p609 = pneg %p256
        $region106: #{tpu_custom_call.1} parent=71 // pred_check_branch
          %611 = sbr.rel (%p609) target = $region108
        $region107: #{tpu_custom_call.1} parent=71 // pred_region
          %612 = dma.done [#allocation15], 2048
        $region108: #{tpu_custom_call.1} parent=71 // pred_fallthru
          _
        %s613 = sand.u32 %s49, 1
        %s614 = scalar_lea.sflag [#allocation3], %s613
        %s615 = sand.u32 %s49, 1
        %s616 = smul.addr %s615, 128
        %s617 = scalar_lea.vmem [#allocation2], %s616
        %p618 = pneg %p62
        %p619 = pneg %p59
        %s620 = sand.u32 %s41, 1
        %s621 = scalar_lea.sflag [#allocation6], %s620
        %s622 = sand.u32 %s75, 1
        %s623 = smul.addr %s622, 384
        %s624 = scalar_lea.vmem [#allocation5], %s623
        %p625 = pneg %p88
        %p626 = pneg %p85
        %p627 = pneg %p109
        %p628 = pneg %p106
        %p629 = pneg %p130
        %p630 = pneg %p127
        %p631 = pneg %p151
        %p632 = pneg %p148
        %p633 = pneg %p172
        %p634 = pneg %p169
        %p635 = pneg %p193
        %p636 = pneg %p190
        %p637 = pneg %p214
        %p638 = pneg %p211
        %p639 = pneg %p235
        %p640 = pneg %p232
        %p641 = pneg %p256
        %p642 = pneg %p253
        %p643 = pneg %p277
        %p644 = pneg %p274
        %p645 = pneg %p298
        %p646 = pneg %p295
        %p647 = pneg %p319
        %p648 = pneg %p316
        %p649 = pneg %p345
        %p650 = pneg %p342
        %s651 = sand.u32 %s332, 1
        %s652 = scalar_lea.sflag [#allocation4], %s651
        %s653 = sand.u32 %s332, 1
        %s654 = smul.addr %s653, 128
        %s655 = scalar_lea.vmem [#allocation17], %s654
        %p656 = pneg %p371
        %p657 = pneg %p368
        %s658 = sand.u32 %s358, 1
        %s659 = scalar_lea.sflag [#allocation19], %s658
        %s660 = sand.u32 %s358, 1
        %s661 = smul.addr %s660, 384
        %s662 = scalar_lea.vmem [#allocation18], %s661
        %s663 = smul.u32 16, %s41
        %s664 = smul.u32 16, %s41
        %s665 = smul.u32 16, %s41
        %s666 = smul.u32 16, %s41
        %v667 = vld [vmem:[%s571] sm:$0xff]
        %v668 = vld [vmem:[%s571 + $0x8] sm:$0xff]
        %v669 = vld [vmem:[%s571 + $0x10] sm:$0xff]
        %v670 = vld [vmem:[%s571 + $0x18] sm:$0xff]
        %v671 = vld [vmem:[%s571 + $0x20] sm:$0xff]
        %v672 = vld [vmem:[%s571 + $0x28] sm:$0xff]
        %v673 = vld [vmem:[%s571 + $0x30] sm:$0xff]
        %v674 = vld [vmem:[%s571 + $0x38] sm:$0xff]
        %v675 = vld [vmem:[%s571 + $0x40] sm:$0xff]
        %v676 = vld [vmem:[%s571 + $0x48] sm:$0xff]
        %v677 = vld [vmem:[%s571 + $0x50] sm:$0xff]
        %v678 = vld [vmem:[%s571 + $0x58] sm:$0xff]
        %v679 = vld [vmem:[%s571 + $0x60] sm:$0xff]
        %v680 = vld [vmem:[%s571 + $0x68] sm:$0xff]
        %v681 = vld [vmem:[%s571 + $0x70] sm:$0xff]
        %v682 = vld [vmem:[%s571 + $0x78] sm:$0xff]
        %v683 = vld [vmem:[#allocation7] sm:$0xff]
        %v684 = vld [vmem:[#allocation7 + $0x8] sm:$0xff]
        %v685 = vld [vmem:[#allocation7 + $0x10] sm:$0xff]
        %v686 = vld [vmem:[#allocation7 + $0x18] sm:$0xff]
        %v687 = vld [vmem:[#allocation7 + $0x20] sm:$0xff]
        %v688 = vld [vmem:[#allocation7 + $0x28] sm:$0xff]
        %v689 = vld [vmem:[#allocation7 + $0x30] sm:$0xff]
        %v690 = vld [vmem:[#allocation7 + $0x38] sm:$0xff]
        %v691 = vld [vmem:[#allocation7 + $0x40] sm:$0xff]
        %v692 = vld [vmem:[#allocation7 + $0x48] sm:$0xff]
        %v693 = vld [vmem:[#allocation7 + $0x50] sm:$0xff]
        %v694 = vld [vmem:[#allocation7 + $0x58] sm:$0xff]
        %v695 = vld [vmem:[#allocation7 + $0x60] sm:$0xff]
        %v696 = vld [vmem:[#allocation7 + $0x68] sm:$0xff]
        %v697 = vld [vmem:[#allocation7 + $0x70] sm:$0xff]
        %v698 = vld [vmem:[#allocation7 + $0x78] sm:$0xff]
        %v699 = vld [vmem:[#allocation8] sm:$0xff]
        %v700 = vld [vmem:[#allocation8 + $0x8] sm:$0xff]
        %v701 = vld [vmem:[#allocation8 + $0x10] sm:$0xff]
        %v702 = vld [vmem:[#allocation8 + $0x18] sm:$0xff]
        %v703 = vld [vmem:[#allocation8 + $0x20] sm:$0xff]
        %v704 = vld [vmem:[#allocation8 + $0x28] sm:$0xff]
        %v705 = vld [vmem:[#allocation8 + $0x30] sm:$0xff]
        %v706 = vld [vmem:[#allocation8 + $0x38] sm:$0xff]
        %v707 = vld [vmem:[#allocation8 + $0x40] sm:$0xff]
        %v708 = vld [vmem:[#allocation8 + $0x48] sm:$0xff]
        %v709 = vld [vmem:[#allocation8 + $0x50] sm:$0xff]
        %v710 = vld [vmem:[#allocation8 + $0x58] sm:$0xff]
        %v711 = vld [vmem:[#allocation8 + $0x60] sm:$0xff]
        %v712 = vld [vmem:[#allocation8 + $0x68] sm:$0xff]
        %v713 = vld [vmem:[#allocation8 + $0x70] sm:$0xff]
        %v714 = vld [vmem:[#allocation8 + $0x78] sm:$0xff]
        %v715 = vld [vmem:[%s580] sm:$0xff]
        %v716 = vld [vmem:[%s580 + $0x8] sm:$0xff]
        %v717 = vld [vmem:[%s580 + $0x10] sm:$0xff]
        %v718 = vld [vmem:[%s580 + $0x18] sm:$0xff]
        %v719 = vld [vmem:[%s580 + $0x20] sm:$0xff]
        %v720 = vld [vmem:[%s580 + $0x28] sm:$0xff]
        %v721 = vld [vmem:[%s580 + $0x30] sm:$0xff]
        %v722 = vld [vmem:[%s580 + $0x38] sm:$0xff]
        %v723 = vld [vmem:[%s580 + $0x40] sm:$0xff]
        %v724 = vld [vmem:[%s580 + $0x48] sm:$0xff]
        %v725 = vld [vmem:[%s580 + $0x50] sm:$0xff]
        %v726 = vld [vmem:[%s580 + $0x58] sm:$0xff]
        %v727 = vld [vmem:[%s580 + $0x60] sm:$0xff]
        %v728 = vld [vmem:[%s580 + $0x68] sm:$0xff]
        %v729 = vld [vmem:[%s580 + $0x70] sm:$0xff]
        %v730 = vld [vmem:[%s580 + $0x78] sm:$0xff]
        %731 = vmatprep.subr.mxu0 0.0
        %732 = vmatpush1.msra.mxu0 %v698
        %733 = vmatprep.subr.mxu0 0.0
        %734 = vmatpush1.msra.mxu0 %v697
        %735 = vmatprep.subr.mxu0 0.0
        %736 = vmatpush1.msra.mxu0 %v696
        %737 = vmatprep.subr.mxu0 0.0
        %738 = vmatpush1.msra.mxu0 %v695
        %739 = vmatprep.subr.mxu0 0.0
        %740 = vmatpush1.msra.mxu0 %v694
        %741 = vmatprep.subr.mxu0 0.0
        %742 = vmatpush1.msra.mxu0 %v693
        %743 = vmatprep.subr.mxu0 0.0
        %744 = vmatpush1.msra.mxu0 %v692
        %745 = vmatprep.subr.mxu0 0.0
        %746 = vmatpush1.msra.mxu0 %v691
        %747 = vmatprep.subr.mxu0 0.0
        %748 = vmatpush1.msra.mxu0 %v690
        %749 = vmatprep.subr.mxu0 0.0
        %750 = vmatpush1.msra.mxu0 %v689
        %751 = vmatprep.subr.mxu0 0.0
        %752 = vmatpush1.msra.mxu0 %v688
        %753 = vmatprep.subr.mxu0 0.0
        %754 = vmatpush1.msra.mxu0 %v687
        %755 = vmatprep.subr.mxu0 0.0
        %756 = vmatpush1.msra.mxu0 %v686
        %757 = vmatprep.subr.mxu0 0.0
        %758 = vmatpush1.msra.mxu0 %v685
        %759 = vmatprep.subr.mxu0 0.0
        %760 = vmatpush1.msra.mxu0 %v684
        %761 = vmatprep.subr.mxu0 0.0
        %762 = vmatpush1.msra.mxu0 %v683
        %763 = vmatprep.subr.mxu0 0.0
        %764 = vmatpush2.msra.mxu0 0.0
        %765 = vmatprep.subr.mxu0 0.0
        %766 = vmatpush2.msra.mxu0 0.0
        %767 = vmatprep.subr.mxu0 0.0
        %768 = vmatpush2.msra.mxu0 0.0
        %769 = vmatprep.subr.mxu0 0.0
        %770 = vmatpush2.msra.mxu0 0.0
        %771 = vmatprep.subr.mxu0 0.0
        %772 = vmatpush2.msra.mxu0 0.0
        %773 = vmatprep.subr.mxu0 0.0
        %774 = vmatpush2.msra.mxu0 0.0
        %775 = vmatprep.subr.mxu0 0.0
        %776 = vmatpush2.msra.mxu0 0.0
        %777 = vmatprep.subr.mxu0 0.0
        %778 = vmatpush2.msra.mxu0 0.0
        %779 = vmatprep.subr.mxu0 0.0
        %780 = vmatpush2.msra.mxu0 0.0
        %781 = vmatprep.subr.mxu0 0.0
        %782 = vmatpush2.msra.mxu0 0.0
        %783 = vmatprep.subr.mxu0 0.0
        %784 = vmatpush2.msra.mxu0 0.0
        %785 = vmatprep.subr.mxu0 0.0
        %786 = vmatpush2.msra.mxu0 0.0
        %787 = vmatprep.subr.mxu0 0.0
        %788 = vmatpush2.msra.mxu0 0.0
        %789 = vmatprep.subr.mxu0 0.0
        %790 = vmatpush2.msra.mxu0 0.0
        %791 = vmatprep.subr.mxu0 0.0
        %792 = vmatpush2.msra.mxu0 0.0
        %793 = vmatprep.subr.mxu0 0.0
        %794 = vmatpush2.msra.mxu0 0.0
        %795 = vmatprep.mubr.f32.mxu0 0.0
        %796 = vmatmul.mubr.f32.gmra.mxu0 %v715
        %v797 = vpop.f32.mrf.mxu0
        %v798 = vadd.f32 0.0, %v797
        %v799 = vpop.f32.mrf.mxu0
        %800 = vmatprep.mubr.f32.mxu0 0.0
        %801 = vmatmul.mubr.f32.gmra.mxu0 %v716
        %v802 = vpop.f32.mrf.mxu0
        %v803 = vadd.f32 0.0, %v802
        %v804 = vpop.f32.mrf.mxu0
        %805 = vmatprep.mubr.f32.mxu0 0.0
        %806 = vmatmul.mubr.f32.gmra.mxu0 %v717
        %v807 = vpop.f32.mrf.mxu0
        %v808 = vadd.f32 0.0, %v807
        %v809 = vpop.f32.mrf.mxu0
        %810 = vmatprep.mubr.f32.mxu0 0.0
        %811 = vmatmul.mubr.f32.gmra.mxu0 %v718
        %v812 = vpop.f32.mrf.mxu0
        %v813 = vadd.f32 0.0, %v812
        %v814 = vpop.f32.mrf.mxu0
        %815 = vmatprep.mubr.f32.mxu0 0.0
        %816 = vmatmul.mubr.f32.gmra.mxu0 %v719
        %v817 = vpop.f32.mrf.mxu0
        %v818 = vadd.f32 0.0, %v817
        %v819 = vpop.f32.mrf.mxu0
        %820 = vmatprep.mubr.f32.mxu0 0.0
        %821 = vmatmul.mubr.f32.gmra.mxu0 %v720
        %v822 = vpop.f32.mrf.mxu0
        %v823 = vadd.f32 0.0, %v822
        %v824 = vpop.f32.mrf.mxu0
        %825 = vmatprep.mubr.f32.mxu0 0.0
        %826 = vmatmul.mubr.f32.gmra.mxu0 %v721
        %v827 = vpop.f32.mrf.mxu0
        %v828 = vadd.f32 0.0, %v827
        %v829 = vpop.f32.mrf.mxu0
        %830 = vmatprep.mubr.f32.mxu0 0.0
        %831 = vmatmul.mubr.f32.gmra.mxu0 %v722
        %v832 = vpop.f32.mrf.mxu0
        %v833 = vadd.f32 0.0, %v832
        %v834 = vpop.f32.mrf.mxu0
        %835 = vmatprep.mubr.f32.mxu0 0.0
        %836 = vmatmul.mubr.f32.gmra.mxu0 %v723
        %v837 = vpop.f32.mrf.mxu0
        %v838 = vadd.f32 0.0, %v837
        %v839 = vpop.f32.mrf.mxu0
        %840 = vmatprep.mubr.f32.mxu0 0.0
        %841 = vmatmul.mubr.f32.gmra.mxu0 %v724
        %v842 = vpop.f32.mrf.mxu0
        %v843 = vadd.f32 0.0, %v842
        %v844 = vpop.f32.mrf.mxu0
        %845 = vmatprep.mubr.f32.mxu0 0.0
        %846 = vmatmul.mubr.f32.gmra.mxu0 %v725
        %v847 = vpop.f32.mrf.mxu0
        %v848 = vadd.f32 0.0, %v847
        %v849 = vpop.f32.mrf.mxu0
        %850 = vmatprep.mubr.f32.mxu0 0.0
        %851 = vmatmul.mubr.f32.gmra.mxu0 %v726
        %v852 = vpop.f32.mrf.mxu0
        %v853 = vadd.f32 0.0, %v852
        %v854 = vpop.f32.mrf.mxu0
        %855 = vmatprep.mubr.f32.mxu0 0.0
        %856 = vmatmul.mubr.f32.gmra.mxu0 %v727
        %v857 = vpop.f32.mrf.mxu0
        %v858 = vadd.f32 0.0, %v857
        %v859 = vpop.f32.mrf.mxu0
        %860 = vmatprep.mubr.f32.mxu0 0.0
        %861 = vmatmul.mubr.f32.gmra.mxu0 %v728
        %v862 = vpop.f32.mrf.mxu0
        %v863 = vadd.f32 0.0, %v862
        %v864 = vpop.f32.mrf.mxu0
        %865 = vmatprep.mubr.f32.mxu0 0.0
        %866 = vmatmul.mubr.f32.gmra.mxu0 %v729
        %v867 = vpop.f32.mrf.mxu0
        %v868 = vadd.f32 0.0, %v867
        %v869 = vpop.f32.mrf.mxu0
        %870 = vmatprep.mubr.f32.mxu0 0.0
        %871 = vmatmul.mubr.f32.gmra.mxu0 %v730
        %v872 = vpop.f32.mrf.mxu0
        %v873 = vadd.f32 0.0, %v872
        %v874 = vpop.f32.mrf.mxu0
        %875 = vdwg.mxu0
        %876 = vmatprep.subr.mxu0 0.0
        %877 = vmatpush1.msra.mxu0 %v714
        %878 = vmatprep.subr.mxu0 0.0
        %879 = vmatpush1.msra.mxu0 %v713
        %880 = vmatprep.subr.mxu0 0.0
        %881 = vmatpush1.msra.mxu0 %v712
        %882 = vmatprep.subr.mxu0 0.0
        %883 = vmatpush1.msra.mxu0 %v711
        %884 = vmatprep.subr.mxu0 0.0
        %885 = vmatpush1.msra.mxu0 %v710
        %886 = vmatprep.subr.mxu0 0.0
        %887 = vmatpush1.msra.mxu0 %v709
        %888 = vmatprep.subr.mxu0 0.0
        %889 = vmatpush1.msra.mxu0 %v708
        %890 = vmatprep.subr.mxu0 0.0
        %891 = vmatpush1.msra.mxu0 %v707
        %892 = vmatprep.subr.mxu0 0.0
        %893 = vmatpush1.msra.mxu0 %v706
        %894 = vmatprep.subr.mxu0 0.0
        %895 = vmatpush1.msra.mxu0 %v705
        %896 = vmatprep.subr.mxu0 0.0
        %897 = vmatpush1.msra.mxu0 %v704
        %898 = vmatprep.subr.mxu0 0.0
        %899 = vmatpush1.msra.mxu0 %v703
        %900 = vmatprep.subr.mxu0 0.0
        %901 = vmatpush1.msra.mxu0 %v702
        %902 = vmatprep.subr.mxu0 0.0
        %903 = vmatpush1.msra.mxu0 %v701
        %904 = vmatprep.subr.mxu0 0.0
        %905 = vmatpush1.msra.mxu0 %v700
        %906 = vmatprep.subr.mxu0 0.0
        %907 = vmatpush1.msra.mxu0 %v699
        %908 = vmatprep.subr.mxu0 0.0
        %909 = vmatpush2.msra.mxu0 0.0
        %910 = vmatprep.subr.mxu0 0.0
        %911 = vmatpush2.msra.mxu0 0.0
        %912 = vmatprep.subr.mxu0 0.0
        %913 = vmatpush2.msra.mxu0 0.0
        %914 = vmatprep.subr.mxu0 0.0
        %915 = vmatpush2.msra.mxu0 0.0
        %916 = vmatprep.subr.mxu0 0.0
        %917 = vmatpush2.msra.mxu0 0.0
        %918 = vmatprep.subr.mxu0 0.0
        %919 = vmatpush2.msra.mxu0 0.0
        %920 = vmatprep.subr.mxu0 0.0
        %921 = vmatpush2.msra.mxu0 0.0
        %922 = vmatprep.subr.mxu0 0.0
        %923 = vmatpush2.msra.mxu0 0.0
        %924 = vmatprep.subr.mxu0 0.0
        %925 = vmatpush2.msra.mxu0 0.0
        %926 = vmatprep.subr.mxu0 0.0
        %927 = vmatpush2.msra.mxu0 0.0
        %928 = vmatprep.subr.mxu0 0.0
        %929 = vmatpush2.msra.mxu0 0.0
        %930 = vmatprep.subr.mxu0 0.0
        %931 = vmatpush2.msra.mxu0 0.0
        %932 = vmatprep.subr.mxu0 0.0
        %933 = vmatpush2.msra.mxu0 0.0
        %934 = vmatprep.subr.mxu0 0.0
        %935 = vmatpush2.msra.mxu0 0.0
        %936 = vmatprep.subr.mxu0 0.0
        %937 = vmatpush2.msra.mxu0 0.0
        %938 = vmatprep.subr.mxu0 0.0
        %939 = vmatpush2.msra.mxu0 0.0
        %940 = vmatprep.mubr.f32.mxu0 0.0
        %941 = vmatmul.mubr.f32.gmra.mxu0 %v715
        %v942 = vpop.f32.mrf.mxu0
        %v943 = vadd.f32 0.0, %v942
        %v944 = vpop.f32.mrf.mxu0
        %945 = vmatprep.mubr.f32.mxu0 0.0
        %946 = vmatmul.mubr.f32.gmra.mxu0 %v716
        %v947 = vpop.f32.mrf.mxu0
        %v948 = vadd.f32 0.0, %v947
        %v949 = vpop.f32.mrf.mxu0
        %950 = vmatprep.mubr.f32.mxu0 0.0
        %951 = vmatmul.mubr.f32.gmra.mxu0 %v717
        %v952 = vpop.f32.mrf.mxu0
        %v953 = vadd.f32 0.0, %v952
        %v954 = vpop.f32.mrf.mxu0
        %955 = vmatprep.mubr.f32.mxu0 0.0
        %956 = vmatmul.mubr.f32.gmra.mxu0 %v718
        %v957 = vpop.f32.mrf.mxu0
        %v958 = vadd.f32 0.0, %v957
        %v959 = vpop.f32.mrf.mxu0
        %960 = vmatprep.mubr.f32.mxu0 0.0
        %961 = vmatmul.mubr.f32.gmra.mxu0 %v719
        %v962 = vpop.f32.mrf.mxu0
        %v963 = vadd.f32 0.0, %v962
        %v964 = vpop.f32.mrf.mxu0
        %965 = vmatprep.mubr.f32.mxu0 0.0
        %966 = vmatmul.mubr.f32.gmra.mxu0 %v720
        %v967 = vpop.f32.mrf.mxu0
        %v968 = vadd.f32 0.0, %v967
        %v969 = vpop.f32.mrf.mxu0
        %970 = vmatprep.mubr.f32.mxu0 0.0
        %971 = vmatmul.mubr.f32.gmra.mxu0 %v721
        %v972 = vpop.f32.mrf.mxu0
        %v973 = vadd.f32 0.0, %v972
        %v974 = vpop.f32.mrf.mxu0
        %975 = vmatprep.mubr.f32.mxu0 0.0
        %976 = vmatmul.mubr.f32.gmra.mxu0 %v722
        %v977 = vpop.f32.mrf.mxu0
        %v978 = vadd.f32 0.0, %v977
        %v979 = vpop.f32.mrf.mxu0
        %980 = vmatprep.mubr.f32.mxu0 0.0
        %981 = vmatmul.mubr.f32.gmra.mxu0 %v723
        %v982 = vpop.f32.mrf.mxu0
        %v983 = vadd.f32 0.0, %v982
        %v984 = vpop.f32.mrf.mxu0
        %985 = vmatprep.mubr.f32.mxu0 0.0
        %986 = vmatmul.mubr.f32.gmra.mxu0 %v724
        %v987 = vpop.f32.mrf.mxu0
        %v988 = vadd.f32 0.0, %v987
        %v989 = vpop.f32.mrf.mxu0
        %990 = vmatprep.mubr.f32.mxu0 0.0
        %991 = vmatmul.mubr.f32.gmra.mxu0 %v725
        %v992 = vpop.f32.mrf.mxu0
        %v993 = vadd.f32 0.0, %v992
        %v994 = vpop.f32.mrf.mxu0
        %995 = vmatprep.mubr.f32.mxu0 0.0
        %996 = vmatmul.mubr.f32.gmra.mxu0 %v726
        %v997 = vpop.f32.mrf.mxu0
        %v998 = vadd.f32 0.0, %v997
        %v999 = vpop.f32.mrf.mxu0
        %1000 = vmatprep.mubr.f32.mxu0 0.0
        %1001 = vmatmul.mubr.f32.gmra.mxu0 %v727
        %v1002 = vpop.f32.mrf.mxu0
        %v1003 = vadd.f32 0.0, %v1002
        %v1004 = vpop.f32.mrf.mxu0
        %1005 = vmatprep.mubr.f32.mxu0 0.0
        %1006 = vmatmul.mubr.f32.gmra.mxu0 %v728
        %v1007 = vpop.f32.mrf.mxu0
        %v1008 = vadd.f32 0.0, %v1007
        %v1009 = vpop.f32.mrf.mxu0
        %1010 = vmatprep.mubr.f32.mxu0 0.0
        %1011 = vmatmul.mubr.f32.gmra.mxu0 %v729
        %v1012 = vpop.f32.mrf.mxu0
        %v1013 = vadd.f32 0.0, %v1012
        %v1014 = vpop.f32.mrf.mxu0
        %1015 = vmatprep.mubr.f32.mxu0 0.0
        %1016 = vmatmul.mubr.f32.gmra.mxu0 %v730
        %v1017 = vpop.f32.mrf.mxu0
        %v1018 = vadd.f32 0.0, %v1017
        %v1019 = vpop.f32.mrf.mxu0
        %1020 = vdwg.mxu0
        %s1021 = scalar_lea.vmem %s580, 128 [#allocation5]
        %v1022 = vld [vmem:[%s1021] sm:$0xff]
        %v1023 = vld [vmem:[%s1021 + $0x8] sm:$0xff]
        %v1024 = vld [vmem:[%s1021 + $0x10] sm:$0xff]
        %v1025 = vld [vmem:[%s1021 + $0x18] sm:$0xff]
        %v1026 = vld [vmem:[%s1021 + $0x20] sm:$0xff]
        %v1027 = vld [vmem:[%s1021 + $0x28] sm:$0xff]
        %v1028 = vld [vmem:[%s1021 + $0x30] sm:$0xff]
        %v1029 = vld [vmem:[%s1021 + $0x38] sm:$0xff]
        %v1030 = vld [vmem:[%s1021 + $0x40] sm:$0xff]
        %v1031 = vld [vmem:[%s1021 + $0x48] sm:$0xff]
        %v1032 = vld [vmem:[%s1021 + $0x50] sm:$0xff]
        %v1033 = vld [vmem:[%s1021 + $0x58] sm:$0xff]
        %v1034 = vld [vmem:[%s1021 + $0x60] sm:$0xff]
        %v1035 = vld [vmem:[%s1021 + $0x68] sm:$0xff]
        %v1036 = vld [vmem:[%s1021 + $0x70] sm:$0xff]
        %v1037 = vld [vmem:[%s1021 + $0x78] sm:$0xff]
        %1038 = vmatprep.subr.mxu0 0.0
        %1039 = vmatpush1.msra.mxu0 %v698
        %1040 = vmatprep.subr.mxu0 0.0
        %1041 = vmatpush1.msra.mxu0 %v697
        %1042 = vmatprep.subr.mxu0 0.0
        %1043 = vmatpush1.msra.mxu0 %v696
        %1044 = vmatprep.subr.mxu0 0.0
        %1045 = vmatpush1.msra.mxu0 %v695
        %1046 = vmatprep.subr.mxu0 0.0
        %1047 = vmatpush1.msra.mxu0 %v694
        %1048 = vmatprep.subr.mxu0 0.0
        %1049 = vmatpush1.msra.mxu0 %v693
        %1050 = vmatprep.subr.mxu0 0.0
        %1051 = vmatpush1.msra.mxu0 %v692
        %1052 = vmatprep.subr.mxu0 0.0
        %1053 = vmatpush1.msra.mxu0 %v691
        %1054 = vmatprep.subr.mxu0 0.0
        %1055 = vmatpush1.msra.mxu0 %v690
        %1056 = vmatprep.subr.mxu0 0.0
        %1057 = vmatpush1.msra.mxu0 %v689
        %1058 = vmatprep.subr.mxu0 0.0
        %1059 = vmatpush1.msra.mxu0 %v688
        %1060 = vmatprep.subr.mxu0 0.0
        %1061 = vmatpush1.msra.mxu0 %v687
        %1062 = vmatprep.subr.mxu0 0.0
        %1063 = vmatpush1.msra.mxu0 %v686
        %1064 = vmatprep.subr.mxu0 0.0
        %1065 = vmatpush1.msra.mxu0 %v685
        %1066 = vmatprep.subr.mxu0 0.0
        %1067 = vmatpush1.msra.mxu0 %v684
        %1068 = vmatprep.subr.mxu0 0.0
        %1069 = vmatpush1.msra.mxu0 %v683
        %1070 = vmatprep.subr.mxu0 0.0
        %1071 = vmatpush2.msra.mxu0 0.0
        %1072 = vmatprep.subr.mxu0 0.0
        %1073 = vmatpush2.msra.mxu0 0.0
        %1074 = vmatprep.subr.mxu0 0.0
        %1075 = vmatpush2.msra.mxu0 0.0
        %1076 = vmatprep.subr.mxu0 0.0
        %1077 = vmatpush2.msra.mxu0 0.0
        %1078 = vmatprep.subr.mxu0 0.0
        %1079 = vmatpush2.msra.mxu0 0.0
        %1080 = vmatprep.subr.mxu0 0.0
        %1081 = vmatpush2.msra.mxu0 0.0
        %1082 = vmatprep.subr.mxu0 0.0
        %1083 = vmatpush2.msra.mxu0 0.0
        %1084 = vmatprep.subr.mxu0 0.0
        %1085 = vmatpush2.msra.mxu0 0.0
        %1086 = vmatprep.subr.mxu0 0.0
        %1087 = vmatpush2.msra.mxu0 0.0
        %1088 = vmatprep.subr.mxu0 0.0
        %1089 = vmatpush2.msra.mxu0 0.0
        %1090 = vmatprep.subr.mxu0 0.0
        %1091 = vmatpush2.msra.mxu0 0.0
        %1092 = vmatprep.subr.mxu0 0.0
        %1093 = vmatpush2.msra.mxu0 0.0
        %1094 = vmatprep.subr.mxu0 0.0
        %1095 = vmatpush2.msra.mxu0 0.0
        %1096 = vmatprep.subr.mxu0 0.0
        %1097 = vmatpush2.msra.mxu0 0.0
        %1098 = vmatprep.subr.mxu0 0.0
        %1099 = vmatpush2.msra.mxu0 0.0
        %1100 = vmatprep.subr.mxu0 0.0
        %1101 = vmatpush2.msra.mxu0 0.0
        %1102 = vmatprep.mubr.f32.mxu0 0.0
        %1103 = vmatmul.mubr.f32.gmra.mxu0 %v1022
        %v1104 = vpop.f32.mrf.mxu0
        %v1105 = vadd.f32 0.0, %v1104
        %v1106 = vpop.f32.mrf.mxu0
        %1107 = vmatprep.mubr.f32.mxu0 0.0
        %1108 = vmatmul.mubr.f32.gmra.mxu0 %v1023
        %v1109 = vpop.f32.mrf.mxu0
        %v1110 = vadd.f32 0.0, %v1109
        %v1111 = vpop.f32.mrf.mxu0
        %1112 = vmatprep.mubr.f32.mxu0 0.0
        %1113 = vmatmul.mubr.f32.gmra.mxu0 %v1024
        %v1114 = vpop.f32.mrf.mxu0
        %v1115 = vadd.f32 0.0, %v1114
        %v1116 = vpop.f32.mrf.mxu0
        %1117 = vmatprep.mubr.f32.mxu0 0.0
        %1118 = vmatmul.mubr.f32.gmra.mxu0 %v1025
        %v1119 = vpop.f32.mrf.mxu0
        %v1120 = vadd.f32 0.0, %v1119
        %v1121 = vpop.f32.mrf.mxu0
        %1122 = vmatprep.mubr.f32.mxu0 0.0
        %1123 = vmatmul.mubr.f32.gmra.mxu0 %v1026
        %v1124 = vpop.f32.mrf.mxu0
        %v1125 = vadd.f32 0.0, %v1124
        %v1126 = vpop.f32.mrf.mxu0
        %1127 = vmatprep.mubr.f32.mxu0 0.0
        %1128 = vmatmul.mubr.f32.gmra.mxu0 %v1027
        %v1129 = vpop.f32.mrf.mxu0
        %v1130 = vadd.f32 0.0, %v1129
        %v1131 = vpop.f32.mrf.mxu0
        %1132 = vmatprep.mubr.f32.mxu0 0.0
        %1133 = vmatmul.mubr.f32.gmra.mxu0 %v1028
        %v1134 = vpop.f32.mrf.mxu0
        %v1135 = vadd.f32 0.0, %v1134
        %v1136 = vpop.f32.mrf.mxu0
        %1137 = vmatprep.mubr.f32.mxu0 0.0
        %1138 = vmatmul.mubr.f32.gmra.mxu0 %v1029
        %v1139 = vpop.f32.mrf.mxu0
        %v1140 = vadd.f32 0.0, %v1139
        %v1141 = vpop.f32.mrf.mxu0
        %1142 = vmatprep.mubr.f32.mxu0 0.0
        %1143 = vmatmul.mubr.f32.gmra.mxu0 %v1030
        %v1144 = vpop.f32.mrf.mxu0
        %v1145 = vadd.f32 0.0, %v1144
        %v1146 = vpop.f32.mrf.mxu0
        %1147 = vmatprep.mubr.f32.mxu0 0.0
        %1148 = vmatmul.mubr.f32.gmra.mxu0 %v1031
        %v1149 = vpop.f32.mrf.mxu0
        %v1150 = vadd.f32 0.0, %v1149
        %v1151 = vpop.f32.mrf.mxu0
        %1152 = vmatprep.mubr.f32.mxu0 0.0
        %1153 = vmatmul.mubr.f32.gmra.mxu0 %v1032
        %v1154 = vpop.f32.mrf.mxu0
        %v1155 = vadd.f32 0.0, %v1154
        %v1156 = vpop.f32.mrf.mxu0
        %1157 = vmatprep.mubr.f32.mxu0 0.0
        %1158 = vmatmul.mubr.f32.gmra.mxu0 %v1033
        %v1159 = vpop.f32.mrf.mxu0
        %v1160 = vadd.f32 0.0, %v1159
        %v1161 = vpop.f32.mrf.mxu0
        %1162 = vmatprep.mubr.f32.mxu0 0.0
        %1163 = vmatmul.mubr.f32.gmra.mxu0 %v1034
        %v1164 = vpop.f32.mrf.mxu0
        %v1165 = vadd.f32 0.0, %v1164
        %v1166 = vpop.f32.mrf.mxu0
        %1167 = vmatprep.mubr.f32.mxu0 0.0
        %1168 = vmatmul.mubr.f32.gmra.mxu0 %v1035
        %v1169 = vpop.f32.mrf.mxu0
        %v1170 = vadd.f32 0.0, %v1169
        %v1171 = vpop.f32.mrf.mxu0
        %1172 = vmatprep.mubr.f32.mxu0 0.0
        %1173 = vmatmul.mubr.f32.gmra.mxu0 %v1036
        %v1174 = vpop.f32.mrf.mxu0
        %v1175 = vadd.f32 0.0, %v1174
        %v1176 = vpop.f32.mrf.mxu0
        %1177 = vmatprep.mubr.f32.mxu0 0.0
        %1178 = vmatmul.mubr.f32.gmra.mxu0 %v1037
        %v1179 = vpop.f32.mrf.mxu0
        %v1180 = vadd.f32 0.0, %v1179
        %v1181 = vpop.f32.mrf.mxu0
        %1182 = vdwg.mxu0
        %1183 = vmatprep.subr.mxu0 0.0
        %1184 = vmatpush1.msra.mxu0 %v714
        %1185 = vmatprep.subr.mxu0 0.0
        %1186 = vmatpush1.msra.mxu0 %v713
        %1187 = vmatprep.subr.mxu0 0.0
        %1188 = vmatpush1.msra.mxu0 %v712
        %1189 = vmatprep.subr.mxu0 0.0
        %1190 = vmatpush1.msra.mxu0 %v711
        %1191 = vmatprep.subr.mxu0 0.0
        %1192 = vmatpush1.msra.mxu0 %v710
        %1193 = vmatprep.subr.mxu0 0.0
        %1194 = vmatpush1.msra.mxu0 %v709
        %1195 = vmatprep.subr.mxu0 0.0
        %1196 = vmatpush1.msra.mxu0 %v708
        %1197 = vmatprep.subr.mxu0 0.0
        %1198 = vmatpush1.msra.mxu0 %v707
        %1199 = vmatprep.subr.mxu0 0.0
        %1200 = vmatpush1.msra.mxu0 %v706
        %1201 = vmatprep.subr.mxu0 0.0
        %1202 = vmatpush1.msra.mxu0 %v705
        %1203 = vmatprep.subr.mxu0 0.0
        %1204 = vmatpush1.msra.mxu0 %v704
        %1205 = vmatprep.subr.mxu0 0.0
        %1206 = vmatpush1.msra.mxu0 %v703
        %1207 = vmatprep.subr.mxu0 0.0
        %1208 = vmatpush1.msra.mxu0 %v702
        %1209 = vmatprep.subr.mxu0 0.0
        %1210 = vmatpush1.msra.mxu0 %v701
        %1211 = vmatprep.subr.mxu0 0.0
        %1212 = vmatpush1.msra.mxu0 %v700
        %1213 = vmatprep.subr.mxu0 0.0
        %1214 = vmatpush1.msra.mxu0 %v699
        %1215 = vmatprep.subr.mxu0 0.0
        %1216 = vmatpush2.msra.mxu0 0.0
        %1217 = vmatprep.subr.mxu0 0.0
        %1218 = vmatpush2.msra.mxu0 0.0
        %1219 = vmatprep.subr.mxu0 0.0
        %1220 = vmatpush2.msra.mxu0 0.0
        %1221 = vmatprep.subr.mxu0 0.0
        %1222 = vmatpush2.msra.mxu0 0.0
        %1223 = vmatprep.subr.mxu0 0.0
        %1224 = vmatpush2.msra.mxu0 0.0
        %1225 = vmatprep.subr.mxu0 0.0
        %1226 = vmatpush2.msra.mxu0 0.0
        %1227 = vmatprep.subr.mxu0 0.0
        %1228 = vmatpush2.msra.mxu0 0.0
        %1229 = vmatprep.subr.mxu0 0.0
        %1230 = vmatpush2.msra.mxu0 0.0
        %1231 = vmatprep.subr.mxu0 0.0
        %1232 = vmatpush2.msra.mxu0 0.0
        %1233 = vmatprep.subr.mxu0 0.0
        %1234 = vmatpush2.msra.mxu0 0.0
        %1235 = vmatprep.subr.mxu0 0.0
        %1236 = vmatpush2.msra.mxu0 0.0
        %1237 = vmatprep.subr.mxu0 0.0
        %1238 = vmatpush2.msra.mxu0 0.0
        %1239 = vmatprep.subr.mxu0 0.0
        %1240 = vmatpush2.msra.mxu0 0.0
        %1241 = vmatprep.subr.mxu0 0.0
        %1242 = vmatpush2.msra.mxu0 0.0
        %1243 = vmatprep.subr.mxu0 0.0
        %1244 = vmatpush2.msra.mxu0 0.0
        %1245 = vmatprep.subr.mxu0 0.0
        %1246 = vmatpush2.msra.mxu0 0.0
        %1247 = vmatprep.mubr.f32.mxu0 0.0
        %1248 = vmatmul.mubr.f32.gmra.mxu0 %v1022
        %v1249 = vpop.f32.mrf.mxu0
        %v1250 = vadd.f32 0.0, %v1249
        %v1251 = vpop.f32.mrf.mxu0
        %1252 = vmatprep.mubr.f32.mxu0 0.0
        %1253 = vmatmul.mubr.f32.gmra.mxu0 %v1023
        %v1254 = vpop.f32.mrf.mxu0
        %v1255 = vadd.f32 0.0, %v1254
        %v1256 = vpop.f32.mrf.mxu0
        %1257 = vmatprep.mubr.f32.mxu0 0.0
        %1258 = vmatmul.mubr.f32.gmra.mxu0 %v1024
        %v1259 = vpop.f32.mrf.mxu0
        %v1260 = vadd.f32 0.0, %v1259
        %v1261 = vpop.f32.mrf.mxu0
        %1262 = vmatprep.mubr.f32.mxu0 0.0
        %1263 = vmatmul.mubr.f32.gmra.mxu0 %v1025
        %v1264 = vpop.f32.mrf.mxu0
        %v1265 = vadd.f32 0.0, %v1264
        %v1266 = vpop.f32.mrf.mxu0
        %1267 = vmatprep.mubr.f32.mxu0 0.0
        %1268 = vmatmul.mubr.f32.gmra.mxu0 %v1026
        %v1269 = vpop.f32.mrf.mxu0
        %v1270 = vadd.f32 0.0, %v1269
        %v1271 = vpop.f32.mrf.mxu0
        %1272 = vmatprep.mubr.f32.mxu0 0.0
        %1273 = vmatmul.mubr.f32.gmra.mxu0 %v1027
        %v1274 = vpop.f32.mrf.mxu0
        %v1275 = vadd.f32 0.0, %v1274
        %v1276 = vpop.f32.mrf.mxu0
        %1277 = vmatprep.mubr.f32.mxu0 0.0
        %1278 = vmatmul.mubr.f32.gmra.mxu0 %v1028
        %v1279 = vpop.f32.mrf.mxu0
        %v1280 = vadd.f32 0.0, %v1279
        %v1281 = vpop.f32.mrf.mxu0
        %1282 = vmatprep.mubr.f32.mxu0 0.0
        %1283 = vmatmul.mubr.f32.gmra.mxu0 %v1029
        %v1284 = vpop.f32.mrf.mxu0
        %v1285 = vadd.f32 0.0, %v1284
        %v1286 = vpop.f32.mrf.mxu0
        %1287 = vmatprep.mubr.f32.mxu0 0.0
        %1288 = vmatmul.mubr.f32.gmra.mxu0 %v1030
        %v1289 = vpop.f32.mrf.mxu0
        %v1290 = vadd.f32 0.0, %v1289
        %v1291 = vpop.f32.mrf.mxu0
        %1292 = vmatprep.mubr.f32.mxu0 0.0
        %1293 = vmatmul.mubr.f32.gmra.mxu0 %v1031
        %v1294 = vpop.f32.mrf.mxu0
        %v1295 = vadd.f32 0.0, %v1294
        %v1296 = vpop.f32.mrf.mxu0
        %1297 = vmatprep.mubr.f32.mxu0 0.0
        %1298 = vmatmul.mubr.f32.gmra.mxu0 %v1032
        %v1299 = vpop.f32.mrf.mxu0
        %v1300 = vadd.f32 0.0, %v1299
        %v1301 = vpop.f32.mrf.mxu0
        %1302 = vmatprep.mubr.f32.mxu0 0.0
        %1303 = vmatmul.mubr.f32.gmra.mxu0 %v1033
        %v1304 = vpop.f32.mrf.mxu0
        %v1305 = vadd.f32 0.0, %v1304
        %v1306 = vpop.f32.mrf.mxu0
        %1307 = vmatprep.mubr.f32.mxu0 0.0
        %1308 = vmatmul.mubr.f32.gmra.mxu0 %v1034
        %v1309 = vpop.f32.mrf.mxu0
        %v1310 = vadd.f32 0.0, %v1309
        %v1311 = vpop.f32.mrf.mxu0
        %1312 = vmatprep.mubr.f32.mxu0 0.0
        %1313 = vmatmul.mubr.f32.gmra.mxu0 %v1035
        %v1314 = vpop.f32.mrf.mxu0
        %v1315 = vadd.f32 0.0, %v1314
        %v1316 = vpop.f32.mrf.mxu0
        %1317 = vmatprep.mubr.f32.mxu0 0.0
        %1318 = vmatmul.mubr.f32.gmra.mxu0 %v1036
        %v1319 = vpop.f32.mrf.mxu0
        %v1320 = vadd.f32 0.0, %v1319
        %v1321 = vpop.f32.mrf.mxu0
        %1322 = vmatprep.mubr.f32.mxu0 0.0
        %1323 = vmatmul.mubr.f32.gmra.mxu0 %v1037
        %v1324 = vpop.f32.mrf.mxu0
        %v1325 = vadd.f32 0.0, %v1324
        %v1326 = vpop.f32.mrf.mxu0
        %1327 = vdwg.mxu0
        %s1328 = scalar_lea.vmem %s580, 256 [#allocation5]
        %v1329 = vld [vmem:[%s1328] sm:$0xff]
        %v1330 = vld [vmem:[%s1328 + $0x8] sm:$0xff]
        %v1331 = vld [vmem:[%s1328 + $0x10] sm:$0xff]
        %v1332 = vld [vmem:[%s1328 + $0x18] sm:$0xff]
        %v1333 = vld [vmem:[%s1328 + $0x20] sm:$0xff]
        %v1334 = vld [vmem:[%s1328 + $0x28] sm:$0xff]
        %v1335 = vld [vmem:[%s1328 + $0x30] sm:$0xff]
        %v1336 = vld [vmem:[%s1328 + $0x38] sm:$0xff]
        %v1337 = vld [vmem:[%s1328 + $0x40] sm:$0xff]
        %v1338 = vld [vmem:[%s1328 + $0x48] sm:$0xff]
        %v1339 = vld [vmem:[%s1328 + $0x50] sm:$0xff]
        %v1340 = vld [vmem:[%s1328 + $0x58] sm:$0xff]
        %v1341 = vld [vmem:[%s1328 + $0x60] sm:$0xff]
        %v1342 = vld [vmem:[%s1328 + $0x68] sm:$0xff]
        %v1343 = vld [vmem:[%s1328 + $0x70] sm:$0xff]
        %v1344 = vld [vmem:[%s1328 + $0x78] sm:$0xff]
        %1345 = vmatprep.subr.mxu0 0.0
        %1346 = vmatpush1.msra.mxu0 %v698
        %1347 = vmatprep.subr.mxu0 0.0
        %1348 = vmatpush1.msra.mxu0 %v697
        %1349 = vmatprep.subr.mxu0 0.0
        %1350 = vmatpush1.msra.mxu0 %v696
        %1351 = vmatprep.subr.mxu0 0.0
        %1352 = vmatpush1.msra.mxu0 %v695
        %1353 = vmatprep.subr.mxu0 0.0
        %1354 = vmatpush1.msra.mxu0 %v694
        %1355 = vmatprep.subr.mxu0 0.0
        %1356 = vmatpush1.msra.mxu0 %v693
        %1357 = vmatprep.subr.mxu0 0.0
        %1358 = vmatpush1.msra.mxu0 %v692
        %1359 = vmatprep.subr.mxu0 0.0
        %1360 = vmatpush1.msra.mxu0 %v691
        %1361 = vmatprep.subr.mxu0 0.0
        %1362 = vmatpush1.msra.mxu0 %v690
        %1363 = vmatprep.subr.mxu0 0.0
        %1364 = vmatpush1.msra.mxu0 %v689
        %1365 = vmatprep.subr.mxu0 0.0
        %1366 = vmatpush1.msra.mxu0 %v688
        %1367 = vmatprep.subr.mxu0 0.0
        %1368 = vmatpush1.msra.mxu0 %v687
        %1369 = vmatprep.subr.mxu0 0.0
        %1370 = vmatpush1.msra.mxu0 %v686
        %1371 = vmatprep.subr.mxu0 0.0
        %1372 = vmatpush1.msra.mxu0 %v685
        %1373 = vmatprep.subr.mxu0 0.0
        %1374 = vmatpush1.msra.mxu0 %v684
        %1375 = vmatprep.subr.mxu0 0.0
        %1376 = vmatpush1.msra.mxu0 %v683
        %1377 = vmatprep.subr.mxu0 0.0
        %1378 = vmatpush2.msra.mxu0 0.0
        %1379 = vmatprep.subr.mxu0 0.0
        %1380 = vmatpush2.msra.mxu0 0.0
        %1381 = vmatprep.subr.mxu0 0.0
        %1382 = vmatpush2.msra.mxu0 0.0
        %1383 = vmatprep.subr.mxu0 0.0
        %1384 = vmatpush2.msra.mxu0 0.0
        %1385 = vmatprep.subr.mxu0 0.0
        %1386 = vmatpush2.msra.mxu0 0.0
        %1387 = vmatprep.subr.mxu0 0.0
        %1388 = vmatpush2.msra.mxu0 0.0
        %1389 = vmatprep.subr.mxu0 0.0
        %1390 = vmatpush2.msra.mxu0 0.0
        %1391 = vmatprep.subr.mxu0 0.0
        %1392 = vmatpush2.msra.mxu0 0.0
        %1393 = vmatprep.subr.mxu0 0.0
        %1394 = vmatpush2.msra.mxu0 0.0
        %1395 = vmatprep.subr.mxu0 0.0
        %1396 = vmatpush2.msra.mxu0 0.0
        %1397 = vmatprep.subr.mxu0 0.0
        %1398 = vmatpush2.msra.mxu0 0.0
        %1399 = vmatprep.subr.mxu0 0.0
        %1400 = vmatpush2.msra.mxu0 0.0
        %1401 = vmatprep.subr.mxu0 0.0
        %1402 = vmatpush2.msra.mxu0 0.0
        %1403 = vmatprep.subr.mxu0 0.0
        %1404 = vmatpush2.msra.mxu0 0.0
        %1405 = vmatprep.subr.mxu0 0.0
        %1406 = vmatpush2.msra.mxu0 0.0
        %1407 = vmatprep.subr.mxu0 0.0
        %1408 = vmatpush2.msra.mxu0 0.0
        %1409 = vmatprep.mubr.f32.mxu0 0.0
        %1410 = vmatmul.mubr.f32.gmra.mxu0 %v1329
        %v1411 = vpop.f32.mrf.mxu0
        %v1412 = vadd.f32 0.0, %v1411
        %v1413 = vpop.f32.mrf.mxu0
        %1414 = vmatprep.mubr.f32.mxu0 0.0
        %1415 = vmatmul.mubr.f32.gmra.mxu0 %v1330
        %v1416 = vpop.f32.mrf.mxu0
        %v1417 = vadd.f32 0.0, %v1416
        %v1418 = vpop.f32.mrf.mxu0
        %1419 = vmatprep.mubr.f32.mxu0 0.0
        %1420 = vmatmul.mubr.f32.gmra.mxu0 %v1331
        %v1421 = vpop.f32.mrf.mxu0
        %v1422 = vadd.f32 0.0, %v1421
        %v1423 = vpop.f32.mrf.mxu0
        %1424 = vmatprep.mubr.f32.mxu0 0.0
        %1425 = vmatmul.mubr.f32.gmra.mxu0 %v1332
        %v1426 = vpop.f32.mrf.mxu0
        %v1427 = vadd.f32 0.0, %v1426
        %v1428 = vpop.f32.mrf.mxu0
        %1429 = vmatprep.mubr.f32.mxu0 0.0
        %1430 = vmatmul.mubr.f32.gmra.mxu0 %v1333
        %v1431 = vpop.f32.mrf.mxu0
        %v1432 = vadd.f32 0.0, %v1431
        %v1433 = vpop.f32.mrf.mxu0
        %1434 = vmatprep.mubr.f32.mxu0 0.0
        %1435 = vmatmul.mubr.f32.gmra.mxu0 %v1334
        %v1436 = vpop.f32.mrf.mxu0
        %v1437 = vadd.f32 0.0, %v1436
        %v1438 = vpop.f32.mrf.mxu0
        %1439 = vmatprep.mubr.f32.mxu0 0.0
        %1440 = vmatmul.mubr.f32.gmra.mxu0 %v1335
        %v1441 = vpop.f32.mrf.mxu0
        %v1442 = vadd.f32 0.0, %v1441
        %v1443 = vpop.f32.mrf.mxu0
        %1444 = vmatprep.mubr.f32.mxu0 0.0
        %1445 = vmatmul.mubr.f32.gmra.mxu0 %v1336
        %v1446 = vpop.f32.mrf.mxu0
        %v1447 = vadd.f32 0.0, %v1446
        %v1448 = vpop.f32.mrf.mxu0
        %1449 = vmatprep.mubr.f32.mxu0 0.0
        %1450 = vmatmul.mubr.f32.gmra.mxu0 %v1337
        %v1451 = vpop.f32.mrf.mxu0
        %v1452 = vadd.f32 0.0, %v1451
        %v1453 = vpop.f32.mrf.mxu0
        %1454 = vmatprep.mubr.f32.mxu0 0.0
        %1455 = vmatmul.mubr.f32.gmra.mxu0 %v1338
        %v1456 = vpop.f32.mrf.mxu0
        %v1457 = vadd.f32 0.0, %v1456
        %v1458 = vpop.f32.mrf.mxu0
        %1459 = vmatprep.mubr.f32.mxu0 0.0
        %1460 = vmatmul.mubr.f32.gmra.mxu0 %v1339
        %v1461 = vpop.f32.mrf.mxu0
        %v1462 = vadd.f32 0.0, %v1461
        %v1463 = vpop.f32.mrf.mxu0
        %1464 = vmatprep.mubr.f32.mxu0 0.0
        %1465 = vmatmul.mubr.f32.gmra.mxu0 %v1340
        %v1466 = vpop.f32.mrf.mxu0
        %v1467 = vadd.f32 0.0, %v1466
        %v1468 = vpop.f32.mrf.mxu0
        %1469 = vmatprep.mubr.f32.mxu0 0.0
        %1470 = vmatmul.mubr.f32.gmra.mxu0 %v1341
        %v1471 = vpop.f32.mrf.mxu0
        %v1472 = vadd.f32 0.0, %v1471
        %v1473 = vpop.f32.mrf.mxu0
        %1474 = vmatprep.mubr.f32.mxu0 0.0
        %1475 = vmatmul.mubr.f32.gmra.mxu0 %v1342
        %v1476 = vpop.f32.mrf.mxu0
        %v1477 = vadd.f32 0.0, %v1476
        %v1478 = vpop.f32.mrf.mxu0
        %1479 = vmatprep.mubr.f32.mxu0 0.0
        %1480 = vmatmul.mubr.f32.gmra.mxu0 %v1343
        %v1481 = vpop.f32.mrf.mxu0
        %v1482 = vadd.f32 0.0, %v1481
        %v1483 = vpop.f32.mrf.mxu0
        %1484 = vmatprep.mubr.f32.mxu0 0.0
        %1485 = vmatmul.mubr.f32.gmra.mxu0 %v1344
        %v1486 = vpop.f32.mrf.mxu0
        %v1487 = vadd.f32 0.0, %v1486
        %v1488 = vpop.f32.mrf.mxu0
        %1489 = vdwg.mxu0
        %1490 = vmatprep.subr.mxu0 0.0
        %1491 = vmatpush1.msra.mxu0 %v714
        %1492 = vmatprep.subr.mxu0 0.0
        %1493 = vmatpush1.msra.mxu0 %v713
        %1494 = vmatprep.subr.mxu0 0.0
        %1495 = vmatpush1.msra.mxu0 %v712
        %1496 = vmatprep.subr.mxu0 0.0
        %1497 = vmatpush1.msra.mxu0 %v711
        %1498 = vmatprep.subr.mxu0 0.0
        %1499 = vmatpush1.msra.mxu0 %v710
        %1500 = vmatprep.subr.mxu0 0.0
        %1501 = vmatpush1.msra.mxu0 %v709
        %1502 = vmatprep.subr.mxu0 0.0
        %1503 = vmatpush1.msra.mxu0 %v708
        %1504 = vmatprep.subr.mxu0 0.0
        %1505 = vmatpush1.msra.mxu0 %v707
        %1506 = vmatprep.subr.mxu0 0.0
        %1507 = vmatpush1.msra.mxu0 %v706
        %1508 = vmatprep.subr.mxu0 0.0
        %1509 = vmatpush1.msra.mxu0 %v705
        %1510 = vmatprep.subr.mxu0 0.0
        %1511 = vmatpush1.msra.mxu0 %v704
        %1512 = vmatprep.subr.mxu0 0.0
        %1513 = vmatpush1.msra.mxu0 %v703
        %1514 = vmatprep.subr.mxu0 0.0
        %1515 = vmatpush1.msra.mxu0 %v702
        %1516 = vmatprep.subr.mxu0 0.0
        %1517 = vmatpush1.msra.mxu0 %v701
        %1518 = vmatprep.subr.mxu0 0.0
        %1519 = vmatpush1.msra.mxu0 %v700
        %1520 = vmatprep.subr.mxu0 0.0
        %1521 = vmatpush1.msra.mxu0 %v699
        %1522 = vmatprep.subr.mxu0 0.0
        %1523 = vmatpush2.msra.mxu0 0.0
        %1524 = vmatprep.subr.mxu0 0.0
        %1525 = vmatpush2.msra.mxu0 0.0
        %1526 = vmatprep.subr.mxu0 0.0
        %1527 = vmatpush2.msra.mxu0 0.0
        %1528 = vmatprep.subr.mxu0 0.0
        %1529 = vmatpush2.msra.mxu0 0.0
        %1530 = vmatprep.subr.mxu0 0.0
        %1531 = vmatpush2.msra.mxu0 0.0
        %1532 = vmatprep.subr.mxu0 0.0
        %1533 = vmatpush2.msra.mxu0 0.0
        %1534 = vmatprep.subr.mxu0 0.0
        %1535 = vmatpush2.msra.mxu0 0.0
        %1536 = vmatprep.subr.mxu0 0.0
        %1537 = vmatpush2.msra.mxu0 0.0
        %1538 = vmatprep.subr.mxu0 0.0
        %1539 = vmatpush2.msra.mxu0 0.0
        %1540 = vmatprep.subr.mxu0 0.0
        %1541 = vmatpush2.msra.mxu0 0.0
        %1542 = vmatprep.subr.mxu0 0.0
        %1543 = vmatpush2.msra.mxu0 0.0
        %1544 = vmatprep.subr.mxu0 0.0
        %1545 = vmatpush2.msra.mxu0 0.0
        %1546 = vmatprep.subr.mxu0 0.0
        %1547 = vmatpush2.msra.mxu0 0.0
        %1548 = vmatprep.subr.mxu0 0.0
        %1549 = vmatpush2.msra.mxu0 0.0
        %1550 = vmatprep.subr.mxu0 0.0
        %1551 = vmatpush2.msra.mxu0 0.0
        %1552 = vmatprep.subr.mxu0 0.0
        %1553 = vmatpush2.msra.mxu0 0.0
        %1554 = vmatprep.mubr.f32.mxu0 0.0
        %1555 = vmatmul.mubr.f32.gmra.mxu0 %v1329
        %v1556 = vpop.f32.mrf.mxu0
        %v1557 = vadd.f32 0.0, %v1556
        %v1558 = vpop.f32.mrf.mxu0
        %1559 = vmatprep.mubr.f32.mxu0 0.0
        %1560 = vmatmul.mubr.f32.gmra.mxu0 %v1330
        %v1561 = vpop.f32.mrf.mxu0
        %v1562 = vadd.f32 0.0, %v1561
        %v1563 = vpop.f32.mrf.mxu0
        %1564 = vmatprep.mubr.f32.mxu0 0.0
        %1565 = vmatmul.mubr.f32.gmra.mxu0 %v1331
        %v1566 = vpop.f32.mrf.mxu0
        %v1567 = vadd.f32 0.0, %v1566
        %v1568 = vpop.f32.mrf.mxu0
        %1569 = vmatprep.mubr.f32.mxu0 0.0
        %1570 = vmatmul.mubr.f32.gmra.mxu0 %v1332
        %v1571 = vpop.f32.mrf.mxu0
        %v1572 = vadd.f32 0.0, %v1571
        %v1573 = vpop.f32.mrf.mxu0
        %1574 = vmatprep.mubr.f32.mxu0 0.0
        %1575 = vmatmul.mubr.f32.gmra.mxu0 %v1333
        %v1576 = vpop.f32.mrf.mxu0
        %v1577 = vadd.f32 0.0, %v1576
        %v1578 = vpop.f32.mrf.mxu0
        %1579 = vmatprep.mubr.f32.mxu0 0.0
        %1580 = vmatmul.mubr.f32.gmra.mxu0 %v1334
        %v1581 = vpop.f32.mrf.mxu0
        %v1582 = vadd.f32 0.0, %v1581
        %v1583 = vpop.f32.mrf.mxu0
        %1584 = vmatprep.mubr.f32.mxu0 0.0
        %1585 = vmatmul.mubr.f32.gmra.mxu0 %v1335
        %v1586 = vpop.f32.mrf.mxu0
        %v1587 = vadd.f32 0.0, %v1586
        %v1588 = vpop.f32.mrf.mxu0
        %1589 = vmatprep.mubr.f32.mxu0 0.0
        %1590 = vmatmul.mubr.f32.gmra.mxu0 %v1336
        %v1591 = vpop.f32.mrf.mxu0
        %v1592 = vadd.f32 0.0, %v1591
        %v1593 = vpop.f32.mrf.mxu0
        %1594 = vmatprep.mubr.f32.mxu0 0.0
        %1595 = vmatmul.mubr.f32.gmra.mxu0 %v1337
        %v1596 = vpop.f32.mrf.mxu0
        %v1597 = vadd.f32 0.0, %v1596
        %v1598 = vpop.f32.mrf.mxu0
        %1599 = vmatprep.mubr.f32.mxu0 0.0
        %1600 = vmatmul.mubr.f32.gmra.mxu0 %v1338
        %v1601 = vpop.f32.mrf.mxu0
        %v1602 = vadd.f32 0.0, %v1601
        %v1603 = vpop.f32.mrf.mxu0
        %1604 = vmatprep.mubr.f32.mxu0 0.0
        %1605 = vmatmul.mubr.f32.gmra.mxu0 %v1339
        %v1606 = vpop.f32.mrf.mxu0
        %v1607 = vadd.f32 0.0, %v1606
        %v1608 = vpop.f32.mrf.mxu0
        %1609 = vmatprep.mubr.f32.mxu0 0.0
        %1610 = vmatmul.mubr.f32.gmra.mxu0 %v1340
        %v1611 = vpop.f32.mrf.mxu0
        %v1612 = vadd.f32 0.0, %v1611
        %v1613 = vpop.f32.mrf.mxu0
        %1614 = vmatprep.mubr.f32.mxu0 0.0
        %1615 = vmatmul.mubr.f32.gmra.mxu0 %v1341
        %v1616 = vpop.f32.mrf.mxu0
        %v1617 = vadd.f32 0.0, %v1616
        %v1618 = vpop.f32.mrf.mxu0
        %1619 = vmatprep.mubr.f32.mxu0 0.0
        %1620 = vmatmul.mubr.f32.gmra.mxu0 %v1342
        %v1621 = vpop.f32.mrf.mxu0
        %v1622 = vadd.f32 0.0, %v1621
        %v1623 = vpop.f32.mrf.mxu0
        %1624 = vmatprep.mubr.f32.mxu0 0.0
        %1625 = vmatmul.mubr.f32.gmra.mxu0 %v1343
        %v1626 = vpop.f32.mrf.mxu0
        %v1627 = vadd.f32 0.0, %v1626
        %v1628 = vpop.f32.mrf.mxu0
        %1629 = vmatprep.mubr.f32.mxu0 0.0
        %1630 = vmatmul.mubr.f32.gmra.mxu0 %v1344
        %v1631 = vpop.f32.mrf.mxu0
        %v1632 = vadd.f32 0.0, %v1631
        %v1633 = vpop.f32.mrf.mxu0
        %1634 = vdwg.mxu0
        %v1635 = vmul.f32 %v798, %v798
        %v1636 = vmul.f32 %v803, %v803
        %v1637 = vmul.f32 %v808, %v808
        %v1638 = vmul.f32 %v813, %v813
        %v1639 = vmul.f32 %v818, %v818
        %v1640 = vmul.f32 %v823, %v823
        %v1641 = vmul.f32 %v828, %v828
        %v1642 = vmul.f32 %v833, %v833
        %v1643 = vmul.f32 %v838, %v838
        %v1644 = vmul.f32 %v843, %v843
        %v1645 = vmul.f32 %v848, %v848
        %v1646 = vmul.f32 %v853, %v853
        %v1647 = vmul.f32 %v858, %v858
        %v1648 = vmul.f32 %v863, %v863
        %v1649 = vmul.f32 %v868, %v868
        %v1650 = vmul.f32 %v873, %v873
        %v1651 = vmul.f32 %v1105, %v1105
        %v1652 = vmul.f32 %v1110, %v1110
        %v1653 = vmul.f32 %v1115, %v1115
        %v1654 = vmul.f32 %v1120, %v1120
        %v1655 = vmul.f32 %v1125, %v1125
        %v1656 = vmul.f32 %v1130, %v1130
        %v1657 = vmul.f32 %v1135, %v1135
        %v1658 = vmul.f32 %v1140, %v1140
        %v1659 = vmul.f32 %v1145, %v1145
        %v1660 = vmul.f32 %v1150, %v1150
        %v1661 = vmul.f32 %v1155, %v1155
        %v1662 = vmul.f32 %v1160, %v1160
        %v1663 = vmul.f32 %v1165, %v1165
        %v1664 = vmul.f32 %v1170, %v1170
        %v1665 = vmul.f32 %v1175, %v1175
        %v1666 = vmul.f32 %v1180, %v1180
        %v1667 = vadd.f32 %v1635, %v1651
        %v1668 = vadd.f32 %v1636, %v1652
        %v1669 = vadd.f32 %v1637, %v1653
        %v1670 = vadd.f32 %v1638, %v1654
        %v1671 = vadd.f32 %v1639, %v1655
        %v1672 = vadd.f32 %v1640, %v1656
        %v1673 = vadd.f32 %v1641, %v1657
        %v1674 = vadd.f32 %v1642, %v1658
        %v1675 = vadd.f32 %v1643, %v1659
        %v1676 = vadd.f32 %v1644, %v1660
        %v1677 = vadd.f32 %v1645, %v1661
        %v1678 = vadd.f32 %v1646, %v1662
        %v1679 = vadd.f32 %v1647, %v1663
        %v1680 = vadd.f32 %v1648, %v1664
        %v1681 = vadd.f32 %v1649, %v1665
        %v1682 = vadd.f32 %v1650, %v1666
        %v1683 = vmul.f32 %v1412, %v1412
        %v1684 = vmul.f32 %v1417, %v1417
        %v1685 = vmul.f32 %v1422, %v1422
        %v1686 = vmul.f32 %v1427, %v1427
        %v1687 = vmul.f32 %v1432, %v1432
        %v1688 = vmul.f32 %v1437, %v1437
        %v1689 = vmul.f32 %v1442, %v1442
        %v1690 = vmul.f32 %v1447, %v1447
        %v1691 = vmul.f32 %v1452, %v1452
        %v1692 = vmul.f32 %v1457, %v1457
        %v1693 = vmul.f32 %v1462, %v1462
        %v1694 = vmul.f32 %v1467, %v1467
        %v1695 = vmul.f32 %v1472, %v1472
        %v1696 = vmul.f32 %v1477, %v1477
        %v1697 = vmul.f32 %v1482, %v1482
        %v1698 = vmul.f32 %v1487, %v1487
        %v1699 = vadd.f32 %v1667, %v1683
        %v1700 = vadd.f32 %v1668, %v1684
        %v1701 = vadd.f32 %v1669, %v1685
        %v1702 = vadd.f32 %v1670, %v1686
        %v1703 = vadd.f32 %v1671, %v1687
        %v1704 = vadd.f32 %v1672, %v1688
        %v1705 = vadd.f32 %v1673, %v1689
        %v1706 = vadd.f32 %v1674, %v1690
        %v1707 = vadd.f32 %v1675, %v1691
        %v1708 = vadd.f32 %v1676, %v1692
        %v1709 = vadd.f32 %v1677, %v1693
        %v1710 = vadd.f32 %v1678, %v1694
        %v1711 = vadd.f32 %v1679, %v1695
        %v1712 = vadd.f32 %v1680, %v1696
        %v1713 = vadd.f32 %v1681, %v1697
        %v1714 = vadd.f32 %v1682, %v1698
        %v1715 = vadd.f32 %v1699, 1e-08
        %v1716 = vadd.f32 %v1700, 1e-08
        %v1717 = vadd.f32 %v1701, 1e-08
        %v1718 = vadd.f32 %v1702, 1e-08
        %v1719 = vadd.f32 %v1703, 1e-08
        %v1720 = vadd.f32 %v1704, 1e-08
        %v1721 = vadd.f32 %v1705, 1e-08
        %v1722 = vadd.f32 %v1706, 1e-08
        %v1723 = vadd.f32 %v1707, 1e-08
        %v1724 = vadd.f32 %v1708, 1e-08
        %v1725 = vadd.f32 %v1709, 1e-08
        %v1726 = vadd.f32 %v1710, 1e-08
        %v1727 = vadd.f32 %v1711, 1e-08
        %v1728 = vadd.f32 %v1712, 1e-08
        %v1729 = vadd.f32 %v1713, 1e-08
        %v1730 = vadd.f32 %v1714, 1e-08
        %v1731 = vrsqrt.pop %v1715
        %v1732 = vmul.f32 %v1715, %v1731
        %vm1733 = vcmp.eq.f32.partialorder %v1715, inf
        %v1734 = vsel %vm1733, %v1715, %v1732
        %vm1735 = vcmp.eq.f32.partialorder %v1715, 0.0
        %v1736 = vand.u32 %v1715, 2147483648
        %v1737 = vsel %vm1735, %v1736, %v1734
        %v1738 = vrsqrt.pop %v1716
        %v1739 = vmul.f32 %v1716, %v1738
        %vm1740 = vcmp.eq.f32.partialorder %v1716, inf
        %v1741 = vsel %vm1740, %v1716, %v1739
        %vm1742 = vcmp.eq.f32.partialorder %v1716, 0.0
        %v1743 = vand.u32 %v1716, 2147483648
        %v1744 = vsel %vm1742, %v1743, %v1741
        %v1745 = vrsqrt.pop %v1717
        %v1746 = vmul.f32 %v1717, %v1745
        %vm1747 = vcmp.eq.f32.partialorder %v1717, inf
        %v1748 = vsel %vm1747, %v1717, %v1746
        %vm1749 = vcmp.eq.f32.partialorder %v1717, 0.0
        %v1750 = vand.u32 %v1717, 2147483648
        %v1751 = vsel %vm1749, %v1750, %v1748
        %v1752 = vrsqrt.pop %v1718
        %v1753 = vmul.f32 %v1718, %v1752
        %vm1754 = vcmp.eq.f32.partialorder %v1718, inf
        %v1755 = vsel %vm1754, %v1718, %v1753
        %vm1756 = vcmp.eq.f32.partialorder %v1718, 0.0
        %v1757 = vand.u32 %v1718, 2147483648
        %v1758 = vsel %vm1756, %v1757, %v1755
        %v1759 = vrsqrt.pop %v1719
        %v1760 = vmul.f32 %v1719, %v1759
        %vm1761 = vcmp.eq.f32.partialorder %v1719, inf
        %v1762 = vsel %vm1761, %v1719, %v1760
        %vm1763 = vcmp.eq.f32.partialorder %v1719, 0.0
        %v1764 = vand.u32 %v1719, 2147483648
        %v1765 = vsel %vm1763, %v1764, %v1762
        %v1766 = vrsqrt.pop %v1720
        %v1767 = vmul.f32 %v1720, %v1766
        %vm1768 = vcmp.eq.f32.partialorder %v1720, inf
        %v1769 = vsel %vm1768, %v1720, %v1767
        %vm1770 = vcmp.eq.f32.partialorder %v1720, 0.0
        %v1771 = vand.u32 %v1720, 2147483648
        %v1772 = vsel %vm1770, %v1771, %v1769
        %v1773 = vrsqrt.pop %v1721
        %v1774 = vmul.f32 %v1721, %v1773
        %vm1775 = vcmp.eq.f32.partialorder %v1721, inf
        %v1776 = vsel %vm1775, %v1721, %v1774
        %vm1777 = vcmp.eq.f32.partialorder %v1721, 0.0
        %v1778 = vand.u32 %v1721, 2147483648
        %v1779 = vsel %vm1777, %v1778, %v1776
        %v1780 = vrsqrt.pop %v1722
        %v1781 = vmul.f32 %v1722, %v1780
        %vm1782 = vcmp.eq.f32.partialorder %v1722, inf
        %v1783 = vsel %vm1782, %v1722, %v1781
        %vm1784 = vcmp.eq.f32.partialorder %v1722, 0.0
        %v1785 = vand.u32 %v1722, 2147483648
        %v1786 = vsel %vm1784, %v1785, %v1783
        %v1787 = vrsqrt.pop %v1723
        %v1788 = vmul.f32 %v1723, %v1787
        %vm1789 = vcmp.eq.f32.partialorder %v1723, inf
        %v1790 = vsel %vm1789, %v1723, %v1788
        %vm1791 = vcmp.eq.f32.partialorder %v1723, 0.0
        %v1792 = vand.u32 %v1723, 2147483648
        %v1793 = vsel %vm1791, %v1792, %v1790
        %v1794 = vrsqrt.pop %v1724
        %v1795 = vmul.f32 %v1724, %v1794
        %vm1796 = vcmp.eq.f32.partialorder %v1724, inf
        %v1797 = vsel %vm1796, %v1724, %v1795
        %vm1798 = vcmp.eq.f32.partialorder %v1724, 0.0
        %v1799 = vand.u32 %v1724, 2147483648
        %v1800 = vsel %vm1798, %v1799, %v1797
        %v1801 = vrsqrt.pop %v1725
        %v1802 = vmul.f32 %v1725, %v1801
        %vm1803 = vcmp.eq.f32.partialorder %v1725, inf
        %v1804 = vsel %vm1803, %v1725, %v1802
        %vm1805 = vcmp.eq.f32.partialorder %v1725, 0.0
        %v1806 = vand.u32 %v1725, 2147483648
        %v1807 = vsel %vm1805, %v1806, %v1804
        %v1808 = vrsqrt.pop %v1726
        %v1809 = vmul.f32 %v1726, %v1808
        %vm1810 = vcmp.eq.f32.partialorder %v1726, inf
        %v1811 = vsel %vm1810, %v1726, %v1809
        %vm1812 = vcmp.eq.f32.partialorder %v1726, 0.0
        %v1813 = vand.u32 %v1726, 2147483648
        %v1814 = vsel %vm1812, %v1813, %v1811
        %v1815 = vrsqrt.pop %v1727
        %v1816 = vmul.f32 %v1727, %v1815
        %vm1817 = vcmp.eq.f32.partialorder %v1727, inf
        %v1818 = vsel %vm1817, %v1727, %v1816
        %vm1819 = vcmp.eq.f32.partialorder %v1727, 0.0
        %v1820 = vand.u32 %v1727, 2147483648
        %v1821 = vsel %vm1819, %v1820, %v1818
        %v1822 = vrsqrt.pop %v1728
        %v1823 = vmul.f32 %v1728, %v1822
        %vm1824 = vcmp.eq.f32.partialorder %v1728, inf
        %v1825 = vsel %vm1824, %v1728, %v1823
        %vm1826 = vcmp.eq.f32.partialorder %v1728, 0.0
        %v1827 = vand.u32 %v1728, 2147483648
        %v1828 = vsel %vm1826, %v1827, %v1825
        %v1829 = vrsqrt.pop %v1729
        %v1830 = vmul.f32 %v1729, %v1829
        %vm1831 = vcmp.eq.f32.partialorder %v1729, inf
        %v1832 = vsel %vm1831, %v1729, %v1830
        %vm1833 = vcmp.eq.f32.partialorder %v1729, 0.0
        %v1834 = vand.u32 %v1729, 2147483648
        %v1835 = vsel %vm1833, %v1834, %v1832
        %v1836 = vrsqrt.pop %v1730
        %v1837 = vmul.f32 %v1730, %v1836
        %vm1838 = vcmp.eq.f32.partialorder %v1730, inf
        %v1839 = vsel %vm1838, %v1730, %v1837
        %vm1840 = vcmp.eq.f32.partialorder %v1730, 0.0
        %v1841 = vand.u32 %v1730, 2147483648
        %v1842 = vsel %vm1840, %v1841, %v1839
        %v1843 = vld [vmem:[#allocation10] sm:$0xff]
        %v1844 = vld [vmem:[#allocation10 + $0x8] sm:$0xff]
        %v1845 = vld [vmem:[#allocation10 + $0x10] sm:$0xff]
        %v1846 = vld [vmem:[#allocation10 + $0x18] sm:$0xff]
        %v1847 = vld [vmem:[#allocation10 + $0x20] sm:$0xff]
        %v1848 = vld [vmem:[#allocation10 + $0x28] sm:$0xff]
        %v1849 = vld [vmem:[#allocation10 + $0x30] sm:$0xff]
        %v1850 = vld [vmem:[#allocation10 + $0x38] sm:$0xff]
        %v1851 = vld [vmem:[#allocation10 + $0x40] sm:$0xff]
        %v1852 = vld [vmem:[#allocation10 + $0x48] sm:$0xff]
        %v1853 = vld [vmem:[#allocation10 + $0x50] sm:$0xff]
        %v1854 = vld [vmem:[#allocation10 + $0x58] sm:$0xff]
        %v1855 = vld [vmem:[#allocation10 + $0x60] sm:$0xff]
        %v1856 = vld [vmem:[#allocation10 + $0x68] sm:$0xff]
        %v1857 = vld [vmem:[#allocation10 + $0x70] sm:$0xff]
        %v1858 = vld [vmem:[#allocation10 + $0x78] sm:$0xff]
        %v1859 = vld [vmem:[#allocation11] sm:$0xff]
        %v1860 = vld [vmem:[#allocation11 + $0x8] sm:$0xff]
        %v1861 = vld [vmem:[#allocation11 + $0x10] sm:$0xff]
        %v1862 = vld [vmem:[#allocation11 + $0x18] sm:$0xff]
        %v1863 = vld [vmem:[#allocation11 + $0x20] sm:$0xff]
        %v1864 = vld [vmem:[#allocation11 + $0x28] sm:$0xff]
        %v1865 = vld [vmem:[#allocation11 + $0x30] sm:$0xff]
        %v1866 = vld [vmem:[#allocation11 + $0x38] sm:$0xff]
        %v1867 = vld [vmem:[#allocation11 + $0x40] sm:$0xff]
        %v1868 = vld [vmem:[#allocation11 + $0x48] sm:$0xff]
        %v1869 = vld [vmem:[#allocation11 + $0x50] sm:$0xff]
        %v1870 = vld [vmem:[#allocation11 + $0x58] sm:$0xff]
        %v1871 = vld [vmem:[#allocation11 + $0x60] sm:$0xff]
        %v1872 = vld [vmem:[#allocation11 + $0x68] sm:$0xff]
        %v1873 = vld [vmem:[#allocation11 + $0x70] sm:$0xff]
        %v1874 = vld [vmem:[#allocation11 + $0x78] sm:$0xff]
        %1875 = vmatprep.subr.mxu0 0.0
        %1876 = vmatpush1.msra.mxu0 %v1874
        %1877 = vmatprep.subr.mxu0 0.0
        %1878 = vmatpush1.msra.mxu0 %v1873
        %1879 = vmatprep.subr.mxu0 0.0
        %1880 = vmatpush1.msra.mxu0 %v1872
        %1881 = vmatprep.subr.mxu0 0.0
        %1882 = vmatpush1.msra.mxu0 %v1871
        %1883 = vmatprep.subr.mxu0 0.0
        %1884 = vmatpush1.msra.mxu0 %v1870
        %1885 = vmatprep.subr.mxu0 0.0
        %1886 = vmatpush1.msra.mxu0 %v1869
        %1887 = vmatprep.subr.mxu0 0.0
        %1888 = vmatpush1.msra.mxu0 %v1868
        %1889 = vmatprep.subr.mxu0 0.0
        %1890 = vmatpush1.msra.mxu0 %v1867
        %1891 = vmatprep.subr.mxu0 0.0
        %1892 = vmatpush1.msra.mxu0 %v1866
        %1893 = vmatprep.subr.mxu0 0.0
        %1894 = vmatpush1.msra.mxu0 %v1865
        %1895 = vmatprep.subr.mxu0 0.0
        %1896 = vmatpush1.msra.mxu0 %v1864
        %1897 = vmatprep.subr.mxu0 0.0
        %1898 = vmatpush1.msra.mxu0 %v1863
        %1899 = vmatprep.subr.mxu0 0.0
        %1900 = vmatpush1.msra.mxu0 %v1862
        %1901 = vmatprep.subr.mxu0 0.0
        %1902 = vmatpush1.msra.mxu0 %v1861
        %1903 = vmatprep.subr.mxu0 0.0
        %1904 = vmatpush1.msra.mxu0 %v1860
        %1905 = vmatprep.subr.mxu0 0.0
        %1906 = vmatpush1.msra.mxu0 %v1859
        %1907 = vmatprep.subr.mxu0 0.0
        %1908 = vmatpush2.msra.mxu0 0.0
        %1909 = vmatprep.subr.mxu0 0.0
        %1910 = vmatpush2.msra.mxu0 0.0
        %1911 = vmatprep.subr.mxu0 0.0
        %1912 = vmatpush2.msra.mxu0 0.0
        %1913 = vmatprep.subr.mxu0 0.0
        %1914 = vmatpush2.msra.mxu0 0.0
        %1915 = vmatprep.subr.mxu0 0.0
        %1916 = vmatpush2.msra.mxu0 0.0
        %1917 = vmatprep.subr.mxu0 0.0
        %1918 = vmatpush2.msra.mxu0 0.0
        %1919 = vmatprep.subr.mxu0 0.0
        %1920 = vmatpush2.msra.mxu0 0.0
        %1921 = vmatprep.subr.mxu0 0.0
        %1922 = vmatpush2.msra.mxu0 0.0
        %1923 = vmatprep.subr.mxu0 0.0
        %1924 = vmatpush2.msra.mxu0 0.0
        %1925 = vmatprep.subr.mxu0 0.0
        %1926 = vmatpush2.msra.mxu0 0.0
        %1927 = vmatprep.subr.mxu0 0.0
        %1928 = vmatpush2.msra.mxu0 0.0
        %1929 = vmatprep.subr.mxu0 0.0
        %1930 = vmatpush2.msra.mxu0 0.0
        %1931 = vmatprep.subr.mxu0 0.0
        %1932 = vmatpush2.msra.mxu0 0.0
        %1933 = vmatprep.subr.mxu0 0.0
        %1934 = vmatpush2.msra.mxu0 0.0
        %1935 = vmatprep.subr.mxu0 0.0
        %1936 = vmatpush2.msra.mxu0 0.0
        %1937 = vmatprep.subr.mxu0 0.0
        %1938 = vmatpush2.msra.mxu0 0.0
        %1939 = vmatprep.mubr.f32.mxu0 0.0
        %1940 = vmatmul.mubr.f32.gmra.mxu0 %v1737
        %v1941 = vpop.f32.mrf.mxu0
        %v1942 = vadd.f32 0.0, %v1941
        %v1943 = vpop.f32.mrf.mxu0
        %1944 = vmatprep.mubr.f32.mxu0 0.0
        %1945 = vmatmul.mubr.f32.gmra.mxu0 %v1744
        %v1946 = vpop.f32.mrf.mxu0
        %v1947 = vadd.f32 0.0, %v1946
        %v1948 = vpop.f32.mrf.mxu0
        %1949 = vmatprep.mubr.f32.mxu0 0.0
        %1950 = vmatmul.mubr.f32.gmra.mxu0 %v1751
        %v1951 = vpop.f32.mrf.mxu0
        %v1952 = vadd.f32 0.0, %v1951
        %v1953 = vpop.f32.mrf.mxu0
        %1954 = vmatprep.mubr.f32.mxu0 0.0
        %1955 = vmatmul.mubr.f32.gmra.mxu0 %v1758
        %v1956 = vpop.f32.mrf.mxu0
        %v1957 = vadd.f32 0.0, %v1956
        %v1958 = vpop.f32.mrf.mxu0
        %1959 = vmatprep.mubr.f32.mxu0 0.0
        %1960 = vmatmul.mubr.f32.gmra.mxu0 %v1765
        %v1961 = vpop.f32.mrf.mxu0
        %v1962 = vadd.f32 0.0, %v1961
        %v1963 = vpop.f32.mrf.mxu0
        %1964 = vmatprep.mubr.f32.mxu0 0.0
        %1965 = vmatmul.mubr.f32.gmra.mxu0 %v1772
        %v1966 = vpop.f32.mrf.mxu0
        %v1967 = vadd.f32 0.0, %v1966
        %v1968 = vpop.f32.mrf.mxu0
        %1969 = vmatprep.mubr.f32.mxu0 0.0
        %1970 = vmatmul.mubr.f32.gmra.mxu0 %v1779
        %v1971 = vpop.f32.mrf.mxu0
        %v1972 = vadd.f32 0.0, %v1971
        %v1973 = vpop.f32.mrf.mxu0
        %1974 = vmatprep.mubr.f32.mxu0 0.0
        %1975 = vmatmul.mubr.f32.gmra.mxu0 %v1786
        %v1976 = vpop.f32.mrf.mxu0
        %v1977 = vadd.f32 0.0, %v1976
        %v1978 = vpop.f32.mrf.mxu0
        %1979 = vmatprep.mubr.f32.mxu0 0.0
        %1980 = vmatmul.mubr.f32.gmra.mxu0 %v1793
        %v1981 = vpop.f32.mrf.mxu0
        %v1982 = vadd.f32 0.0, %v1981
        %v1983 = vpop.f32.mrf.mxu0
        %1984 = vmatprep.mubr.f32.mxu0 0.0
        %1985 = vmatmul.mubr.f32.gmra.mxu0 %v1800
        %v1986 = vpop.f32.mrf.mxu0
        %v1987 = vadd.f32 0.0, %v1986
        %v1988 = vpop.f32.mrf.mxu0
        %1989 = vmatprep.mubr.f32.mxu0 0.0
        %1990 = vmatmul.mubr.f32.gmra.mxu0 %v1807
        %v1991 = vpop.f32.mrf.mxu0
        %v1992 = vadd.f32 0.0, %v1991
        %v1993 = vpop.f32.mrf.mxu0
        %1994 = vmatprep.mubr.f32.mxu0 0.0
        %1995 = vmatmul.mubr.f32.gmra.mxu0 %v1814
        %v1996 = vpop.f32.mrf.mxu0
        %v1997 = vadd.f32 0.0, %v1996
        %v1998 = vpop.f32.mrf.mxu0
        %1999 = vmatprep.mubr.f32.mxu0 0.0
        %2000 = vmatmul.mubr.f32.gmra.mxu0 %v1821
        %v2001 = vpop.f32.mrf.mxu0
        %v2002 = vadd.f32 0.0, %v2001
        %v2003 = vpop.f32.mrf.mxu0
        %2004 = vmatprep.mubr.f32.mxu0 0.0
        %2005 = vmatmul.mubr.f32.gmra.mxu0 %v1828
        %v2006 = vpop.f32.mrf.mxu0
        %v2007 = vadd.f32 0.0, %v2006
        %v2008 = vpop.f32.mrf.mxu0
        %2009 = vmatprep.mubr.f32.mxu0 0.0
        %2010 = vmatmul.mubr.f32.gmra.mxu0 %v1835
        %v2011 = vpop.f32.mrf.mxu0
        %v2012 = vadd.f32 0.0, %v2011
        %v2013 = vpop.f32.mrf.mxu0
        %2014 = vmatprep.mubr.f32.mxu0 0.0
        %2015 = vmatmul.mubr.f32.gmra.mxu0 %v1842
        %v2016 = vpop.f32.mrf.mxu0
        %v2017 = vadd.f32 0.0, %v2016
        %v2018 = vpop.f32.mrf.mxu0
        %2019 = vdwg.mxu0
        %2020 = vmatprep.subr.mxu0 0.0
        %2021 = vmatpush1.msra.mxu0 %v1858
        %2022 = vmatprep.subr.mxu0 0.0
        %2023 = vmatpush1.msra.mxu0 %v1857
        %2024 = vmatprep.subr.mxu0 0.0
        %2025 = vmatpush1.msra.mxu0 %v1856
        %2026 = vmatprep.subr.mxu0 0.0
        %2027 = vmatpush1.msra.mxu0 %v1855
        %2028 = vmatprep.subr.mxu0 0.0
        %2029 = vmatpush1.msra.mxu0 %v1854
        %2030 = vmatprep.subr.mxu0 0.0
        %2031 = vmatpush1.msra.mxu0 %v1853
        %2032 = vmatprep.subr.mxu0 0.0
        %2033 = vmatpush1.msra.mxu0 %v1852
        %2034 = vmatprep.subr.mxu0 0.0
        %2035 = vmatpush1.msra.mxu0 %v1851
        %2036 = vmatprep.subr.mxu0 0.0
        %2037 = vmatpush1.msra.mxu0 %v1850
        %2038 = vmatprep.subr.mxu0 0.0
        %2039 = vmatpush1.msra.mxu0 %v1849
        %2040 = vmatprep.subr.mxu0 0.0
        %2041 = vmatpush1.msra.mxu0 %v1848
        %2042 = vmatprep.subr.mxu0 0.0
        %2043 = vmatpush1.msra.mxu0 %v1847
        %2044 = vmatprep.subr.mxu0 0.0
        %2045 = vmatpush1.msra.mxu0 %v1846
        %2046 = vmatprep.subr.mxu0 0.0
        %2047 = vmatpush1.msra.mxu0 %v1845
        %2048 = vmatprep.subr.mxu0 0.0
        %2049 = vmatpush1.msra.mxu0 %v1844
        %2050 = vmatprep.subr.mxu0 0.0
        %2051 = vmatpush1.msra.mxu0 %v1843
        %2052 = vmatprep.subr.mxu0 0.0
        %2053 = vmatpush2.msra.mxu0 0.0
        %2054 = vmatprep.subr.mxu0 0.0
        %2055 = vmatpush2.msra.mxu0 0.0
        %2056 = vmatprep.subr.mxu0 0.0
        %2057 = vmatpush2.msra.mxu0 0.0
        %2058 = vmatprep.subr.mxu0 0.0
        %2059 = vmatpush2.msra.mxu0 0.0
        %2060 = vmatprep.subr.mxu0 0.0
        %2061 = vmatpush2.msra.mxu0 0.0
        %2062 = vmatprep.subr.mxu0 0.0
        %2063 = vmatpush2.msra.mxu0 0.0
        %2064 = vmatprep.subr.mxu0 0.0
        %2065 = vmatpush2.msra.mxu0 0.0
        %2066 = vmatprep.subr.mxu0 0.0
        %2067 = vmatpush2.msra.mxu0 0.0
        %2068 = vmatprep.subr.mxu0 0.0
        %2069 = vmatpush2.msra.mxu0 0.0
        %2070 = vmatprep.subr.mxu0 0.0
        %2071 = vmatpush2.msra.mxu0 0.0
        %2072 = vmatprep.subr.mxu0 0.0
        %2073 = vmatpush2.msra.mxu0 0.0
        %2074 = vmatprep.subr.mxu0 0.0
        %2075 = vmatpush2.msra.mxu0 0.0
        %2076 = vmatprep.subr.mxu0 0.0
        %2077 = vmatpush2.msra.mxu0 0.0
        %2078 = vmatprep.subr.mxu0 0.0
        %2079 = vmatpush2.msra.mxu0 0.0
        %2080 = vmatprep.subr.mxu0 0.0
        %2081 = vmatpush2.msra.mxu0 0.0
        %2082 = vmatprep.subr.mxu0 0.0
        %2083 = vmatpush2.msra.mxu0 0.0
        %2084 = vmatprep.mubr.f32.mxu0 0.0
        %2085 = vmatmul.mubr.f32.gmra.mxu0 %v667
        %v2086 = vpop.f32.mrf.mxu0
        %v2087 = vadd.f32 %v1942, %v2086
        %v2088 = vpop.f32.mrf.mxu0
        %2089 = vmatprep.mubr.f32.mxu0 0.0
        %2090 = vmatmul.mubr.f32.gmra.mxu0 %v668
        %v2091 = vpop.f32.mrf.mxu0
        %v2092 = vadd.f32 %v1947, %v2091
        %v2093 = vpop.f32.mrf.mxu0
        %2094 = vmatprep.mubr.f32.mxu0 0.0
        %2095 = vmatmul.mubr.f32.gmra.mxu0 %v669
        %v2096 = vpop.f32.mrf.mxu0
        %v2097 = vadd.f32 %v1952, %v2096
        %v2098 = vpop.f32.mrf.mxu0
        %2099 = vmatprep.mubr.f32.mxu0 0.0
        %2100 = vmatmul.mubr.f32.gmra.mxu0 %v670
        %v2101 = vpop.f32.mrf.mxu0
        %v2102 = vadd.f32 %v1957, %v2101
        %v2103 = vpop.f32.mrf.mxu0
        %2104 = vmatprep.mubr.f32.mxu0 0.0
        %2105 = vmatmul.mubr.f32.gmra.mxu0 %v671
        %v2106 = vpop.f32.mrf.mxu0
        %v2107 = vadd.f32 %v1962, %v2106
        %v2108 = vpop.f32.mrf.mxu0
        %2109 = vmatprep.mubr.f32.mxu0 0.0
        %2110 = vmatmul.mubr.f32.gmra.mxu0 %v672
        %v2111 = vpop.f32.mrf.mxu0
        %v2112 = vadd.f32 %v1967, %v2111
        %v2113 = vpop.f32.mrf.mxu0
        %2114 = vmatprep.mubr.f32.mxu0 0.0
        %2115 = vmatmul.mubr.f32.gmra.mxu0 %v673
        %v2116 = vpop.f32.mrf.mxu0
        %v2117 = vadd.f32 %v1972, %v2116
        %v2118 = vpop.f32.mrf.mxu0
        %2119 = vmatprep.mubr.f32.mxu0 0.0
        %2120 = vmatmul.mubr.f32.gmra.mxu0 %v674
        %v2121 = vpop.f32.mrf.mxu0
        %v2122 = vadd.f32 %v1977, %v2121
        %v2123 = vpop.f32.mrf.mxu0
        %2124 = vmatprep.mubr.f32.mxu0 0.0
        %2125 = vmatmul.mubr.f32.gmra.mxu0 %v675
        %v2126 = vpop.f32.mrf.mxu0
        %v2127 = vadd.f32 %v1982, %v2126
        %v2128 = vpop.f32.mrf.mxu0
        %2129 = vmatprep.mubr.f32.mxu0 0.0
        %2130 = vmatmul.mubr.f32.gmra.mxu0 %v676
        %v2131 = vpop.f32.mrf.mxu0
        %v2132 = vadd.f32 %v1987, %v2131
        %v2133 = vpop.f32.mrf.mxu0
        %2134 = vmatprep.mubr.f32.mxu0 0.0
        %2135 = vmatmul.mubr.f32.gmra.mxu0 %v677
        %v2136 = vpop.f32.mrf.mxu0
        %v2137 = vadd.f32 %v1992, %v2136
        %v2138 = vpop.f32.mrf.mxu0
        %2139 = vmatprep.mubr.f32.mxu0 0.0
        %2140 = vmatmul.mubr.f32.gmra.mxu0 %v678
        %v2141 = vpop.f32.mrf.mxu0
        %v2142 = vadd.f32 %v1997, %v2141
        %v2143 = vpop.f32.mrf.mxu0
        %2144 = vmatprep.mubr.f32.mxu0 0.0
        %2145 = vmatmul.mubr.f32.gmra.mxu0 %v679
        %v2146 = vpop.f32.mrf.mxu0
        %v2147 = vadd.f32 %v2002, %v2146
        %v2148 = vpop.f32.mrf.mxu0
        %2149 = vmatprep.mubr.f32.mxu0 0.0
        %2150 = vmatmul.mubr.f32.gmra.mxu0 %v680
        %v2151 = vpop.f32.mrf.mxu0
        %v2152 = vadd.f32 %v2007, %v2151
        %v2153 = vpop.f32.mrf.mxu0
        %2154 = vmatprep.mubr.f32.mxu0 0.0
        %2155 = vmatmul.mubr.f32.gmra.mxu0 %v681
        %v2156 = vpop.f32.mrf.mxu0
        %v2157 = vadd.f32 %v2012, %v2156
        %v2158 = vpop.f32.mrf.mxu0
        %2159 = vmatprep.mubr.f32.mxu0 0.0
        %2160 = vmatmul.mubr.f32.gmra.mxu0 %v682
        %v2161 = vpop.f32.mrf.mxu0
        %v2162 = vadd.f32 %v2017, %v2161
        %v2163 = vpop.f32.mrf.mxu0
        %2164 = vdwg.mxu0
        %v2165 = vld [vmem:[%s6] sm:$0x1]
        %v2167 = vlaneseq
        %v2168 = vshrl.u32 %v2167, 7
        %v2169 = vsub.s32 0, %v2168
        %v2170 = vrot.slane %v2165, %v2169
        %v2172 = vadd.f32 %v2087, %v2170
        %v2173 = vadd.f32 %v2092, %v2170
        %v2174 = vadd.f32 %v2097, %v2170
        %v2175 = vadd.f32 %v2102, %v2170
        %v2176 = vadd.f32 %v2107, %v2170
        %v2177 = vadd.f32 %v2112, %v2170
        %v2178 = vadd.f32 %v2117, %v2170
        %v2179 = vadd.f32 %v2122, %v2170
        %v2180 = vadd.f32 %v2127, %v2170
        %v2181 = vadd.f32 %v2132, %v2170
        %v2182 = vadd.f32 %v2137, %v2170
        %v2183 = vadd.f32 %v2142, %v2170
        %v2184 = vadd.f32 %v2147, %v2170
        %v2185 = vadd.f32 %v2152, %v2170
        %v2186 = vadd.f32 %v2157, %v2170
        %v2187 = vadd.f32 %v2162, %v2170
        %v2188 = vxor.u32 %v2172, 2147483648
        %v2189 = vxor.u32 %v2173, 2147483648
        %v2190 = vxor.u32 %v2174, 2147483648
        %v2191 = vxor.u32 %v2175, 2147483648
        %v2192 = vxor.u32 %v2176, 2147483648
        %v2193 = vxor.u32 %v2177, 2147483648
        %v2194 = vxor.u32 %v2178, 2147483648
        %v2195 = vxor.u32 %v2179, 2147483648
        %v2196 = vxor.u32 %v2180, 2147483648
        %v2197 = vxor.u32 %v2181, 2147483648
        %v2198 = vxor.u32 %v2182, 2147483648
        %v2199 = vxor.u32 %v2183, 2147483648
        %v2200 = vxor.u32 %v2184, 2147483648
        %v2201 = vxor.u32 %v2185, 2147483648
        %v2202 = vxor.u32 %v2186, 2147483648
        %v2203 = vxor.u32 %v2187, 2147483648
        %v2204 = vmul.f32 %v2188, 1.442695
        %v2205 = vpow.pop %v2204
        %v2206 = vmul.f32 %v2189, 1.442695
        %v2207 = vpow.pop %v2206
        %v2208 = vmul.f32 %v2190, 1.442695
        %v2209 = vpow.pop %v2208
        %v2210 = vmul.f32 %v2191, 1.442695
        %v2211 = vpow.pop %v2210
        %v2212 = vmul.f32 %v2192, 1.442695
        %v2213 = vpow.pop %v2212
        %v2214 = vmul.f32 %v2193, 1.442695
        %v2215 = vpow.pop %v2214
        %v2216 = vmul.f32 %v2194, 1.442695
        %v2217 = vpow.pop %v2216
        %v2218 = vmul.f32 %v2195, 1.442695
        %v2219 = vpow.pop %v2218
        %v2220 = vmul.f32 %v2196, 1.442695
        %v2221 = vpow.pop %v2220
        %v2222 = vmul.f32 %v2197, 1.442695
        %v2223 = vpow.pop %v2222
        %v2224 = vmul.f32 %v2198, 1.442695
        %v2225 = vpow.pop %v2224
        %v2226 = vmul.f32 %v2199, 1.442695
        %v2227 = vpow.pop %v2226
        %v2228 = vmul.f32 %v2200, 1.442695
        %v2229 = vpow.pop %v2228
        %v2230 = vmul.f32 %v2201, 1.442695
        %v2231 = vpow.pop %v2230
        %v2232 = vmul.f32 %v2202, 1.442695
        %v2233 = vpow.pop %v2232
        %v2234 = vmul.f32 %v2203, 1.442695
        %v2235 = vpow.pop %v2234
        %v2236 = vadd.f32 %v2205, 1.0
        %v2237 = vadd.f32 %v2207, 1.0
        %v2238 = vadd.f32 %v2209, 1.0
        %v2239 = vadd.f32 %v2211, 1.0
        %v2240 = vadd.f32 %v2213, 1.0
        %v2241 = vadd.f32 %v2215, 1.0
        %v2242 = vadd.f32 %v2217, 1.0
        %v2243 = vadd.f32 %v2219, 1.0
        %v2244 = vadd.f32 %v2221, 1.0
        %v2245 = vadd.f32 %v2223, 1.0
        %v2246 = vadd.f32 %v2225, 1.0
        %v2247 = vadd.f32 %v2227, 1.0
        %v2248 = vadd.f32 %v2229, 1.0
        %v2249 = vadd.f32 %v2231, 1.0
        %v2250 = vadd.f32 %v2233, 1.0
        %v2251 = vadd.f32 %v2235, 1.0
        %v2252 = vrcp.pop %v2236
        %v2253 = vmul.f32 1.0, %v2252
        %v2254 = vrcp.pop %v2237
        %v2255 = vmul.f32 1.0, %v2254
        %v2256 = vrcp.pop %v2238
        %v2257 = vmul.f32 1.0, %v2256
        %v2258 = vrcp.pop %v2239
        %v2259 = vmul.f32 1.0, %v2258
        %v2260 = vrcp.pop %v2240
        %v2261 = vmul.f32 1.0, %v2260
        %v2262 = vrcp.pop %v2241
        %v2263 = vmul.f32 1.0, %v2262
        %v2264 = vrcp.pop %v2242
        %v2265 = vmul.f32 1.0, %v2264
        %v2266 = vrcp.pop %v2243
        %v2267 = vmul.f32 1.0, %v2266
        %v2268 = vrcp.pop %v2244
        %v2269 = vmul.f32 1.0, %v2268
        %v2270 = vrcp.pop %v2245
        %v2271 = vmul.f32 1.0, %v2270
        %v2272 = vrcp.pop %v2246
        %v2273 = vmul.f32 1.0, %v2272
        %v2274 = vrcp.pop %v2247
        %v2275 = vmul.f32 1.0, %v2274
        %v2276 = vrcp.pop %v2248
        %v2277 = vmul.f32 1.0, %v2276
        %v2278 = vrcp.pop %v2249
        %v2279 = vmul.f32 1.0, %v2278
        %v2280 = vrcp.pop %v2250
        %v2281 = vmul.f32 1.0, %v2280
        %v2282 = vrcp.pop %v2251
        %v2283 = vmul.f32 1.0, %v2282
        %v2284 = vmul.f32 %v2172, %v2253
        %v2285 = vmul.f32 %v2173, %v2255
        %v2286 = vmul.f32 %v2174, %v2257
        %v2287 = vmul.f32 %v2175, %v2259
        %v2288 = vmul.f32 %v2176, %v2261
        %v2289 = vmul.f32 %v2177, %v2263
        %v2290 = vmul.f32 %v2178, %v2265
        %v2291 = vmul.f32 %v2179, %v2267
        %v2292 = vmul.f32 %v2180, %v2269
        %v2293 = vmul.f32 %v2181, %v2271
        %v2294 = vmul.f32 %v2182, %v2273
        %v2295 = vmul.f32 %v2183, %v2275
        %v2296 = vmul.f32 %v2184, %v2277
        %v2297 = vmul.f32 %v2185, %v2279
        %v2298 = vmul.f32 %v2186, %v2281
        %v2299 = vmul.f32 %v2187, %v2283
        %v2300 = vld [vmem:[#allocation13] sm:$0xff]
        %v2301 = vld [vmem:[#allocation13 + $0x8] sm:$0xff]
        %v2302 = vld [vmem:[#allocation13 + $0x10] sm:$0xff]
        %v2303 = vld [vmem:[#allocation13 + $0x18] sm:$0xff]
        %v2304 = vld [vmem:[#allocation13 + $0x20] sm:$0xff]
        %v2305 = vld [vmem:[#allocation13 + $0x28] sm:$0xff]
        %v2306 = vld [vmem:[#allocation13 + $0x30] sm:$0xff]
        %v2307 = vld [vmem:[#allocation13 + $0x38] sm:$0xff]
        %v2308 = vld [vmem:[#allocation13 + $0x40] sm:$0xff]
        %v2309 = vld [vmem:[#allocation13 + $0x48] sm:$0xff]
        %v2310 = vld [vmem:[#allocation13 + $0x50] sm:$0xff]
        %v2311 = vld [vmem:[#allocation13 + $0x58] sm:$0xff]
        %v2312 = vld [vmem:[#allocation13 + $0x60] sm:$0xff]
        %v2313 = vld [vmem:[#allocation13 + $0x68] sm:$0xff]
        %v2314 = vld [vmem:[#allocation13 + $0x70] sm:$0xff]
        %v2315 = vld [vmem:[#allocation13 + $0x78] sm:$0xff]
        %v2316 = vld [vmem:[%s10] sm:$0x1]
        %v2318 = vlaneseq
        %v2319 = vshrl.u32 %v2318, 7
        %v2320 = vsub.s32 0, %v2319
        %v2321 = vrot.slane %v2316, %v2320
        %2323 = vmatprep.subr.mxu0 0.0
        %2324 = vmatpush1.msra.mxu0 %v2315
        %2325 = vmatprep.subr.mxu0 0.0
        %2326 = vmatpush1.msra.mxu0 %v2314
        %2327 = vmatprep.subr.mxu0 0.0
        %2328 = vmatpush1.msra.mxu0 %v2313
        %2329 = vmatprep.subr.mxu0 0.0
        %2330 = vmatpush1.msra.mxu0 %v2312
        %2331 = vmatprep.subr.mxu0 0.0
        %2332 = vmatpush1.msra.mxu0 %v2311
        %2333 = vmatprep.subr.mxu0 0.0
        %2334 = vmatpush1.msra.mxu0 %v2310
        %2335 = vmatprep.subr.mxu0 0.0
        %2336 = vmatpush1.msra.mxu0 %v2309
        %2337 = vmatprep.subr.mxu0 0.0
        %2338 = vmatpush1.msra.mxu0 %v2308
        %2339 = vmatprep.subr.mxu0 0.0
        %2340 = vmatpush1.msra.mxu0 %v2307
        %2341 = vmatprep.subr.mxu0 0.0
        %2342 = vmatpush1.msra.mxu0 %v2306
        %2343 = vmatprep.subr.mxu0 0.0
        %2344 = vmatpush1.msra.mxu0 %v2305
        %2345 = vmatprep.subr.mxu0 0.0
        %2346 = vmatpush1.msra.mxu0 %v2304
        %2347 = vmatprep.subr.mxu0 0.0
        %2348 = vmatpush1.msra.mxu0 %v2303
        %2349 = vmatprep.subr.mxu0 0.0
        %2350 = vmatpush1.msra.mxu0 %v2302
        %2351 = vmatprep.subr.mxu0 0.0
        %2352 = vmatpush1.msra.mxu0 %v2301
        %2353 = vmatprep.subr.mxu0 0.0
        %2354 = vmatpush1.msra.mxu0 %v2300
        %2355 = vmatprep.subr.mxu0 0.0
        %2356 = vmatpush2.msra.mxu0 0.0
        %2357 = vmatprep.subr.mxu0 0.0
        %2358 = vmatpush2.msra.mxu0 0.0
        %2359 = vmatprep.subr.mxu0 0.0
        %2360 = vmatpush2.msra.mxu0 0.0
        %2361 = vmatprep.subr.mxu0 0.0
        %2362 = vmatpush2.msra.mxu0 0.0
        %2363 = vmatprep.subr.mxu0 0.0
        %2364 = vmatpush2.msra.mxu0 0.0
        %2365 = vmatprep.subr.mxu0 0.0
        %2366 = vmatpush2.msra.mxu0 0.0
        %2367 = vmatprep.subr.mxu0 0.0
        %2368 = vmatpush2.msra.mxu0 0.0
        %2369 = vmatprep.subr.mxu0 0.0
        %2370 = vmatpush2.msra.mxu0 0.0
        %2371 = vmatprep.subr.mxu0 0.0
        %2372 = vmatpush2.msra.mxu0 0.0
        %2373 = vmatprep.subr.mxu0 0.0
        %2374 = vmatpush2.msra.mxu0 0.0
        %2375 = vmatprep.subr.mxu0 0.0
        %2376 = vmatpush2.msra.mxu0 0.0
        %2377 = vmatprep.subr.mxu0 0.0
        %2378 = vmatpush2.msra.mxu0 0.0
        %2379 = vmatprep.subr.mxu0 0.0
        %2380 = vmatpush2.msra.mxu0 0.0
        %2381 = vmatprep.subr.mxu0 0.0
        %2382 = vmatpush2.msra.mxu0 0.0
        %2383 = vmatprep.subr.mxu0 0.0
        %2384 = vmatpush2.msra.mxu0 0.0
        %2385 = vmatprep.subr.mxu0 0.0
        %2386 = vmatpush2.msra.mxu0 0.0
        %2387 = vmatprep.mubr.f32.mxu0 0.0
        %2388 = vmatmul.mubr.f32.gmra.mxu0 %v2284
        %v2389 = vpop.f32.mrf.mxu0
        %v2390 = vadd.f32 %v2321, %v2389
        %v2391 = vpop.f32.mrf.mxu0
        %2392 = vmatprep.mubr.f32.mxu0 0.0
        %2393 = vmatmul.mubr.f32.gmra.mxu0 %v2285
        %v2394 = vpop.f32.mrf.mxu0
        %v2395 = vadd.f32 %v2321, %v2394
        %v2396 = vpop.f32.mrf.mxu0
        %2397 = vmatprep.mubr.f32.mxu0 0.0
        %2398 = vmatmul.mubr.f32.gmra.mxu0 %v2286
        %v2399 = vpop.f32.mrf.mxu0
        %v2400 = vadd.f32 %v2321, %v2399
        %v2401 = vpop.f32.mrf.mxu0
        %2402 = vmatprep.mubr.f32.mxu0 0.0
        %2403 = vmatmul.mubr.f32.gmra.mxu0 %v2287
        %v2404 = vpop.f32.mrf.mxu0
        %v2405 = vadd.f32 %v2321, %v2404
        %v2406 = vpop.f32.mrf.mxu0
        %2407 = vmatprep.mubr.f32.mxu0 0.0
        %2408 = vmatmul.mubr.f32.gmra.mxu0 %v2288
        %v2409 = vpop.f32.mrf.mxu0
        %v2410 = vadd.f32 %v2321, %v2409
        %v2411 = vpop.f32.mrf.mxu0
        %2412 = vmatprep.mubr.f32.mxu0 0.0
        %2413 = vmatmul.mubr.f32.gmra.mxu0 %v2289
        %v2414 = vpop.f32.mrf.mxu0
        %v2415 = vadd.f32 %v2321, %v2414
        %v2416 = vpop.f32.mrf.mxu0
        %2417 = vmatprep.mubr.f32.mxu0 0.0
        %2418 = vmatmul.mubr.f32.gmra.mxu0 %v2290
        %v2419 = vpop.f32.mrf.mxu0
        %v2420 = vadd.f32 %v2321, %v2419
        %v2421 = vpop.f32.mrf.mxu0
        %2422 = vmatprep.mubr.f32.mxu0 0.0
        %2423 = vmatmul.mubr.f32.gmra.mxu0 %v2291
        %v2424 = vpop.f32.mrf.mxu0
        %v2425 = vadd.f32 %v2321, %v2424
        %v2426 = vpop.f32.mrf.mxu0
        %2427 = vmatprep.mubr.f32.mxu0 0.0
        %2428 = vmatmul.mubr.f32.gmra.mxu0 %v2292
        %v2429 = vpop.f32.mrf.mxu0
        %v2430 = vadd.f32 %v2321, %v2429
        %v2431 = vpop.f32.mrf.mxu0
        %2432 = vmatprep.mubr.f32.mxu0 0.0
        %2433 = vmatmul.mubr.f32.gmra.mxu0 %v2293
        %v2434 = vpop.f32.mrf.mxu0
        %v2435 = vadd.f32 %v2321, %v2434
        %v2436 = vpop.f32.mrf.mxu0
        %2437 = vmatprep.mubr.f32.mxu0 0.0
        %2438 = vmatmul.mubr.f32.gmra.mxu0 %v2294
        %v2439 = vpop.f32.mrf.mxu0
        %v2440 = vadd.f32 %v2321, %v2439
        %v2441 = vpop.f32.mrf.mxu0
        %2442 = vmatprep.mubr.f32.mxu0 0.0
        %2443 = vmatmul.mubr.f32.gmra.mxu0 %v2295
        %v2444 = vpop.f32.mrf.mxu0
        %v2445 = vadd.f32 %v2321, %v2444
        %v2446 = vpop.f32.mrf.mxu0
        %2447 = vmatprep.mubr.f32.mxu0 0.0
        %2448 = vmatmul.mubr.f32.gmra.mxu0 %v2296
        %v2449 = vpop.f32.mrf.mxu0
        %v2450 = vadd.f32 %v2321, %v2449
        %v2451 = vpop.f32.mrf.mxu0
        %2452 = vmatprep.mubr.f32.mxu0 0.0
        %2453 = vmatmul.mubr.f32.gmra.mxu0 %v2297
        %v2454 = vpop.f32.mrf.mxu0
        %v2455 = vadd.f32 %v2321, %v2454
        %v2456 = vpop.f32.mrf.mxu0
        %2457 = vmatprep.mubr.f32.mxu0 0.0
        %2458 = vmatmul.mubr.f32.gmra.mxu0 %v2298
        %v2459 = vpop.f32.mrf.mxu0
        %v2460 = vadd.f32 %v2321, %v2459
        %v2461 = vpop.f32.mrf.mxu0
        %2462 = vmatprep.mubr.f32.mxu0 0.0
        %2463 = vmatmul.mubr.f32.gmra.mxu0 %v2299
        %v2464 = vpop.f32.mrf.mxu0
        %v2465 = vadd.f32 %v2321, %v2464
        %v2466 = vpop.f32.mrf.mxu0
        %2467 = vdwg.mxu0
        %v2468 = vld [vmem:[#allocation14] sm:$0xff]
        %v2469 = vld [vmem:[#allocation14 + $0x8] sm:$0xff]
        %v2470 = vld [vmem:[#allocation14 + $0x10] sm:$0xff]
        %v2471 = vld [vmem:[#allocation14 + $0x18] sm:$0xff]
        %v2472 = vld [vmem:[#allocation14 + $0x20] sm:$0xff]
        %v2473 = vld [vmem:[#allocation14 + $0x28] sm:$0xff]
        %v2474 = vld [vmem:[#allocation14 + $0x30] sm:$0xff]
        %v2475 = vld [vmem:[#allocation14 + $0x38] sm:$0xff]
        %v2476 = vld [vmem:[#allocation14 + $0x40] sm:$0xff]
        %v2477 = vld [vmem:[#allocation14 + $0x48] sm:$0xff]
        %v2478 = vld [vmem:[#allocation14 + $0x50] sm:$0xff]
        %v2479 = vld [vmem:[#allocation14 + $0x58] sm:$0xff]
        %v2480 = vld [vmem:[#allocation14 + $0x60] sm:$0xff]
        %v2481 = vld [vmem:[#allocation14 + $0x68] sm:$0xff]
        %v2482 = vld [vmem:[#allocation14 + $0x70] sm:$0xff]
        %v2483 = vld [vmem:[#allocation14 + $0x78] sm:$0xff]
        %v2484 = vld [vmem:[%s11] sm:$0x1]
        %v2486 = vlaneseq
        %v2487 = vshrl.u32 %v2486, 7
        %v2488 = vsub.s32 0, %v2487
        %v2489 = vrot.slane %v2484, %v2488
        %2491 = vmatprep.subr.mxu0 0.0
        %2492 = vmatpush1.msra.mxu0 %v2483
        %2493 = vmatprep.subr.mxu0 0.0
        %2494 = vmatpush1.msra.mxu0 %v2482
        %2495 = vmatprep.subr.mxu0 0.0
        %2496 = vmatpush1.msra.mxu0 %v2481
        %2497 = vmatprep.subr.mxu0 0.0
        %2498 = vmatpush1.msra.mxu0 %v2480
        %2499 = vmatprep.subr.mxu0 0.0
        %2500 = vmatpush1.msra.mxu0 %v2479
        %2501 = vmatprep.subr.mxu0 0.0
        %2502 = vmatpush1.msra.mxu0 %v2478
        %2503 = vmatprep.subr.mxu0 0.0
        %2504 = vmatpush1.msra.mxu0 %v2477
        %2505 = vmatprep.subr.mxu0 0.0
        %2506 = vmatpush1.msra.mxu0 %v2476
        %2507 = vmatprep.subr.mxu0 0.0
        %2508 = vmatpush1.msra.mxu0 %v2475
        %2509 = vmatprep.subr.mxu0 0.0
        %2510 = vmatpush1.msra.mxu0 %v2474
        %2511 = vmatprep.subr.mxu0 0.0
        %2512 = vmatpush1.msra.mxu0 %v2473
        %2513 = vmatprep.subr.mxu0 0.0
        %2514 = vmatpush1.msra.mxu0 %v2472
        %2515 = vmatprep.subr.mxu0 0.0
        %2516 = vmatpush1.msra.mxu0 %v2471
        %2517 = vmatprep.subr.mxu0 0.0
        %2518 = vmatpush1.msra.mxu0 %v2470
        %2519 = vmatprep.subr.mxu0 0.0
        %2520 = vmatpush1.msra.mxu0 %v2469
        %2521 = vmatprep.subr.mxu0 0.0
        %2522 = vmatpush1.msra.mxu0 %v2468
        %2523 = vmatprep.subr.mxu0 0.0
        %2524 = vmatpush2.msra.mxu0 0.0
        %2525 = vmatprep.subr.mxu0 0.0
        %2526 = vmatpush2.msra.mxu0 0.0
        %2527 = vmatprep.subr.mxu0 0.0
        %2528 = vmatpush2.msra.mxu0 0.0
        %2529 = vmatprep.subr.mxu0 0.0
        %2530 = vmatpush2.msra.mxu0 0.0
        %2531 = vmatprep.subr.mxu0 0.0
        %2532 = vmatpush2.msra.mxu0 0.0
        %2533 = vmatprep.subr.mxu0 0.0
        %2534 = vmatpush2.msra.mxu0 0.0
        %2535 = vmatprep.subr.mxu0 0.0
        %2536 = vmatpush2.msra.mxu0 0.0
        %2537 = vmatprep.subr.mxu0 0.0
        %2538 = vmatpush2.msra.mxu0 0.0
        %2539 = vmatprep.subr.mxu0 0.0
        %2540 = vmatpush2.msra.mxu0 0.0
        %2541 = vmatprep.subr.mxu0 0.0
        %2542 = vmatpush2.msra.mxu0 0.0
        %2543 = vmatprep.subr.mxu0 0.0
        %2544 = vmatpush2.msra.mxu0 0.0
        %2545 = vmatprep.subr.mxu0 0.0
        %2546 = vmatpush2.msra.mxu0 0.0
        %2547 = vmatprep.subr.mxu0 0.0
        %2548 = vmatpush2.msra.mxu0 0.0
        %2549 = vmatprep.subr.mxu0 0.0
        %2550 = vmatpush2.msra.mxu0 0.0
        %2551 = vmatprep.subr.mxu0 0.0
        %2552 = vmatpush2.msra.mxu0 0.0
        %2553 = vmatprep.subr.mxu0 0.0
        %2554 = vmatpush2.msra.mxu0 0.0
        %2555 = vmatprep.mubr.f32.mxu0 0.0
        %2556 = vmatmul.mubr.f32.gmra.mxu0 %v2284
        %v2557 = vpop.f32.mrf.mxu0
        %v2558 = vadd.f32 %v2489, %v2557
        %v2559 = vpop.f32.mrf.mxu0
        %2560 = vmatprep.mubr.f32.mxu0 0.0
        %2561 = vmatmul.mubr.f32.gmra.mxu0 %v2285
        %v2562 = vpop.f32.mrf.mxu0
        %v2563 = vadd.f32 %v2489, %v2562
        %v2564 = vpop.f32.mrf.mxu0
        %2565 = vmatprep.mubr.f32.mxu0 0.0
        %2566 = vmatmul.mubr.f32.gmra.mxu0 %v2286
        %v2567 = vpop.f32.mrf.mxu0
        %v2568 = vadd.f32 %v2489, %v2567
        %v2569 = vpop.f32.mrf.mxu0
        %2570 = vmatprep.mubr.f32.mxu0 0.0
        %2571 = vmatmul.mubr.f32.gmra.mxu0 %v2287
        %v2572 = vpop.f32.mrf.mxu0
        %v2573 = vadd.f32 %v2489, %v2572
        %v2574 = vpop.f32.mrf.mxu0
        %2575 = vmatprep.mubr.f32.mxu0 0.0
        %2576 = vmatmul.mubr.f32.gmra.mxu0 %v2288
        %v2577 = vpop.f32.mrf.mxu0
        %v2578 = vadd.f32 %v2489, %v2577
        %v2579 = vpop.f32.mrf.mxu0
        %2580 = vmatprep.mubr.f32.mxu0 0.0
        %2581 = vmatmul.mubr.f32.gmra.mxu0 %v2289
        %v2582 = vpop.f32.mrf.mxu0
        %v2583 = vadd.f32 %v2489, %v2582
        %v2584 = vpop.f32.mrf.mxu0
        %2585 = vmatprep.mubr.f32.mxu0 0.0
        %2586 = vmatmul.mubr.f32.gmra.mxu0 %v2290
        %v2587 = vpop.f32.mrf.mxu0
        %v2588 = vadd.f32 %v2489, %v2587
        %v2589 = vpop.f32.mrf.mxu0
        %2590 = vmatprep.mubr.f32.mxu0 0.0
        %2591 = vmatmul.mubr.f32.gmra.mxu0 %v2291
        %v2592 = vpop.f32.mrf.mxu0
        %v2593 = vadd.f32 %v2489, %v2592
        %v2594 = vpop.f32.mrf.mxu0
        %2595 = vmatprep.mubr.f32.mxu0 0.0
        %2596 = vmatmul.mubr.f32.gmra.mxu0 %v2292
        %v2597 = vpop.f32.mrf.mxu0
        %v2598 = vadd.f32 %v2489, %v2597
        %v2599 = vpop.f32.mrf.mxu0
        %2600 = vmatprep.mubr.f32.mxu0 0.0
        %2601 = vmatmul.mubr.f32.gmra.mxu0 %v2293
        %v2602 = vpop.f32.mrf.mxu0
        %v2603 = vadd.f32 %v2489, %v2602
        %v2604 = vpop.f32.mrf.mxu0
        %2605 = vmatprep.mubr.f32.mxu0 0.0
        %2606 = vmatmul.mubr.f32.gmra.mxu0 %v2294
        %v2607 = vpop.f32.mrf.mxu0
        %v2608 = vadd.f32 %v2489, %v2607
        %v2609 = vpop.f32.mrf.mxu0
        %2610 = vmatprep.mubr.f32.mxu0 0.0
        %2611 = vmatmul.mubr.f32.gmra.mxu0 %v2295
        %v2612 = vpop.f32.mrf.mxu0
        %v2613 = vadd.f32 %v2489, %v2612
        %v2614 = vpop.f32.mrf.mxu0
        %2615 = vmatprep.mubr.f32.mxu0 0.0
        %2616 = vmatmul.mubr.f32.gmra.mxu0 %v2296
        %v2617 = vpop.f32.mrf.mxu0
        %v2618 = vadd.f32 %v2489, %v2617
        %v2619 = vpop.f32.mrf.mxu0
        %2620 = vmatprep.mubr.f32.mxu0 0.0
        %2621 = vmatmul.mubr.f32.gmra.mxu0 %v2297
        %v2622 = vpop.f32.mrf.mxu0
        %v2623 = vadd.f32 %v2489, %v2622
        %v2624 = vpop.f32.mrf.mxu0
        %2625 = vmatprep.mubr.f32.mxu0 0.0
        %2626 = vmatmul.mubr.f32.gmra.mxu0 %v2298
        %v2627 = vpop.f32.mrf.mxu0
        %v2628 = vadd.f32 %v2489, %v2627
        %v2629 = vpop.f32.mrf.mxu0
        %2630 = vmatprep.mubr.f32.mxu0 0.0
        %2631 = vmatmul.mubr.f32.gmra.mxu0 %v2299
        %v2632 = vpop.f32.mrf.mxu0
        %v2633 = vadd.f32 %v2489, %v2632
        %v2634 = vpop.f32.mrf.mxu0
        %2635 = vdwg.mxu0
        %v2636 = vld [vmem:[#allocation16] sm:$0xff]
        %v2637 = vld [vmem:[#allocation16 + $0x8] sm:$0xff]
        %v2638 = vld [vmem:[#allocation16 + $0x10] sm:$0xff]
        %v2639 = vld [vmem:[#allocation16 + $0x18] sm:$0xff]
        %v2640 = vld [vmem:[#allocation16 + $0x20] sm:$0xff]
        %v2641 = vld [vmem:[#allocation16 + $0x28] sm:$0xff]
        %v2642 = vld [vmem:[#allocation16 + $0x30] sm:$0xff]
        %v2643 = vld [vmem:[#allocation16 + $0x38] sm:$0xff]
        %v2644 = vld [vmem:[#allocation16 + $0x40] sm:$0xff]
        %v2645 = vld [vmem:[#allocation16 + $0x48] sm:$0xff]
        %v2646 = vld [vmem:[#allocation16 + $0x50] sm:$0xff]
        %v2647 = vld [vmem:[#allocation16 + $0x58] sm:$0xff]
        %v2648 = vld [vmem:[#allocation16 + $0x60] sm:$0xff]
        %v2649 = vld [vmem:[#allocation16 + $0x68] sm:$0xff]
        %v2650 = vld [vmem:[#allocation16 + $0x70] sm:$0xff]
        %v2651 = vld [vmem:[#allocation16 + $0x78] sm:$0xff]
        %v2652 = vld [vmem:[%s12] sm:$0x1]
        %v2654 = vlaneseq
        %v2655 = vshrl.u32 %v2654, 7
        %v2656 = vsub.s32 0, %v2655
        %v2657 = vrot.slane %v2652, %v2656
        %2659 = vmatprep.subr.mxu0 0.0
        %2660 = vmatpush1.msra.mxu0 %v2651
        %2661 = vmatprep.subr.mxu0 0.0
        %2662 = vmatpush1.msra.mxu0 %v2650
        %2663 = vmatprep.subr.mxu0 0.0
        %2664 = vmatpush1.msra.mxu0 %v2649
        %2665 = vmatprep.subr.mxu0 0.0
        %2666 = vmatpush1.msra.mxu0 %v2648
        %2667 = vmatprep.subr.mxu0 0.0
        %2668 = vmatpush1.msra.mxu0 %v2647
        %2669 = vmatprep.subr.mxu0 0.0
        %2670 = vmatpush1.msra.mxu0 %v2646
        %2671 = vmatprep.subr.mxu0 0.0
        %2672 = vmatpush1.msra.mxu0 %v2645
        %2673 = vmatprep.subr.mxu0 0.0
        %2674 = vmatpush1.msra.mxu0 %v2644
        %2675 = vmatprep.subr.mxu0 0.0
        %2676 = vmatpush1.msra.mxu0 %v2643
        %2677 = vmatprep.subr.mxu0 0.0
        %2678 = vmatpush1.msra.mxu0 %v2642
        %2679 = vmatprep.subr.mxu0 0.0
        %2680 = vmatpush1.msra.mxu0 %v2641
        %2681 = vmatprep.subr.mxu0 0.0
        %2682 = vmatpush1.msra.mxu0 %v2640
        %2683 = vmatprep.subr.mxu0 0.0
        %2684 = vmatpush1.msra.mxu0 %v2639
        %2685 = vmatprep.subr.mxu0 0.0
        %2686 = vmatpush1.msra.mxu0 %v2638
        %2687 = vmatprep.subr.mxu0 0.0
        %2688 = vmatpush1.msra.mxu0 %v2637
        %2689 = vmatprep.subr.mxu0 0.0
        %2690 = vmatpush1.msra.mxu0 %v2636
        %2691 = vmatprep.subr.mxu0 0.0
        %2692 = vmatpush2.msra.mxu0 0.0
        %2693 = vmatprep.subr.mxu0 0.0
        %2694 = vmatpush2.msra.mxu0 0.0
        %2695 = vmatprep.subr.mxu0 0.0
        %2696 = vmatpush2.msra.mxu0 0.0
        %2697 = vmatprep.subr.mxu0 0.0
        %2698 = vmatpush2.msra.mxu0 0.0
        %2699 = vmatprep.subr.mxu0 0.0
        %2700 = vmatpush2.msra.mxu0 0.0
        %2701 = vmatprep.subr.mxu0 0.0
        %2702 = vmatpush2.msra.mxu0 0.0
        %2703 = vmatprep.subr.mxu0 0.0
        %2704 = vmatpush2.msra.mxu0 0.0
        %2705 = vmatprep.subr.mxu0 0.0
        %2706 = vmatpush2.msra.mxu0 0.0
        %2707 = vmatprep.subr.mxu0 0.0
        %2708 = vmatpush2.msra.mxu0 0.0
        %2709 = vmatprep.subr.mxu0 0.0
        %2710 = vmatpush2.msra.mxu0 0.0
        %2711 = vmatprep.subr.mxu0 0.0
        %2712 = vmatpush2.msra.mxu0 0.0
        %2713 = vmatprep.subr.mxu0 0.0
        %2714 = vmatpush2.msra.mxu0 0.0
        %2715 = vmatprep.subr.mxu0 0.0
        %2716 = vmatpush2.msra.mxu0 0.0
        %2717 = vmatprep.subr.mxu0 0.0
        %2718 = vmatpush2.msra.mxu0 0.0
        %2719 = vmatprep.subr.mxu0 0.0
        %2720 = vmatpush2.msra.mxu0 0.0
        %2721 = vmatprep.subr.mxu0 0.0
        %2722 = vmatpush2.msra.mxu0 0.0
        %2723 = vmatprep.mubr.f32.mxu0 0.0
        %2724 = vmatmul.mubr.f32.gmra.mxu0 %v2284
        %v2725 = vpop.f32.mrf.mxu0
        %v2726 = vadd.f32 %v2657, %v2725
        %v2727 = vpop.f32.mrf.mxu0
        %2728 = vmatprep.mubr.f32.mxu0 0.0
        %2729 = vmatmul.mubr.f32.gmra.mxu0 %v2285
        %v2730 = vpop.f32.mrf.mxu0
        %v2731 = vadd.f32 %v2657, %v2730
        %v2732 = vpop.f32.mrf.mxu0
        %2733 = vmatprep.mubr.f32.mxu0 0.0
        %2734 = vmatmul.mubr.f32.gmra.mxu0 %v2286
        %v2735 = vpop.f32.mrf.mxu0
        %v2736 = vadd.f32 %v2657, %v2735
        %v2737 = vpop.f32.mrf.mxu0
        %2738 = vmatprep.mubr.f32.mxu0 0.0
        %2739 = vmatmul.mubr.f32.gmra.mxu0 %v2287
        %v2740 = vpop.f32.mrf.mxu0
        %v2741 = vadd.f32 %v2657, %v2740
        %v2742 = vpop.f32.mrf.mxu0
        %2743 = vmatprep.mubr.f32.mxu0 0.0
        %2744 = vmatmul.mubr.f32.gmra.mxu0 %v2288
        %v2745 = vpop.f32.mrf.mxu0
        %v2746 = vadd.f32 %v2657, %v2745
        %v2747 = vpop.f32.mrf.mxu0
        %2748 = vmatprep.mubr.f32.mxu0 0.0
        %2749 = vmatmul.mubr.f32.gmra.mxu0 %v2289
        %v2750 = vpop.f32.mrf.mxu0
        %v2751 = vadd.f32 %v2657, %v2750
        %v2752 = vpop.f32.mrf.mxu0
        %2753 = vmatprep.mubr.f32.mxu0 0.0
        %2754 = vmatmul.mubr.f32.gmra.mxu0 %v2290
        %v2755 = vpop.f32.mrf.mxu0
        %v2756 = vadd.f32 %v2657, %v2755
        %v2757 = vpop.f32.mrf.mxu0
        %2758 = vmatprep.mubr.f32.mxu0 0.0
        %2759 = vmatmul.mubr.f32.gmra.mxu0 %v2291
        %v2760 = vpop.f32.mrf.mxu0
        %v2761 = vadd.f32 %v2657, %v2760
        %v2762 = vpop.f32.mrf.mxu0
        %2763 = vmatprep.mubr.f32.mxu0 0.0
        %2764 = vmatmul.mubr.f32.gmra.mxu0 %v2292
        %v2765 = vpop.f32.mrf.mxu0
        %v2766 = vadd.f32 %v2657, %v2765
        %v2767 = vpop.f32.mrf.mxu0
        %2768 = vmatprep.mubr.f32.mxu0 0.0
        %2769 = vmatmul.mubr.f32.gmra.mxu0 %v2293
        %v2770 = vpop.f32.mrf.mxu0
        %v2771 = vadd.f32 %v2657, %v2770
        %v2772 = vpop.f32.mrf.mxu0
        %2773 = vmatprep.mubr.f32.mxu0 0.0
        %2774 = vmatmul.mubr.f32.gmra.mxu0 %v2294
        %v2775 = vpop.f32.mrf.mxu0
        %v2776 = vadd.f32 %v2657, %v2775
        %v2777 = vpop.f32.mrf.mxu0
        %2778 = vmatprep.mubr.f32.mxu0 0.0
        %2779 = vmatmul.mubr.f32.gmra.mxu0 %v2295
        %v2780 = vpop.f32.mrf.mxu0
        %v2781 = vadd.f32 %v2657, %v2780
        %v2782 = vpop.f32.mrf.mxu0
        %2783 = vmatprep.mubr.f32.mxu0 0.0
        %2784 = vmatmul.mubr.f32.gmra.mxu0 %v2296
        %v2785 = vpop.f32.mrf.mxu0
        %v2786 = vadd.f32 %v2657, %v2785
        %v2787 = vpop.f32.mrf.mxu0
        %2788 = vmatprep.mubr.f32.mxu0 0.0
        %2789 = vmatmul.mubr.f32.gmra.mxu0 %v2297
        %v2790 = vpop.f32.mrf.mxu0
        %v2791 = vadd.f32 %v2657, %v2790
        %v2792 = vpop.f32.mrf.mxu0
        %2793 = vmatprep.mubr.f32.mxu0 0.0
        %2794 = vmatmul.mubr.f32.gmra.mxu0 %v2298
        %v2795 = vpop.f32.mrf.mxu0
        %v2796 = vadd.f32 %v2657, %v2795
        %v2797 = vpop.f32.mrf.mxu0
        %2798 = vmatprep.mubr.f32.mxu0 0.0
        %2799 = vmatmul.mubr.f32.gmra.mxu0 %v2299
        %v2800 = vpop.f32.mrf.mxu0
        %v2801 = vadd.f32 %v2657, %v2800
        %v2802 = vpop.f32.mrf.mxu0
        %2803 = vdwg.mxu0
        %v2804 = vmul.f32 %v798, %v943
        %v2805 = vmul.f32 %v803, %v948
        %v2806 = vmul.f32 %v808, %v953
        %v2807 = vmul.f32 %v813, %v958
        %v2808 = vmul.f32 %v818, %v963
        %v2809 = vmul.f32 %v823, %v968
        %v2810 = vmul.f32 %v828, %v973
        %v2811 = vmul.f32 %v833, %v978
        %v2812 = vmul.f32 %v838, %v983
        %v2813 = vmul.f32 %v843, %v988
        %v2814 = vmul.f32 %v848, %v993
        %v2815 = vmul.f32 %v853, %v998
        %v2816 = vmul.f32 %v858, %v1003
        %v2817 = vmul.f32 %v863, %v1008
        %v2818 = vmul.f32 %v868, %v1013
        %v2819 = vmul.f32 %v873, %v1018
        %v2820 = vmul.f32 %v1105, %v1250
        %v2821 = vmul.f32 %v1110, %v1255
        %v2822 = vmul.f32 %v1115, %v1260
        %v2823 = vmul.f32 %v1120, %v1265
        %v2824 = vmul.f32 %v1125, %v1270
        %v2825 = vmul.f32 %v1130, %v1275
        %v2826 = vmul.f32 %v1135, %v1280
        %v2827 = vmul.f32 %v1140, %v1285
        %v2828 = vmul.f32 %v1145, %v1290
        %v2829 = vmul.f32 %v1150, %v1295
        %v2830 = vmul.f32 %v1155, %v1300
        %v2831 = vmul.f32 %v1160, %v1305
        %v2832 = vmul.f32 %v1165, %v1310
        %v2833 = vmul.f32 %v1170, %v1315
        %v2834 = vmul.f32 %v1175, %v1320
        %v2835 = vmul.f32 %v1180, %v1325
        %v2836 = vadd.f32 %v2804, %v2820
        %v2837 = vadd.f32 %v2805, %v2821
        %v2838 = vadd.f32 %v2806, %v2822
        %v2839 = vadd.f32 %v2807, %v2823
        %v2840 = vadd.f32 %v2808, %v2824
        %v2841 = vadd.f32 %v2809, %v2825
        %v2842 = vadd.f32 %v2810, %v2826
        %v2843 = vadd.f32 %v2811, %v2827
        %v2844 = vadd.f32 %v2812, %v2828
        %v2845 = vadd.f32 %v2813, %v2829
        %v2846 = vadd.f32 %v2814, %v2830
        %v2847 = vadd.f32 %v2815, %v2831
        %v2848 = vadd.f32 %v2816, %v2832
        %v2849 = vadd.f32 %v2817, %v2833
        %v2850 = vadd.f32 %v2818, %v2834
        %v2851 = vadd.f32 %v2819, %v2835
        %v2852 = vmul.f32 %v1412, %v1557
        %v2853 = vmul.f32 %v1417, %v1562
        %v2854 = vmul.f32 %v1422, %v1567
        %v2855 = vmul.f32 %v1427, %v1572
        %v2856 = vmul.f32 %v1432, %v1577
        %v2857 = vmul.f32 %v1437, %v1582
        %v2858 = vmul.f32 %v1442, %v1587
        %v2859 = vmul.f32 %v1447, %v1592
        %v2860 = vmul.f32 %v1452, %v1597
        %v2861 = vmul.f32 %v1457, %v1602
        %v2862 = vmul.f32 %v1462, %v1607
        %v2863 = vmul.f32 %v1467, %v1612
        %v2864 = vmul.f32 %v1472, %v1617
        %v2865 = vmul.f32 %v1477, %v1622
        %v2866 = vmul.f32 %v1482, %v1627
        %v2867 = vmul.f32 %v1487, %v1632
        %v2868 = vadd.f32 %v2836, %v2852
        %v2869 = vadd.f32 %v2837, %v2853
        %v2870 = vadd.f32 %v2838, %v2854
        %v2871 = vadd.f32 %v2839, %v2855
        %v2872 = vadd.f32 %v2840, %v2856
        %v2873 = vadd.f32 %v2841, %v2857
        %v2874 = vadd.f32 %v2842, %v2858
        %v2875 = vadd.f32 %v2843, %v2859
        %v2876 = vadd.f32 %v2844, %v2860
        %v2877 = vadd.f32 %v2845, %v2861
        %v2878 = vadd.f32 %v2846, %v2862
        %v2879 = vadd.f32 %v2847, %v2863
        %v2880 = vadd.f32 %v2848, %v2864
        %v2881 = vadd.f32 %v2849, %v2865
        %v2882 = vadd.f32 %v2850, %v2866
        %v2883 = vadd.f32 %v2851, %v2867
        %v2884 = vadd.f32 %v667, %v2390
        %v2885 = vadd.f32 %v668, %v2395
        %v2886 = vadd.f32 %v669, %v2400
        %v2887 = vadd.f32 %v670, %v2405
        %v2888 = vadd.f32 %v671, %v2410
        %v2889 = vadd.f32 %v672, %v2415
        %v2890 = vadd.f32 %v673, %v2420
        %v2891 = vadd.f32 %v674, %v2425
        %v2892 = vadd.f32 %v675, %v2430
        %v2893 = vadd.f32 %v676, %v2435
        %v2894 = vadd.f32 %v677, %v2440
        %v2895 = vadd.f32 %v678, %v2445
        %v2896 = vadd.f32 %v679, %v2450
        %v2897 = vadd.f32 %v680, %v2455
        %v2898 = vadd.f32 %v681, %v2460
        %v2899 = vadd.f32 %v682, %v2465
        %v2900 = vmul.f32 %v2726, %v2868
        %v2901 = vmul.f32 %v2731, %v2869
        %v2902 = vmul.f32 %v2736, %v2870
        %v2903 = vmul.f32 %v2741, %v2871
        %v2904 = vmul.f32 %v2746, %v2872
        %v2905 = vmul.f32 %v2751, %v2873
        %v2906 = vmul.f32 %v2756, %v2874
        %v2907 = vmul.f32 %v2761, %v2875
        %v2908 = vmul.f32 %v2766, %v2876
        %v2909 = vmul.f32 %v2771, %v2877
        %v2910 = vmul.f32 %v2776, %v2878
        %v2911 = vmul.f32 %v2781, %v2879
        %v2912 = vmul.f32 %v2786, %v2880
        %v2913 = vmul.f32 %v2791, %v2881
        %v2914 = vmul.f32 %v2796, %v2882
        %v2915 = vmul.f32 %v2801, %v2883
        %v2916 = vadd.f32 %v2884, %v2900
        %v2917 = vadd.f32 %v2885, %v2901
        %v2918 = vadd.f32 %v2886, %v2902
        %v2919 = vadd.f32 %v2887, %v2903
        %v2920 = vadd.f32 %v2888, %v2904
        %v2921 = vadd.f32 %v2889, %v2905
        %v2922 = vadd.f32 %v2890, %v2906
        %v2923 = vadd.f32 %v2891, %v2907
        %v2924 = vadd.f32 %v2892, %v2908
        %v2925 = vadd.f32 %v2893, %v2909
        %v2926 = vadd.f32 %v2894, %v2910
        %v2927 = vadd.f32 %v2895, %v2911
        %v2928 = vadd.f32 %v2896, %v2912
        %v2929 = vadd.f32 %v2897, %v2913
        %v2930 = vadd.f32 %v2898, %v2914
        %v2931 = vadd.f32 %v2899, %v2915
        %2932 = vst [vmem:[%s655] sm:$0xff] %v2916
        %2933 = vst [vmem:[%s655 + $0x8] sm:$0xff] %v2917
        %2934 = vst [vmem:[%s655 + $0x10] sm:$0xff] %v2918
        %2935 = vst [vmem:[%s655 + $0x18] sm:$0xff] %v2919
        %2936 = vst [vmem:[%s655 + $0x20] sm:$0xff] %v2920
        %2937 = vst [vmem:[%s655 + $0x28] sm:$0xff] %v2921
        %2938 = vst [vmem:[%s655 + $0x30] sm:$0xff] %v2922
        %2939 = vst [vmem:[%s655 + $0x38] sm:$0xff] %v2923
        %2940 = vst [vmem:[%s655 + $0x40] sm:$0xff] %v2924
        %2941 = vst [vmem:[%s655 + $0x48] sm:$0xff] %v2925
        %2942 = vst [vmem:[%s655 + $0x50] sm:$0xff] %v2926
        %2943 = vst [vmem:[%s655 + $0x58] sm:$0xff] %v2927
        %2944 = vst [vmem:[%s655 + $0x60] sm:$0xff] %v2928
        %2945 = vst [vmem:[%s655 + $0x68] sm:$0xff] %v2929
        %2946 = vst [vmem:[%s655 + $0x70] sm:$0xff] %v2930
        %2947 = vst [vmem:[%s655 + $0x78] sm:$0xff] %v2931
        %v2948 = vld [vmem:[%s580] sm:$0xff]
        %v2949 = vld [vmem:[%s580 + $0x8] sm:$0xff]
        %v2950 = vld [vmem:[%s580 + $0x10] sm:$0xff]
        %v2951 = vld [vmem:[%s580 + $0x18] sm:$0xff]
        %v2952 = vld [vmem:[%s580 + $0x20] sm:$0xff]
        %v2953 = vld [vmem:[%s580 + $0x28] sm:$0xff]
        %v2954 = vld [vmem:[%s580 + $0x30] sm:$0xff]
        %v2955 = vld [vmem:[%s580 + $0x38] sm:$0xff]
        %v2956 = vld [vmem:[%s580 + $0x40] sm:$0xff]
        %v2957 = vld [vmem:[%s580 + $0x48] sm:$0xff]
        %v2958 = vld [vmem:[%s580 + $0x50] sm:$0xff]
        %v2959 = vld [vmem:[%s580 + $0x58] sm:$0xff]
        %v2960 = vld [vmem:[%s580 + $0x60] sm:$0xff]
        %v2961 = vld [vmem:[%s580 + $0x68] sm:$0xff]
        %v2962 = vld [vmem:[%s580 + $0x70] sm:$0xff]
        %v2963 = vld [vmem:[%s580 + $0x78] sm:$0xff]
        %v2964 = vmul.f32 %v2558, %v943
        %v2965 = vmul.f32 %v2563, %v948
        %v2966 = vmul.f32 %v2568, %v953
        %v2967 = vmul.f32 %v2573, %v958
        %v2968 = vmul.f32 %v2578, %v963
        %v2969 = vmul.f32 %v2583, %v968
        %v2970 = vmul.f32 %v2588, %v973
        %v2971 = vmul.f32 %v2593, %v978
        %v2972 = vmul.f32 %v2598, %v983
        %v2973 = vmul.f32 %v2603, %v988
        %v2974 = vmul.f32 %v2608, %v993
        %v2975 = vmul.f32 %v2613, %v998
        %v2976 = vmul.f32 %v2618, %v1003
        %v2977 = vmul.f32 %v2623, %v1008
        %v2978 = vmul.f32 %v2628, %v1013
        %v2979 = vmul.f32 %v2633, %v1018
        %v2980 = vadd.f32 %v2948, %v2964
        %v2981 = vadd.f32 %v2949, %v2965
        %v2982 = vadd.f32 %v2950, %v2966
        %v2983 = vadd.f32 %v2951, %v2967
        %v2984 = vadd.f32 %v2952, %v2968
        %v2985 = vadd.f32 %v2953, %v2969
        %v2986 = vadd.f32 %v2954, %v2970
        %v2987 = vadd.f32 %v2955, %v2971
        %v2988 = vadd.f32 %v2956, %v2972
        %v2989 = vadd.f32 %v2957, %v2973
        %v2990 = vadd.f32 %v2958, %v2974
        %v2991 = vadd.f32 %v2959, %v2975
        %v2992 = vadd.f32 %v2960, %v2976
        %v2993 = vadd.f32 %v2961, %v2977
        %v2994 = vadd.f32 %v2962, %v2978
        %v2995 = vadd.f32 %v2963, %v2979
        %2996 = vst [vmem:[%s662] sm:$0xff] %v2980
        %2997 = vst [vmem:[%s662 + $0x8] sm:$0xff] %v2981
        %2998 = vst [vmem:[%s662 + $0x10] sm:$0xff] %v2982
        %2999 = vst [vmem:[%s662 + $0x18] sm:$0xff] %v2983
        %3000 = vst [vmem:[%s662 + $0x20] sm:$0xff] %v2984
        %3001 = vst [vmem:[%s662 + $0x28] sm:$0xff] %v2985
        %3002 = vst [vmem:[%s662 + $0x30] sm:$0xff] %v2986
        %3003 = vst [vmem:[%s662 + $0x38] sm:$0xff] %v2987
        %3004 = vst [vmem:[%s662 + $0x40] sm:$0xff] %v2988
        %3005 = vst [vmem:[%s662 + $0x48] sm:$0xff] %v2989
        %3006 = vst [vmem:[%s662 + $0x50] sm:$0xff] %v2990
        %3007 = vst [vmem:[%s662 + $0x58] sm:$0xff] %v2991
        %3008 = vst [vmem:[%s662 + $0x60] sm:$0xff] %v2992
        %3009 = vst [vmem:[%s662 + $0x68] sm:$0xff] %v2993
        %3010 = vst [vmem:[%s662 + $0x70] sm:$0xff] %v2994
        %3011 = vst [vmem:[%s662 + $0x78] sm:$0xff] %v2995
        %v3012 = vld [vmem:[%s1021] sm:$0xff]
        %v3013 = vld [vmem:[%s1021 + $0x8] sm:$0xff]
        %v3014 = vld [vmem:[%s1021 + $0x10] sm:$0xff]
        %v3015 = vld [vmem:[%s1021 + $0x18] sm:$0xff]
        %v3016 = vld [vmem:[%s1021 + $0x20] sm:$0xff]
        %v3017 = vld [vmem:[%s1021 + $0x28] sm:$0xff]
        %v3018 = vld [vmem:[%s1021 + $0x30] sm:$0xff]
        %v3019 = vld [vmem:[%s1021 + $0x38] sm:$0xff]
        %v3020 = vld [vmem:[%s1021 + $0x40] sm:$0xff]
        %v3021 = vld [vmem:[%s1021 + $0x48] sm:$0xff]
        %v3022 = vld [vmem:[%s1021 + $0x50] sm:$0xff]
        %v3023 = vld [vmem:[%s1021 + $0x58] sm:$0xff]
        %v3024 = vld [vmem:[%s1021 + $0x60] sm:$0xff]
        %v3025 = vld [vmem:[%s1021 + $0x68] sm:$0xff]
        %v3026 = vld [vmem:[%s1021 + $0x70] sm:$0xff]
        %v3027 = vld [vmem:[%s1021 + $0x78] sm:$0xff]
        %v3028 = vmul.f32 %v2558, %v1250
        %v3029 = vmul.f32 %v2563, %v1255
        %v3030 = vmul.f32 %v2568, %v1260
        %v3031 = vmul.f32 %v2573, %v1265
        %v3032 = vmul.f32 %v2578, %v1270
        %v3033 = vmul.f32 %v2583, %v1275
        %v3034 = vmul.f32 %v2588, %v1280
        %v3035 = vmul.f32 %v2593, %v1285
        %v3036 = vmul.f32 %v2598, %v1290
        %v3037 = vmul.f32 %v2603, %v1295
        %v3038 = vmul.f32 %v2608, %v1300
        %v3039 = vmul.f32 %v2613, %v1305
        %v3040 = vmul.f32 %v2618, %v1310
        %v3041 = vmul.f32 %v2623, %v1315
        %v3042 = vmul.f32 %v2628, %v1320
        %v3043 = vmul.f32 %v2633, %v1325
        %v3044 = vadd.f32 %v3012, %v3028
        %v3045 = vadd.f32 %v3013, %v3029
        %v3046 = vadd.f32 %v3014, %v3030
        %v3047 = vadd.f32 %v3015, %v3031
        %v3048 = vadd.f32 %v3016, %v3032
        %v3049 = vadd.f32 %v3017, %v3033
        %v3050 = vadd.f32 %v3018, %v3034
        %v3051 = vadd.f32 %v3019, %v3035
        %v3052 = vadd.f32 %v3020, %v3036
        %v3053 = vadd.f32 %v3021, %v3037
        %v3054 = vadd.f32 %v3022, %v3038
        %v3055 = vadd.f32 %v3023, %v3039
        %v3056 = vadd.f32 %v3024, %v3040
        %v3057 = vadd.f32 %v3025, %v3041
        %v3058 = vadd.f32 %v3026, %v3042
        %v3059 = vadd.f32 %v3027, %v3043
        %s3060 = scalar_lea.vmem %s662, 128 [#allocation18]
        %3061 = vst [vmem:[%s3060] sm:$0xff] %v3044
        %3062 = vst [vmem:[%s3060 + $0x8] sm:$0xff] %v3045
        %3063 = vst [vmem:[%s3060 + $0x10] sm:$0xff] %v3046
        %3064 = vst [vmem:[%s3060 + $0x18] sm:$0xff] %v3047
        %3065 = vst [vmem:[%s3060 + $0x20] sm:$0xff] %v3048
        %3066 = vst [vmem:[%s3060 + $0x28] sm:$0xff] %v3049
        %3067 = vst [vmem:[%s3060 + $0x30] sm:$0xff] %v3050
        %3068 = vst [vmem:[%s3060 + $0x38] sm:$0xff] %v3051
        %3069 = vst [vmem:[%s3060 + $0x40] sm:$0xff] %v3052
        %3070 = vst [vmem:[%s3060 + $0x48] sm:$0xff] %v3053
        %3071 = vst [vmem:[%s3060 + $0x50] sm:$0xff] %v3054
        %3072 = vst [vmem:[%s3060 + $0x58] sm:$0xff] %v3055
        %3073 = vst [vmem:[%s3060 + $0x60] sm:$0xff] %v3056
        %3074 = vst [vmem:[%s3060 + $0x68] sm:$0xff] %v3057
        %3075 = vst [vmem:[%s3060 + $0x70] sm:$0xff] %v3058
        %3076 = vst [vmem:[%s3060 + $0x78] sm:$0xff] %v3059
        %v3077 = vld [vmem:[%s1328] sm:$0xff]
        %v3078 = vld [vmem:[%s1328 + $0x8] sm:$0xff]
        %v3079 = vld [vmem:[%s1328 + $0x10] sm:$0xff]
        %v3080 = vld [vmem:[%s1328 + $0x18] sm:$0xff]
        %v3081 = vld [vmem:[%s1328 + $0x20] sm:$0xff]
        %v3082 = vld [vmem:[%s1328 + $0x28] sm:$0xff]
        %v3083 = vld [vmem:[%s1328 + $0x30] sm:$0xff]
        %v3084 = vld [vmem:[%s1328 + $0x38] sm:$0xff]
        %v3085 = vld [vmem:[%s1328 + $0x40] sm:$0xff]
        %v3086 = vld [vmem:[%s1328 + $0x48] sm:$0xff]
        %v3087 = vld [vmem:[%s1328 + $0x50] sm:$0xff]
        %v3088 = vld [vmem:[%s1328 + $0x58] sm:$0xff]
        %v3089 = vld [vmem:[%s1328 + $0x60] sm:$0xff]
        %v3090 = vld [vmem:[%s1328 + $0x68] sm:$0xff]
        %v3091 = vld [vmem:[%s1328 + $0x70] sm:$0xff]
        %v3092 = vld [vmem:[%s1328 + $0x78] sm:$0xff]
        %v3093 = vmul.f32 %v2558, %v1557
        %v3094 = vmul.f32 %v2563, %v1562
        %v3095 = vmul.f32 %v2568, %v1567
        %v3096 = vmul.f32 %v2573, %v1572
        %v3097 = vmul.f32 %v2578, %v1577
        %v3098 = vmul.f32 %v2583, %v1582
        %v3099 = vmul.f32 %v2588, %v1587
        %v3100 = vmul.f32 %v2593, %v1592
        %v3101 = vmul.f32 %v2598, %v1597
        %v3102 = vmul.f32 %v2603, %v1602
        %v3103 = vmul.f32 %v2608, %v1607
        %v3104 = vmul.f32 %v2613, %v1612
        %v3105 = vmul.f32 %v2618, %v1617
        %v3106 = vmul.f32 %v2623, %v1622
        %v3107 = vmul.f32 %v2628, %v1627
        %v3108 = vmul.f32 %v2633, %v1632
        %v3109 = vadd.f32 %v3077, %v3093
        %v3110 = vadd.f32 %v3078, %v3094
        %v3111 = vadd.f32 %v3079, %v3095
        %v3112 = vadd.f32 %v3080, %v3096
        %v3113 = vadd.f32 %v3081, %v3097
        %v3114 = vadd.f32 %v3082, %v3098
        %v3115 = vadd.f32 %v3083, %v3099
        %v3116 = vadd.f32 %v3084, %v3100
        %v3117 = vadd.f32 %v3085, %v3101
        %v3118 = vadd.f32 %v3086, %v3102
        %v3119 = vadd.f32 %v3087, %v3103
        %v3120 = vadd.f32 %v3088, %v3104
        %v3121 = vadd.f32 %v3089, %v3105
        %v3122 = vadd.f32 %v3090, %v3106
        %v3123 = vadd.f32 %v3091, %v3107
        %v3124 = vadd.f32 %v3092, %v3108
        %s3125 = scalar_lea.vmem %s662, 256 [#allocation18]
        %3126 = vst [vmem:[%s3125] sm:$0xff] %v3109
        %3127 = vst [vmem:[%s3125 + $0x8] sm:$0xff] %v3110
        %3128 = vst [vmem:[%s3125 + $0x10] sm:$0xff] %v3111
        %3129 = vst [vmem:[%s3125 + $0x18] sm:$0xff] %v3112
        %3130 = vst [vmem:[%s3125 + $0x20] sm:$0xff] %v3113
        %3131 = vst [vmem:[%s3125 + $0x28] sm:$0xff] %v3114
        %3132 = vst [vmem:[%s3125 + $0x30] sm:$0xff] %v3115
        %3133 = vst [vmem:[%s3125 + $0x38] sm:$0xff] %v3116
        %3134 = vst [vmem:[%s3125 + $0x40] sm:$0xff] %v3117
        %3135 = vst [vmem:[%s3125 + $0x48] sm:$0xff] %v3118
        %3136 = vst [vmem:[%s3125 + $0x50] sm:$0xff] %v3119
        %3137 = vst [vmem:[%s3125 + $0x58] sm:$0xff] %v3120
        %3138 = vst [vmem:[%s3125 + $0x60] sm:$0xff] %v3121
        %3139 = vst [vmem:[%s3125 + $0x68] sm:$0xff] %v3122
        %3140 = vst [vmem:[%s3125 + $0x70] sm:$0xff] %v3123
        %3141 = vst [vmem:[%s3125 + $0x78] sm:$0xff] %v3124
        %s3142 = sand.u32 %s332, 1
        %s3143 = scalar_lea.sflag [#allocation4], %s3142
        %s3144 = sand.u32 %s332, 1
        %s3145 = smul.addr %s3144, 128
        %s3146 = scalar_lea.vmem [#allocation17], %s3145
        %s3147 = sand.u32 %s358, 1
        %s3148 = scalar_lea.sflag [#allocation19], %s3147
        %s3149 = sand.u32 %s358, 1
        %s3150 = smul.addr %s3149, 384
        %s3151 = scalar_lea.vmem [#allocation18], %s3150
        // Predicated region
        $region109: #{tpu_custom_call.1} parent=71 // pred_check
          %p3152 = pneg %p342
        $region110: #{tpu_custom_call.1} parent=71 // pred_check_branch
          %3154 = sbr.rel (%p3152) target = $region112
        $region111: #{tpu_custom_call.1} parent=71 // pred_region
          %s3155 = smul.u32 16, %s41
          %s3157 = ssub.s32 2048, 2048
          %3158 = vsyncadd %s3143, %s3157
          %s3159 = smul.addr %s3155, 128
          %s3160 = scalar_lea.hbm %s13, %s3159
          %s3161 = sshll.u32 %s3146, 4
          %s3162 = int_to_ptr.vmem [resolvable:$true] %s3161
          %3167 = dma.vmem_to_hbm [thread:$0]  %s3162, 2048, %s3160, %s3143, 128, 128, 8
        $region112: #{tpu_custom_call.1} parent=71 // pred_fallthru
          _
        // Predicated region
        $region113: #{tpu_custom_call.1} parent=71 // pred_check
          %p3168 = pneg %p368
        $region114: #{tpu_custom_call.1} parent=71 // pred_check_branch
          %3170 = sbr.rel (%p3168) target = $region116
        $region115: #{tpu_custom_call.1} parent=71 // pred_region
          #allocation23 [shape = 'u32[6]{0}', space=smem, size = 0x18, scoped, tag = 'DMA stride descriptor']
          %s3171 = smul.u32 16, %s41
          %s3173 = ssub.s32 6144, 6144
          %3174 = vsyncadd %s3148, %s3173
          %s3175 = smul.addr %s3171, 128
          %s3176 = scalar_lea.hbm %s14, %s3175
          %s3178 = sshll.u32 1, 14
          %s3179 = sxor.u32 4294967295, %s3178
          %s3182 = sshll.u32 7, 18
          %s3183 = sxor.u32 4294967295, %s3182
          %s3184 = sand.u32 0, %s3183
          %s3186 = sor.u32 %s3184, 0
          %s3187 = sshll.u32 %s3151, 4
          %s3188 = int_to_ptr.vmem [resolvable:$true] %s3187
          %3194 = sst [smem:[#allocation23]] 2048
          %s3195 = scalar_lea.smem [#allocation23], 1
          %3196 = sst [smem:[%s3195]] 4096
          %s3197 = scalar_lea.smem [#allocation23], 2
          %3198 = sst [smem:[%s3197]] 16
          %s3199 = scalar_lea.smem [#allocation23], 3
          %3200 = sst [smem:[%s3199]] 128
          %s3201 = scalar_lea.smem [#allocation23], 4
          %3202 = sst [smem:[%s3201]] 128
          %s3203 = scalar_lea.smem [#allocation23], 5
          %3204 = sst [smem:[%s3203]] 8
          %3206 = dma.general %s3188, 6144, %s3176, %s3148, 131072, [#allocation23], %s3186, 0
        $region116: #{tpu_custom_call.1} parent=71 // pred_fallthru
          _
      $region72: #{tpu_custom_call.1} parent=5 // pred_fallthru
        _
      %p3207 = scmp.le.s32.totalorder 2, %s36
      // Predicated region
      $region117: #{tpu_custom_call.1} parent=5 // pred_check
        %p3208 = pneg %p3207
      $region118: #{tpu_custom_call.1} parent=5 // pred_check_branch
        %3210 = sbr.rel (%p3208) target = $region120
      $region119: #{tpu_custom_call.1} parent=5 // pred_region
        %s3211 = ssub.s32 %s36, 2
        // Predicated region
        $region121: #{tpu_custom_call.1} parent=119 // pred_check
          %p3212 = pneg %p348
        $region122: #{tpu_custom_call.1} parent=119 // pred_check_branch
          %3214 = sbr.rel (%p3212) target = $region124
        $region123: #{tpu_custom_call.1} parent=119 // pred_region
          %s3215 = sand.u32 %s333, 1
          %s3216 = scalar_lea.sflag [#allocation4], %s3215
          %s3217 = sand.u32 %s333, 1
          %s3218 = smul.addr %s3217, 128
          %s3219 = scalar_lea.vmem [#allocation17], %s3218
          %3220 = dma.done %s3216, 2048
        $region124: #{tpu_custom_call.1} parent=119 // pred_fallthru
          _
        // Predicated region
        $region125: #{tpu_custom_call.1} parent=119 // pred_check
          %p3221 = pneg %p374
        $region126: #{tpu_custom_call.1} parent=119 // pred_check_branch
          %3223 = sbr.rel (%p3221) target = $region128
        $region127: #{tpu_custom_call.1} parent=119 // pred_region
          %s3224 = sand.u32 %s359, 1
          %s3225 = scalar_lea.sflag [#allocation19], %s3224
          %s3226 = sand.u32 %s359, 1
          %s3227 = smul.addr %s3226, 384
          %s3228 = scalar_lea.vmem [#allocation18], %s3227
          %3229 = dma.done %s3225, 6144
        $region128: #{tpu_custom_call.1} parent=119 // pred_fallthru
          _
      $region120: #{tpu_custom_call.1} parent=5 // pred_fallthru
        _
    $region6: #{tpu_custom_call.1} parent=1 // loop_footer
      %s40 = sadd.s32 1, %s36
    $region7: #{tpu_custom_call.1} parent=1 // loop_footer_branch
      %35 = sbr.rel target = $region3
    $region8: #{tpu_custom_call.1} parent=1 // loop_exit
      _
    %3230 = vsyncpa [#allocation3], 1
    %s3231 = scalar_lea.sflag [#allocation3], 1
    %3232 = vsyncpa %s3231, 1
    %3233 = vsyncpa [#allocation6], 1
    %s3234 = scalar_lea.sflag [#allocation6], 1
    %3235 = vsyncpa %s3234, 1
    %3236 = vsyncpa [#allocation9], 1
    %3237 = vsyncpa [#allocation12], 1
    %3238 = vsyncpa [#allocation15], 1
    %3239 = vsyncpa [#allocation4], 1
    %s3240 = scalar_lea.sflag [#allocation4], 1
    %3241 = vsyncpa %s3240, 1
    %3242 = vsyncpa [#allocation19], 1
    %s3243 = scalar_lea.sflag [#allocation19], 1
    %3244 = vsyncpa %s3243, 1

</llo_original>
